<compile_context>
chip_gen: v7x
topology: tpu7x:2x2x1
jax: 0.10.0
libtpu: 0.0.40
codegen_flags: <defaults>
</compile_context>

<pallas_src>
import jax
import jax.numpy as jnp
import numpy as np
from jax import lax
from jax.experimental import pallas as pl
from jax.experimental.pallas import tpu as pltpu

C1 = 0.01 ** 2
C2 = 0.03 ** 2


def _make_kernel(C, H, W):
    def kernel(target_ref, pred_ref, ident_ref, hints_ref,
               hints_depth_ref, pred_depth_ref, noise_ref, out_ref,
               two_mu_y_s, muy2_c1_s, sigy_c2_s, pred_min_s, ident_min_s):
        p = pl.program_id(1)
        last_p = pl.num_programs(1) - 1

        # Boundary masks for the reflect fixup (hoisted; reused by every pool).
        col = lax.broadcasted_iota(jnp.int32, (1, W), 1)        # [1, W]
        row = lax.broadcasted_iota(jnp.int32, (H, 1), 0)        # [H, 1]
        col_first, col_last = col == 0, col == W - 1
        row_first, row_last = row == 0, row == H - 1

        def pool3(x):
            # Separable 3x3 average pool with ReflectionPad2d(1) semantics on
            # lane-dense [C, H, W] slabs.  Both +-1 neighbours come from XLU
            # rolls; the two wrapped boundary columns/rows are fixed up with
            # VPU selects on the rolled operands themselves: at col 0 the
            # wrapped value sits in `l` and the reflected value x[..., 1] is
            # already in `r` (and symmetrically at col W-1), so no slice /
            # cross-lane broadcast temporaries are needed.  Requires H,W >= 3.
            l = pltpu.roll(x, 1, axis=2)            # l[..., j] = x[..., j-1]
            r = pltpu.roll(x, W - 1, axis=2)        # r[..., j] = x[..., j+1]
            h = x + l + r + jnp.where(col_first, r - l,
                                      jnp.where(col_last, l - r, 0.0))

            u = pltpu.roll(h, 1, axis=1)            # u[:, i] = h[:, i-1]
            d = pltpu.roll(h, H - 1, axis=1)        # d[:, i] = h[:, i+1]
            v = h + u + d + jnp.where(row_first, d - u,
                                      jnp.where(row_last, u - d, 0.0))
            return v * (1.0 / 9.0)

        target = target_ref[0]                                  # [C, H, W]

        # Target-side SSIM terms are shared by every photometric call: compute
        # them once per batch element (p == 0), pre-folded so per-candidate
        # VALU work is minimal, and keep them resident in VMEM scratch:
        #   two_mu_y = 2*mu_y, muy2_c1 = mu_y^2 + C1, sigy_c2 = sigma_y + C2
        @pl.when(p == 0)
        def _init_target_moments():
            mu_y = pool3(target)
            my2 = mu_y * mu_y
            two_mu_y_s[...] = mu_y + mu_y
            muy2_c1_s[...] = my2 + C1
            sigy_c2_s[...] = (pool3(target * target) - my2) + C2

        two_mu_y = two_mu_y_s[...]
        muy2_c1 = muy2_c1_s[...]
        sigy_c2 = sigy_c2_s[...]

        def photometric(x):
            mu_x = pool3(x)
            pool_xx = pool3(x * x)
            pool_xt = pool3(x * target)
            mx2 = mu_x * mu_x
            sig_x = pool_xx - mx2
            t = mu_x * two_mu_y                       # 2*mu_x*mu_y
            # 2*sigma_xy + C2 == 2*pool(x*y) - 2*mu_x*mu_y + C2
            ssim_n = (t + C1) * (2.0 * pool_xt - t + C2)
            ssim_d = (mx2 + muy2_c1) * (sig_x + sigy_c2)
            # EUP reciprocal estimate + 2 Newton steps instead of a full f32
            # divide on the (binding) VALU slot.  Two NR steps bring the
            # result to f32 round-off, keeping the argmin selection below
            # stable versus the exact-divide reference.
            inv_d = pl.reciprocal(ssim_d, approx=True)
            inv_d = inv_d * (2.0 - ssim_d * inv_d)
            inv_d = inv_d * (2.0 - ssim_d * inv_d)
            ssim = jnp.clip((1.0 - ssim_n * inv_d) * 0.5, 0.0, 1.0)
            # fused per-channel loss + single channel reduction
            per_c = 0.85 * ssim + 0.15 * jnp.abs(x - target)
            return jnp.mean(per_c, axis=0)            # [H, W]

        lm_pred = photometric(pred_ref[0, 0])                   # [H, W]
        lm_ident = photometric(ident_ref[0, 0])                 # [H, W]

        @pl.when(p == 0)
        def _init_mins():
            pred_min_s[...] = lm_pred
            ident_min_s[...] = lm_ident

        @pl.when(p != 0)
        def _update_mins():
            pred_min_s[...] = jnp.minimum(pred_min_s[...], lm_pred)
            ident_min_s[...] = jnp.minimum(ident_min_s[...], lm_ident)

        # NOTE: the output block index is constant over p, so this deferred
        # writeback at p == last_p relies on the P axis being a sequential
        # ("arbitrary") reduction axis visited in order.  Do not reorder the
        # grid or mark the P axis "parallel".
        @pl.when(p == last_p)
        def _finalize():
            hd = hints_depth_ref[0, 0]                          # [H, W]
            pd = pred_depth_ref[0, 0]
            nz = noise_ref[0, 0]

            # depth-hints photometric term, invalid hints -> 1000
            hints_lm = photometric(hints_ref[0])
            hints_lm = jnp.where(hd > 0.0, hints_lm, 1000.0)

            pred_lm = pred_min_s[...]
            ident_lm = ident_min_s[...] + nz * 1e-5             # automask jitter

            # argmin over the stack [ident, pred, hints] (first-occurrence ties)
            sel0 = (ident_lm <= pred_lm) & (ident_lm <= hints_lm)
            sel2 = jnp.logical_not(sel0) & (hints_lm < pred_lm)
            auto_mask = jnp.logical_not(sel0).astype(jnp.float32)   # idx != 0
            hints_sel = sel2.astype(jnp.float32)                    # idx == 2

            proxy = jnp.log(jnp.abs(hd - pd) + 1.0) * hints_sel
            out_ref[0, 0] = pred_lm * auto_mask + proxy

    return kernel


def depthhints_photo_loss(target, preds, idents, hints, hints_depth,
                          pred_depth, noise):
    """target/hints: [N,C,H,W]; preds/idents: [N,P,C,H,W] (or list of P
    [N,C,H,W] arrays); hints_depth/pred_depth/noise: [N,1,H,W].
    Returns the final loss map [N,1,H,W]."""
    if isinstance(preds, (list, tuple)):
        preds = jnp.stack(preds, axis=1)       # callers may pre-stack to avoid this
    if isinstance(idents, (list, tuple)):
        idents = jnp.stack(idents, axis=1)

    N, C, H, W = target.shape
    P = preds.shape[1]
    # roll-based reflect pad assumes at least a 3x3 spatial extent
    assert H >= 3 and W >= 3, "DepthHints photo loss kernel requires H, W >= 3"

    return pl.pallas_call(
        _make_kernel(C, H, W),
        out_shape=jax.ShapeDtypeStruct((N, 1, H, W), jnp.float32),
        grid=(N, P),
        in_specs=[
            pl.BlockSpec((1, C, H, W), lambda b, p: (b, 0, 0, 0)),        # target
            pl.BlockSpec((1, 1, C, H, W), lambda b, p: (b, p, 0, 0, 0)),  # preds
            pl.BlockSpec((1, 1, C, H, W), lambda b, p: (b, p, 0, 0, 0)),  # idents
            pl.BlockSpec((1, C, H, W), lambda b, p: (b, 0, 0, 0)),        # hints
            pl.BlockSpec((1, 1, H, W), lambda b, p: (b, 0, 0, 0)),        # hints_depth
            pl.BlockSpec((1, 1, H, W), lambda b, p: (b, 0, 0, 0)),        # pred_depth
            pl.BlockSpec((1, 1, H, W), lambda b, p: (b, 0, 0, 0)),        # noise
        ],
        out_specs=pl.BlockSpec((1, 1, H, W), lambda b, p: (b, 0, 0, 0)),
        scratch_shapes=[
            pltpu.VMEM((C, H, W), jnp.float32),   # 2*mu_y
            pltpu.VMEM((C, H, W), jnp.float32),   # mu_y^2 + C1
            pltpu.VMEM((C, H, W), jnp.float32),   # sigma_y + C2
            pltpu.VMEM((H, W), jnp.float32),      # running min over pred candidates
            pltpu.VMEM((H, W), jnp.float32),      # running min over ident candidates
        ],
        compiler_params=pltpu.CompilerParams(
            dimension_semantics=("parallel", "arbitrary"),
            vmem_limit_bytes=32 * 1024 * 1024,
        ),
    )(target, preds, idents, hints, hints_depth, pred_depth, noise)


# ----------------------------- pure-JAX reference -----------------------------
def _ref_forward(target, preds, idents, hints, hints_depth, pred_depth, noise):
    pad = lambda a: jnp.pad(a, ((0, 0), (0, 0), (1, 1), (1, 1)), mode='reflect')
    pool = lambda a: jax.lax.reduce_window(a, 0.0, jax.lax.add,
                                           (1, 1, 3, 3), (1, 1, 1, 1), 'VALID') / 9.0

    def ssim(x, y):
        xp, yp = pad(x), pad(y)
        mu_x, mu_y = pool(xp), pool(yp)
        sx = pool(xp * xp) - mu_x ** 2
        sy = pool(yp * yp) - mu_y ** 2
        sxy = pool(xp * yp) - mu_x * mu_y
        n = (2 * mu_x * mu_y + C1) * (2 * sxy + C2)
        d = (mu_x ** 2 + mu_y ** 2 + C1) * (sx + sy + C2)
        return jnp.clip((1 - n / d) / 2, 0, 1)

    def photo(pred):
        l1 = jnp.mean(jnp.abs(pred - target), axis=1, keepdims=True)
        s = jnp.mean(ssim(pred, target), axis=1, keepdims=True)
        return 0.85 * s + 0.15 * l1

    hints_lm = jnp.where(hints_depth > 0, photo(hints), 1000.0)
    pred_lm = jnp.min(jnp.concatenate([photo(p) for p in preds], axis=1),
                      axis=1, keepdims=True)
    ident_lm = jnp.min(jnp.concatenate([photo(i) for i in idents], axis=1),
                       axis=1, keepdims=True) + noise * 1e-5
    stack = jnp.concatenate([ident_lm, pred_lm, hints_lm], axis=1)
    idx = jnp.argmin(stack, axis=1, keepdims=True)
    auto = (idx != 0).astype(jnp.float32)
    hmask = (idx == 2).astype(jnp.float32)
    return pred_lm * auto + jnp.log(jnp.abs(hints_depth - pred_depth) + 1) * hmask


if __name__ == "__main__":
    key = jax.random.PRNGKey(0)
    # lane-dense W (multiple of 128) as in production resolutions
    N, C, H, W, P = 2, 3, 16, 128, 2

    ks = jax.random.split(key, 10)
    target = jax.random.uniform(ks[0], (N, C, H, W), jnp.float32)
    preds = [jax.random.uniform(ks[1 + i], (N, C, H, W), jnp.float32) for i in range(P)]
    idents = [jax.random.uniform(ks[3 + i], (N, C, H, W), jnp.float32) for i in range(P)]
    hints = jax.random.uniform(ks[5], (N, C, H, W), jnp.float32)
    hints_depth_raw = jax.random.uniform(ks[6], (N, 1, H, W), jnp.float32) * 10.0
    valid = jax.random.uniform(ks[7], (N, 1, H, W), jnp.float32) > 0.3
    hints_depth = jnp.where(valid, hints_depth_raw, 0.0)
    pred_depth = jax.random.uniform(ks[8], (N, 1, H, W), jnp.float32) * 10.0
    # corresponds to the `torch.randn(...) * 1e-5` automask jitter in the module
    noise = jax.random.normal(ks[9], (N, 1, H, W), jnp.float32)

    out = depthhints_photo_loss(target, preds, idents, hints,
                                hints_depth, pred_depth, noise)
    out = jax.block_until_ready(out)

    ref = jax.block_until_ready(
        _ref_forward(target, preds, idents, hints, hints_depth, pred_depth, noise))
    np.testing.assert_allclose(np.asarray(out), np.asarray(ref), rtol=1e-4, atol=1e-5)

    print("KERNEL_OK")
</pallas_src>

<mosaic_0001>
module attributes {stable_mosaic.version = 11 : i64} {
  func.func @kernel(%arg0: i32, %arg1: i32, %arg2: memref<1x3x16x128xf32, #tpu.memory_space<vmem>>, %arg3: memref<1x1x3x16x128xf32, #tpu.memory_space<vmem>>, %arg4: memref<1x1x3x16x128xf32, #tpu.memory_space<vmem>>, %arg5: memref<1x3x16x128xf32, #tpu.memory_space<vmem>>, %arg6: memref<1x1x16x128xf32, #tpu.memory_space<vmem>>, %arg7: memref<1x1x16x128xf32, #tpu.memory_space<vmem>>, %arg8: memref<1x1x16x128xf32, #tpu.memory_space<vmem>>, %arg9: memref<1x1x16x128xf32, #tpu.memory_space<vmem>>, %arg10: memref<3x16x128xf32, #tpu.memory_space<vmem>>, %arg11: memref<3x16x128xf32, #tpu.memory_space<vmem>>, %arg12: memref<3x16x128xf32, #tpu.memory_space<vmem>>, %arg13: memref<16x128xf32, #tpu.memory_space<vmem>>, %arg14: memref<16x128xf32, #tpu.memory_space<vmem>>) attributes {dimension_semantics = [#tpu.dimension_semantics<parallel>, #tpu.dimension_semantics<arbitrary>], iteration_bounds = array<i64: 2, 2>, scalar_prefetch = 0 : i64, scratch_operands = 5 : i64, tpu.core_type = #tpu.core_type<tc>, window_params = [{transform_indices = @transform_0, window_bounds = array<i64: 1, 3, 16, 128>}, {transform_indices = @transform_1, window_bounds = array<i64: 1, 1, 3, 16, 128>}, {transform_indices = @transform_2, window_bounds = array<i64: 1, 1, 3, 16, 128>}, {transform_indices = @transform_3, window_bounds = array<i64: 1, 3, 16, 128>}, {transform_indices = @transform_4, window_bounds = array<i64: 1, 1, 16, 128>}, {transform_indices = @transform_5, window_bounds = array<i64: 1, 1, 16, 128>}, {transform_indices = @transform_6, window_bounds = array<i64: 1, 1, 16, 128>}, {transform_indices = @transform_7, window_bounds = array<i64: 1, 1, 16, 128>}]} {
    %0 = tpu.iota {dimensions = array<i32: 1>} : vector<1x128xi32>
    %1 = tpu.iota {dimensions = array<i32: 0>} : vector<16x1xi32>
    %c0_i32 = arith.constant 0 : i32
    %2 = vector.broadcast %c0_i32 : i32 to vector<1x128xi32>
    %3 = arith.cmpi eq, %0, %2 : vector<1x128xi32>
    %c127_i32 = arith.constant 127 : i32
    %4 = vector.broadcast %c127_i32 : i32 to vector<1x128xi32>
    %5 = arith.cmpi eq, %0, %4 : vector<1x128xi32>
    %c0_i32_0 = arith.constant 0 : i32
    %6 = vector.broadcast %c0_i32_0 : i32 to vector<16x1xi32>
    %7 = arith.cmpi eq, %1, %6 : vector<16x1xi32>
    %c15_i32 = arith.constant 15 : i32
    %8 = vector.broadcast %c15_i32 : i32 to vector<16x1xi32>
    %9 = arith.cmpi eq, %1, %8 : vector<16x1xi32>
    %c0 = arith.constant 0 : index
    %c0_1 = arith.constant 0 : index
    %c0_2 = arith.constant 0 : index
    %c0_3 = arith.constant 0 : index
    %10 = vector.load %arg2[%c0, %c0_1, %c0_2, %c0_3] : memref<1x3x16x128xf32, #tpu.memory_space<vmem>>, vector<1x3x16x128xf32>
    %11 = vector.shape_cast %10 : vector<1x3x16x128xf32> to vector<3x16x128xf32>
    %c0_i32_4 = arith.constant 0 : i32
    %12 = arith.cmpi eq, %arg1, %c0_i32_4 : i32
    %13 = arith.extui %12 : i1 to i32
    %c0_i32_5 = arith.constant 0 : i32
    %14 = arith.cmpi ne, %13, %c0_i32_5 : i32
    scf.if %14 {
      %c1_i32_97 = arith.constant 1 : i32
      %299 = tpu.dynamic_rotate %11 by %c1_i32_97 dim 2 : vector<3x16x128xf32>, i32 -> vector<3x16x128xf32>
      %c127_i32_98 = arith.constant 127 : i32
      %300 = tpu.dynamic_rotate %11 by %c127_i32_98 dim 2 : vector<3x16x128xf32>, i32 -> vector<3x16x128xf32>
      %301 = arith.addf %11, %299 : vector<3x16x128xf32>
      %302 = arith.addf %301, %300 : vector<3x16x128xf32>
      %303 = arith.subf %300, %299 : vector<3x16x128xf32>
      %304 = arith.subf %299, %300 : vector<3x16x128xf32>
      %cst_99 = arith.constant 0.000000e+00 : f32
      %305 = vector.shape_cast %5 : vector<1x128xi1> to vector<1x1x128xi1>
      %306 = vector.broadcast %305 : vector<1x1x128xi1> to vector<3x16x128xi1>
      %307 = vector.broadcast %cst_99 : f32 to vector<3x16x128xf32>
      %308 = arith.select %306, %304, %307 : vector<3x16x128xi1>, vector<3x16x128xf32>
      %309 = vector.shape_cast %3 : vector<1x128xi1> to vector<1x1x128xi1>
      %310 = vector.broadcast %309 : vector<1x1x128xi1> to vector<3x16x128xi1>
      %311 = arith.select %310, %303, %308 : vector<3x16x128xi1>, vector<3x16x128xf32>
      %312 = arith.addf %302, %311 : vector<3x16x128xf32>
      %c1_i32_100 = arith.constant 1 : i32
      %313 = tpu.dynamic_rotate %312 by %c1_i32_100 dim 1 : vector<3x16x128xf32>, i32 -> vector<3x16x128xf32>
      %c15_i32_101 = arith.constant 15 : i32
      %314 = tpu.dynamic_rotate %312 by %c15_i32_101 dim 1 : vector<3x16x128xf32>, i32 -> vector<3x16x128xf32>
      %315 = arith.addf %312, %313 : vector<3x16x128xf32>
      %316 = arith.addf %315, %314 : vector<3x16x128xf32>
      %317 = arith.subf %314, %313 : vector<3x16x128xf32>
      %318 = arith.subf %313, %314 : vector<3x16x128xf32>
      %cst_102 = arith.constant 0.000000e+00 : f32
      %319 = vector.shape_cast %9 : vector<16x1xi1> to vector<1x16x1xi1>
      %320 = vector.broadcast %319 : vector<1x16x1xi1> to vector<3x16x128xi1>
      %321 = vector.broadcast %cst_102 : f32 to vector<3x16x128xf32>
      %322 = arith.select %320, %318, %321 : vector<3x16x128xi1>, vector<3x16x128xf32>
      %323 = vector.shape_cast %7 : vector<16x1xi1> to vector<1x16x1xi1>
      %324 = vector.broadcast %323 : vector<1x16x1xi1> to vector<3x16x128xi1>
      %325 = arith.select %324, %317, %322 : vector<3x16x128xi1>, vector<3x16x128xf32>
      %326 = arith.addf %316, %325 : vector<3x16x128xf32>
      %cst_103 = arith.constant 0.111111112 : f32
      %327 = vector.broadcast %cst_103 : f32 to vector<3x16x128xf32>
      %328 = arith.mulf %326, %327 : vector<3x16x128xf32>
      %329 = arith.mulf %328, %328 : vector<3x16x128xf32>
      %330 = arith.addf %328, %328 : vector<3x16x128xf32>
      %c0_104 = arith.constant 0 : index
      %c0_105 = arith.constant 0 : index
      %c0_106 = arith.constant 0 : index
      %331 = vector.load %arg10[%c0_104, %c0_105, %c0_106] : memref<3x16x128xf32, #tpu.memory_space<vmem>>, vector<3x16x128xf32>
      tpu.vector_store %arg10[%c0_104, %c0_105, %c0_106], %330 {strides = array<i32>} : memref<3x16x128xf32, #tpu.memory_space<vmem>>, vector<3x16x128xf32>,
      %cst_107 = arith.constant 9.99999974E-5 : f32
      %332 = vector.broadcast %cst_107 : f32 to vector<3x16x128xf32>
      %333 = arith.addf %329, %332 : vector<3x16x128xf32>
      %c0_108 = arith.constant 0 : index
      %c0_109 = arith.constant 0 : index
      %c0_110 = arith.constant 0 : index
      %334 = vector.load %arg11[%c0_108, %c0_109, %c0_110] : memref<3x16x128xf32, #tpu.memory_space<vmem>>, vector<3x16x128xf32>
      tpu.vector_store %arg11[%c0_108, %c0_109, %c0_110], %333 {strides = array<i32>} : memref<3x16x128xf32, #tpu.memory_space<vmem>>, vector<3x16x128xf32>,
      %335 = arith.mulf %11, %11 : vector<3x16x128xf32>
      %c1_i32_111 = arith.constant 1 : i32
      %336 = tpu.dynamic_rotate %335 by %c1_i32_111 dim 2 : vector<3x16x128xf32>, i32 -> vector<3x16x128xf32>
      %c127_i32_112 = arith.constant 127 : i32
      %337 = tpu.dynamic_rotate %335 by %c127_i32_112 dim 2 : vector<3x16x128xf32>, i32 -> vector<3x16x128xf32>
      %338 = arith.addf %335, %336 : vector<3x16x128xf32>
      %339 = arith.addf %338, %337 : vector<3x16x128xf32>
      %340 = arith.subf %337, %336 : vector<3x16x128xf32>
      %341 = arith.subf %336, %337 : vector<3x16x128xf32>
      %cst_113 = arith.constant 0.000000e+00 : f32
      %342 = vector.shape_cast %5 : vector<1x128xi1> to vector<1x1x128xi1>
      %343 = vector.broadcast %342 : vector<1x1x128xi1> to vector<3x16x128xi1>
      %344 = vector.broadcast %cst_113 : f32 to vector<3x16x128xf32>
      %345 = arith.select %343, %341, %344 : vector<3x16x128xi1>, vector<3x16x128xf32>
      %346 = vector.shape_cast %3 : vector<1x128xi1> to vector<1x1x128xi1>
      %347 = vector.broadcast %346 : vector<1x1x128xi1> to vector<3x16x128xi1>
      %348 = arith.select %347, %340, %345 : vector<3x16x128xi1>, vector<3x16x128xf32>
      %349 = arith.addf %339, %348 : vector<3x16x128xf32>
      %c1_i32_114 = arith.constant 1 : i32
      %350 = tpu.dynamic_rotate %349 by %c1_i32_114 dim 1 : vector<3x16x128xf32>, i32 -> vector<3x16x128xf32>
      %c15_i32_115 = arith.constant 15 : i32
      %351 = tpu.dynamic_rotate %349 by %c15_i32_115 dim 1 : vector<3x16x128xf32>, i32 -> vector<3x16x128xf32>
      %352 = arith.addf %349, %350 : vector<3x16x128xf32>
      %353 = arith.addf %352, %351 : vector<3x16x128xf32>
      %354 = arith.subf %351, %350 : vector<3x16x128xf32>
      %355 = arith.subf %350, %351 : vector<3x16x128xf32>
      %cst_116 = arith.constant 0.000000e+00 : f32
      %356 = vector.shape_cast %9 : vector<16x1xi1> to vector<1x16x1xi1>
      %357 = vector.broadcast %356 : vector<1x16x1xi1> to vector<3x16x128xi1>
      %358 = vector.broadcast %cst_116 : f32 to vector<3x16x128xf32>
      %359 = arith.select %357, %355, %358 : vector<3x16x128xi1>, vector<3x16x128xf32>
      %360 = vector.shape_cast %7 : vector<16x1xi1> to vector<1x16x1xi1>
      %361 = vector.broadcast %360 : vector<1x16x1xi1> to vector<3x16x128xi1>
      %362 = arith.select %361, %354, %359 : vector<3x16x128xi1>, vector<3x16x128xf32>
      %363 = arith.addf %353, %362 : vector<3x16x128xf32>
      %cst_117 = arith.constant 0.111111112 : f32
      %364 = vector.broadcast %cst_117 : f32 to vector<3x16x128xf32>
      %365 = arith.mulf %363, %364 : vector<3x16x128xf32>
      %366 = arith.subf %365, %329 : vector<3x16x128xf32>
      %cst_118 = arith.constant 8.99999984E-4 : f32
      %367 = vector.broadcast %cst_118 : f32 to vector<3x16x128xf32>
      %368 = arith.addf %366, %367 : vector<3x16x128xf32>
      %c0_119 = arith.constant 0 : index
      %c0_120 = arith.constant 0 : index
      %c0_121 = arith.constant 0 : index
      %369 = vector.load %arg12[%c0_119, %c0_120, %c0_121] : memref<3x16x128xf32, #tpu.memory_space<vmem>>, vector<3x16x128xf32>
      tpu.vector_store %arg12[%c0_119, %c0_120, %c0_121], %368 {strides = array<i32>} : memref<3x16x128xf32, #tpu.memory_space<vmem>>, vector<3x16x128xf32>,
    } else {
    }
    %c0_6 = arith.constant 0 : index
    %c0_7 = arith.constant 0 : index
    %c0_8 = arith.constant 0 : index
    %15 = vector.load %arg10[%c0_6, %c0_7, %c0_8] : memref<3x16x128xf32, #tpu.memory_space<vmem>>, vector<3x16x128xf32>
    %c0_9 = arith.constant 0 : index
    %c0_10 = arith.constant 0 : index
    %c0_11 = arith.constant 0 : index
    %16 = vector.load %arg11[%c0_9, %c0_10, %c0_11] : memref<3x16x128xf32, #tpu.memory_space<vmem>>, vector<3x16x128xf32>
    %c0_12 = arith.constant 0 : index
    %c0_13 = arith.constant 0 : index
    %c0_14 = arith.constant 0 : index
    %17 = vector.load %arg12[%c0_12, %c0_13, %c0_14] : memref<3x16x128xf32, #tpu.memory_space<vmem>>, vector<3x16x128xf32>
    %c0_15 = arith.constant 0 : index
    %c0_16 = arith.constant 0 : index
    %c0_17 = arith.constant 0 : index
    %c0_18 = arith.constant 0 : index
    %c0_19 = arith.constant 0 : index
    %18 = vector.load %arg3[%c0_15, %c0_16, %c0_17, %c0_18, %c0_19] : memref<1x1x3x16x128xf32, #tpu.memory_space<vmem>>, vector<1x1x3x16x128xf32>
    %19 = vector.shape_cast %18 : vector<1x1x3x16x128xf32> to vector<3x16x128xf32>
    %c1_i32 = arith.constant 1 : i32
    %20 = tpu.dynamic_rotate %19 by %c1_i32 dim 2 : vector<3x16x128xf32>, i32 -> vector<3x16x128xf32>
    %c127_i32_20 = arith.constant 127 : i32
    %21 = tpu.dynamic_rotate %19 by %c127_i32_20 dim 2 : vector<3x16x128xf32>, i32 -> vector<3x16x128xf32>
    %22 = arith.addf %19, %20 : vector<3x16x128xf32>
    %23 = arith.addf %22, %21 : vector<3x16x128xf32>
    %24 = arith.subf %21, %20 : vector<3x16x128xf32>
    %25 = arith.subf %20, %21 : vector<3x16x128xf32>
    %cst = arith.constant 0.000000e+00 : f32
    %26 = vector.shape_cast %5 : vector<1x128xi1> to vector<1x1x128xi1>
    %27 = vector.broadcast %26 : vector<1x1x128xi1> to vector<3x16x128xi1>
    %28 = vector.broadcast %cst : f32 to vector<3x16x128xf32>
    %29 = arith.select %27, %25, %28 : vector<3x16x128xi1>, vector<3x16x128xf32>
    %30 = vector.shape_cast %3 : vector<1x128xi1> to vector<1x1x128xi1>
    %31 = vector.broadcast %30 : vector<1x1x128xi1> to vector<3x16x128xi1>
    %32 = arith.select %31, %24, %29 : vector<3x16x128xi1>, vector<3x16x128xf32>
    %33 = arith.addf %23, %32 : vector<3x16x128xf32>
    %c1_i32_21 = arith.constant 1 : i32
    %34 = tpu.dynamic_rotate %33 by %c1_i32_21 dim 1 : vector<3x16x128xf32>, i32 -> vector<3x16x128xf32>
    %c15_i32_22 = arith.constant 15 : i32
    %35 = tpu.dynamic_rotate %33 by %c15_i32_22 dim 1 : vector<3x16x128xf32>, i32 -> vector<3x16x128xf32>
    %36 = arith.addf %33, %34 : vector<3x16x128xf32>
    %37 = arith.addf %36, %35 : vector<3x16x128xf32>
    %38 = arith.subf %35, %34 : vector<3x16x128xf32>
    %39 = arith.subf %34, %35 : vector<3x16x128xf32>
    %cst_23 = arith.constant 0.000000e+00 : f32
    %40 = vector.shape_cast %9 : vector<16x1xi1> to vector<1x16x1xi1>
    %41 = vector.broadcast %40 : vector<1x16x1xi1> to vector<3x16x128xi1>
    %42 = vector.broadcast %cst_23 : f32 to vector<3x16x128xf32>
    %43 = arith.select %41, %39, %42 : vector<3x16x128xi1>, vector<3x16x128xf32>
    %44 = vector.shape_cast %7 : vector<16x1xi1> to vector<1x16x1xi1>
    %45 = vector.broadcast %44 : vector<1x16x1xi1> to vector<3x16x128xi1>
    %46 = arith.select %45, %38, %43 : vector<3x16x128xi1>, vector<3x16x128xf32>
    %47 = arith.addf %37, %46 : vector<3x16x128xf32>
    %cst_24 = arith.constant 0.111111112 : f32
    %48 = vector.broadcast %cst_24 : f32 to vector<3x16x128xf32>
    %49 = arith.mulf %47, %48 : vector<3x16x128xf32>
    %50 = arith.mulf %19, %19 : vector<3x16x128xf32>
    %c1_i32_25 = arith.constant 1 : i32
    %51 = tpu.dynamic_rotate %50 by %c1_i32_25 dim 2 : vector<3x16x128xf32>, i32 -> vector<3x16x128xf32>
    %c127_i32_26 = arith.constant 127 : i32
    %52 = tpu.dynamic_rotate %50 by %c127_i32_26 dim 2 : vector<3x16x128xf32>, i32 -> vector<3x16x128xf32>
    %53 = arith.addf %50, %51 : vector<3x16x128xf32>
    %54 = arith.addf %53, %52 : vector<3x16x128xf32>
    %55 = arith.subf %52, %51 : vector<3x16x128xf32>
    %56 = arith.subf %51, %52 : vector<3x16x128xf32>
    %cst_27 = arith.constant 0.000000e+00 : f32
    %57 = vector.shape_cast %5 : vector<1x128xi1> to vector<1x1x128xi1>
    %58 = vector.broadcast %57 : vector<1x1x128xi1> to vector<3x16x128xi1>
    %59 = vector.broadcast %cst_27 : f32 to vector<3x16x128xf32>
    %60 = arith.select %58, %56, %59 : vector<3x16x128xi1>, vector<3x16x128xf32>
    %61 = vector.shape_cast %3 : vector<1x128xi1> to vector<1x1x128xi1>
    %62 = vector.broadcast %61 : vector<1x1x128xi1> to vector<3x16x128xi1>
    %63 = arith.select %62, %55, %60 : vector<3x16x128xi1>, vector<3x16x128xf32>
    %64 = arith.addf %54, %63 : vector<3x16x128xf32>
    %c1_i32_28 = arith.constant 1 : i32
    %65 = tpu.dynamic_rotate %64 by %c1_i32_28 dim 1 : vector<3x16x128xf32>, i32 -> vector<3x16x128xf32>
    %c15_i32_29 = arith.constant 15 : i32
    %66 = tpu.dynamic_rotate %64 by %c15_i32_29 dim 1 : vector<3x16x128xf32>, i32 -> vector<3x16x128xf32>
    %67 = arith.addf %64, %65 : vector<3x16x128xf32>
    %68 = arith.addf %67, %66 : vector<3x16x128xf32>
    %69 = arith.subf %66, %65 : vector<3x16x128xf32>
    %70 = arith.subf %65, %66 : vector<3x16x128xf32>
    %cst_30 = arith.constant 0.000000e+00 : f32
    %71 = vector.shape_cast %9 : vector<16x1xi1> to vector<1x16x1xi1>
    %72 = vector.broadcast %71 : vector<1x16x1xi1> to vector<3x16x128xi1>
    %73 = vector.broadcast %cst_30 : f32 to vector<3x16x128xf32>
    %74 = arith.select %72, %70, %73 : vector<3x16x128xi1>, vector<3x16x128xf32>
    %75 = vector.shape_cast %7 : vector<16x1xi1> to vector<1x16x1xi1>
    %76 = vector.broadcast %75 : vector<1x16x1xi1> to vector<3x16x128xi1>
    %77 = arith.select %76, %69, %74 : vector<3x16x128xi1>, vector<3x16x128xf32>
    %78 = arith.addf %68, %77 : vector<3x16x128xf32>
    %cst_31 = arith.constant 0.111111112 : f32
    %79 = vector.broadcast %cst_31 : f32 to vector<3x16x128xf32>
    %80 = arith.mulf %78, %79 : vector<3x16x128xf32>
    %81 = arith.mulf %19, %11 : vector<3x16x128xf32>
    %c1_i32_32 = arith.constant 1 : i32
    %82 = tpu.dynamic_rotate %81 by %c1_i32_32 dim 2 : vector<3x16x128xf32>, i32 -> vector<3x16x128xf32>
    %c127_i32_33 = arith.constant 127 : i32
    %83 = tpu.dynamic_rotate %81 by %c127_i32_33 dim 2 : vector<3x16x128xf32>, i32 -> vector<3x16x128xf32>
    %84 = arith.addf %81, %82 : vector<3x16x128xf32>
    %85 = arith.addf %84, %83 : vector<3x16x128xf32>
    %86 = arith.subf %83, %82 : vector<3x16x128xf32>
    %87 = arith.subf %82, %83 : vector<3x16x128xf32>
    %cst_34 = arith.constant 0.000000e+00 : f32
    %88 = vector.shape_cast %5 : vector<1x128xi1> to vector<1x1x128xi1>
    %89 = vector.broadcast %88 : vector<1x1x128xi1> to vector<3x16x128xi1>
    %90 = vector.broadcast %cst_34 : f32 to vector<3x16x128xf32>
    %91 = arith.select %89, %87, %90 : vector<3x16x128xi1>, vector<3x16x128xf32>
    %92 = vector.shape_cast %3 : vector<1x128xi1> to vector<1x1x128xi1>
    %93 = vector.broadcast %92 : vector<1x1x128xi1> to vector<3x16x128xi1>
    %94 = arith.select %93, %86, %91 : vector<3x16x128xi1>, vector<3x16x128xf32>
    %95 = arith.addf %85, %94 : vector<3x16x128xf32>
    %c1_i32_35 = arith.constant 1 : i32
    %96 = tpu.dynamic_rotate %95 by %c1_i32_35 dim 1 : vector<3x16x128xf32>, i32 -> vector<3x16x128xf32>
    %c15_i32_36 = arith.constant 15 : i32
    %97 = tpu.dynamic_rotate %95 by %c15_i32_36 dim 1 : vector<3x16x128xf32>, i32 -> vector<3x16x128xf32>
    %98 = arith.addf %95, %96 : vector<3x16x128xf32>
    %99 = arith.addf %98, %97 : vector<3x16x128xf32>
    %100 = arith.subf %97, %96 : vector<3x16x128xf32>
    %101 = arith.subf %96, %97 : vector<3x16x128xf32>
    %cst_37 = arith.constant 0.000000e+00 : f32
    %102 = vector.shape_cast %9 : vector<16x1xi1> to vector<1x16x1xi1>
    %103 = vector.broadcast %102 : vector<1x16x1xi1> to vector<3x16x128xi1>
    %104 = vector.broadcast %cst_37 : f32 to vector<3x16x128xf32>
    %105 = arith.select %103, %101, %104 : vector<3x16x128xi1>, vector<3x16x128xf32>
    %106 = vector.shape_cast %7 : vector<16x1xi1> to vector<1x16x1xi1>
    %107 = vector.broadcast %106 : vector<1x16x1xi1> to vector<3x16x128xi1>
    %108 = arith.select %107, %100, %105 : vector<3x16x128xi1>, vector<3x16x128xf32>
    %109 = arith.addf %99, %108 : vector<3x16x128xf32>
    %cst_38 = arith.constant 0.111111112 : f32
    %110 = vector.broadcast %cst_38 : f32 to vector<3x16x128xf32>
    %111 = arith.mulf %109, %110 : vector<3x16x128xf32>
    %112 = arith.mulf %49, %49 : vector<3x16x128xf32>
    %113 = arith.subf %80, %112 : vector<3x16x128xf32>
    %114 = arith.mulf %49, %15 : vector<3x16x128xf32>
    %cst_39 = arith.constant 9.99999974E-5 : f32
    %115 = vector.broadcast %cst_39 : f32 to vector<3x16x128xf32>
    %116 = arith.addf %114, %115 : vector<3x16x128xf32>
    %cst_40 = arith.constant 2.000000e+00 : f32
    %117 = vector.broadcast %cst_40 : f32 to vector<3x16x128xf32>
    %118 = arith.mulf %117, %111 : vector<3x16x128xf32>
    %119 = arith.subf %118, %114 : vector<3x16x128xf32>
    %cst_41 = arith.constant 8.99999984E-4 : f32
    %120 = vector.broadcast %cst_41 : f32 to vector<3x16x128xf32>
    %121 = arith.addf %119, %120 : vector<3x16x128xf32>
    %122 = arith.mulf %116, %121 : vector<3x16x128xf32>
    %123 = arith.addf %112, %16 : vector<3x16x128xf32>
    %124 = arith.addf %113, %17 : vector<3x16x128xf32>
    %125 = arith.mulf %123, %124 : vector<3x16x128xf32>
    %126 = tpu.reciprocal %125 {approx = true} : vector<3x16x128xf32> -> vector<3x16x128xf32>
    %127 = arith.mulf %125, %126 : vector<3x16x128xf32>
    %cst_42 = arith.constant 2.000000e+00 : f32
    %128 = vector.broadcast %cst_42 : f32 to vector<3x16x128xf32>
    %129 = arith.subf %128, %127 : vector<3x16x128xf32>
    %130 = arith.mulf %126, %129 : vector<3x16x128xf32>
    %131 = arith.mulf %125, %130 : vector<3x16x128xf32>
    %cst_43 = arith.constant 2.000000e+00 : f32
    %132 = vector.broadcast %cst_43 : f32 to vector<3x16x128xf32>
    %133 = arith.subf %132, %131 : vector<3x16x128xf32>
    %134 = arith.mulf %130, %133 : vector<3x16x128xf32>
    %135 = arith.mulf %122, %134 : vector<3x16x128xf32>
    %cst_44 = arith.constant 1.000000e+00 : f32
    %136 = vector.broadcast %cst_44 : f32 to vector<3x16x128xf32>
    %137 = arith.subf %136, %135 : vector<3x16x128xf32>
    %cst_45 = arith.constant 5.000000e-01 : f32
    %138 = vector.broadcast %cst_45 : f32 to vector<3x16x128xf32>
    %139 = arith.mulf %137, %138 : vector<3x16x128xf32>
    %cst_46 = arith.constant 0.000000e+00 : f32
    %cst_47 = arith.constant 1.000000e+00 : f32
    %140 = vector.broadcast %cst_46 : f32 to vector<3x16x128xf32>
    %141 = arith.maximumf %140, %139 : vector<3x16x128xf32>
    %142 = vector.broadcast %cst_47 : f32 to vector<3x16x128xf32>
    %143 = arith.minimumf %142, %141 : vector<3x16x128xf32>
    %cst_48 = arith.constant 8.500000e-01 : f32
    %144 = vector.broadcast %cst_48 : f32 to vector<3x16x128xf32>
    %145 = arith.mulf %144, %143 : vector<3x16x128xf32>
    %146 = arith.subf %19, %11 : vector<3x16x128xf32>
    %147 = math.absf %146 : vector<3x16x128xf32>
    %cst_49 = arith.constant 1.500000e-01 : f32
    %148 = vector.broadcast %cst_49 : f32 to vector<3x16x128xf32>
    %149 = arith.mulf %148, %147 : vector<3x16x128xf32>
    %150 = arith.addf %145, %149 : vector<3x16x128xf32>
    %cst_50 = arith.constant dense<0.000000e+00> : vector<16x128xf32>
    %151 = vector.multi_reduction <add>, %150, %cst_50 [0] : vector<3x16x128xf32> to vector<16x128xf32>
    %cst_51 = arith.constant 3.000000e+00 : f32
    %152 = vector.broadcast %cst_51 : f32 to vector<16x128xf32>
    %153 = arith.divf %151, %152 : vector<16x128xf32>
    %c0_52 = arith.constant 0 : index
    %c0_53 = arith.constant 0 : index
    %c0_54 = arith.constant 0 : index
    %c0_55 = arith.constant 0 : index
    %c0_56 = arith.constant 0 : index
    %154 = vector.load %arg4[%c0_52, %c0_53, %c0_54, %c0_55, %c0_56] : memref<1x1x3x16x128xf32, #tpu.memory_space<vmem>>, vector<1x1x3x16x128xf32>
    %155 = vector.shape_cast %154 : vector<1x1x3x16x128xf32> to vector<3x16x128xf32>
    %c1_i32_57 = arith.constant 1 : i32
    %156 = tpu.dynamic_rotate %155 by %c1_i32_57 dim 2 : vector<3x16x128xf32>, i32 -> vector<3x16x128xf32>
    %c127_i32_58 = arith.constant 127 : i32
    %157 = tpu.dynamic_rotate %155 by %c127_i32_58 dim 2 : vector<3x16x128xf32>, i32 -> vector<3x16x128xf32>
    %158 = arith.addf %155, %156 : vector<3x16x128xf32>
    %159 = arith.addf %158, %157 : vector<3x16x128xf32>
    %160 = arith.subf %157, %156 : vector<3x16x128xf32>
    %161 = arith.subf %156, %157 : vector<3x16x128xf32>
    %cst_59 = arith.constant 0.000000e+00 : f32
    %162 = vector.shape_cast %5 : vector<1x128xi1> to vector<1x1x128xi1>
    %163 = vector.broadcast %162 : vector<1x1x128xi1> to vector<3x16x128xi1>
    %164 = vector.broadcast %cst_59 : f32 to vector<3x16x128xf32>
    %165 = arith.select %163, %161, %164 : vector<3x16x128xi1>, vector<3x16x128xf32>
    %166 = vector.shape_cast %3 : vector<1x128xi1> to vector<1x1x128xi1>
    %167 = vector.broadcast %166 : vector<1x1x128xi1> to vector<3x16x128xi1>
    %168 = arith.select %167, %160, %165 : vector<3x16x128xi1>, vector<3x16x128xf32>
    %169 = arith.addf %159, %168 : vector<3x16x128xf32>
    %c1_i32_60 = arith.constant 1 : i32
    %170 = tpu.dynamic_rotate %169 by %c1_i32_60 dim 1 : vector<3x16x128xf32>, i32 -> vector<3x16x128xf32>
    %c15_i32_61 = arith.constant 15 : i32
    %171 = tpu.dynamic_rotate %169 by %c15_i32_61 dim 1 : vector<3x16x128xf32>, i32 -> vector<3x16x128xf32>
    %172 = arith.addf %169, %170 : vector<3x16x128xf32>
    %173 = arith.addf %172, %171 : vector<3x16x128xf32>
    %174 = arith.subf %171, %170 : vector<3x16x128xf32>
    %175 = arith.subf %170, %171 : vector<3x16x128xf32>
    %cst_62 = arith.constant 0.000000e+00 : f32
    %176 = vector.shape_cast %9 : vector<16x1xi1> to vector<1x16x1xi1>
    %177 = vector.broadcast %176 : vector<1x16x1xi1> to vector<3x16x128xi1>
    %178 = vector.broadcast %cst_62 : f32 to vector<3x16x128xf32>
    %179 = arith.select %177, %175, %178 : vector<3x16x128xi1>, vector<3x16x128xf32>
    %180 = vector.shape_cast %7 : vector<16x1xi1> to vector<1x16x1xi1>
    %181 = vector.broadcast %180 : vector<1x16x1xi1> to vector<3x16x128xi1>
    %182 = arith.select %181, %174, %179 : vector<3x16x128xi1>, vector<3x16x128xf32>
    %183 = arith.addf %173, %182 : vector<3x16x128xf32>
    %cst_63 = arith.constant 0.111111112 : f32
    %184 = vector.broadcast %cst_63 : f32 to vector<3x16x128xf32>
    %185 = arith.mulf %183, %184 : vector<3x16x128xf32>
    %186 = arith.mulf %155, %155 : vector<3x16x128xf32>
    %c1_i32_64 = arith.constant 1 : i32
    %187 = tpu.dynamic_rotate %186 by %c1_i32_64 dim 2 : vector<3x16x128xf32>, i32 -> vector<3x16x128xf32>
    %c127_i32_65 = arith.constant 127 : i32
    %188 = tpu.dynamic_rotate %186 by %c127_i32_65 dim 2 : vector<3x16x128xf32>, i32 -> vector<3x16x128xf32>
    %189 = arith.addf %186, %187 : vector<3x16x128xf32>
    %190 = arith.addf %189, %188 : vector<3x16x128xf32>
    %191 = arith.subf %188, %187 : vector<3x16x128xf32>
    %192 = arith.subf %187, %188 : vector<3x16x128xf32>
    %cst_66 = arith.constant 0.000000e+00 : f32
    %193 = vector.shape_cast %5 : vector<1x128xi1> to vector<1x1x128xi1>
    %194 = vector.broadcast %193 : vector<1x1x128xi1> to vector<3x16x128xi1>
    %195 = vector.broadcast %cst_66 : f32 to vector<3x16x128xf32>
    %196 = arith.select %194, %192, %195 : vector<3x16x128xi1>, vector<3x16x128xf32>
    %197 = vector.shape_cast %3 : vector<1x128xi1> to vector<1x1x128xi1>
    %198 = vector.broadcast %197 : vector<1x1x128xi1> to vector<3x16x128xi1>
    %199 = arith.select %198, %191, %196 : vector<3x16x128xi1>, vector<3x16x128xf32>
    %200 = arith.addf %190, %199 : vector<3x16x128xf32>
    %c1_i32_67 = arith.constant 1 : i32
    %201 = tpu.dynamic_rotate %200 by %c1_i32_67 dim 1 : vector<3x16x128xf32>, i32 -> vector<3x16x128xf32>
    %c15_i32_68 = arith.constant 15 : i32
    %202 = tpu.dynamic_rotate %200 by %c15_i32_68 dim 1 : vector<3x16x128xf32>, i32 -> vector<3x16x128xf32>
    %203 = arith.addf %200, %201 : vector<3x16x128xf32>
    %204 = arith.addf %203, %202 : vector<3x16x128xf32>
    %205 = arith.subf %202, %201 : vector<3x16x128xf32>
    %206 = arith.subf %201, %202 : vector<3x16x128xf32>
    %cst_69 = arith.constant 0.000000e+00 : f32
    %207 = vector.shape_cast %9 : vector<16x1xi1> to vector<1x16x1xi1>
    %208 = vector.broadcast %207 : vector<1x16x1xi1> to vector<3x16x128xi1>
    %209 = vector.broadcast %cst_69 : f32 to vector<3x16x128xf32>
    %210 = arith.select %208, %206, %209 : vector<3x16x128xi1>, vector<3x16x128xf32>
    %211 = vector.shape_cast %7 : vector<16x1xi1> to vector<1x16x1xi1>
    %212 = vector.broadcast %211 : vector<1x16x1xi1> to vector<3x16x128xi1>
    %213 = arith.select %212, %205, %210 : vector<3x16x128xi1>, vector<3x16x128xf32>
    %214 = arith.addf %204, %213 : vector<3x16x128xf32>
    %cst_70 = arith.constant 0.111111112 : f32
    %215 = vector.broadcast %cst_70 : f32 to vector<3x16x128xf32>
    %216 = arith.mulf %214, %215 : vector<3x16x128xf32>
    %217 = arith.mulf %155, %11 : vector<3x16x128xf32>
    %c1_i32_71 = arith.constant 1 : i32
    %218 = tpu.dynamic_rotate %217 by %c1_i32_71 dim 2 : vector<3x16x128xf32>, i32 -> vector<3x16x128xf32>
    %c127_i32_72 = arith.constant 127 : i32
    %219 = tpu.dynamic_rotate %217 by %c127_i32_72 dim 2 : vector<3x16x128xf32>, i32 -> vector<3x16x128xf32>
    %220 = arith.addf %217, %218 : vector<3x16x128xf32>
    %221 = arith.addf %220, %219 : vector<3x16x128xf32>
    %222 = arith.subf %219, %218 : vector<3x16x128xf32>
    %223 = arith.subf %218, %219 : vector<3x16x128xf32>
    %cst_73 = arith.constant 0.000000e+00 : f32
    %224 = vector.shape_cast %5 : vector<1x128xi1> to vector<1x1x128xi1>
    %225 = vector.broadcast %224 : vector<1x1x128xi1> to vector<3x16x128xi1>
    %226 = vector.broadcast %cst_73 : f32 to vector<3x16x128xf32>
    %227 = arith.select %225, %223, %226 : vector<3x16x128xi1>, vector<3x16x128xf32>
    %228 = vector.shape_cast %3 : vector<1x128xi1> to vector<1x1x128xi1>
    %229 = vector.broadcast %228 : vector<1x1x128xi1> to vector<3x16x128xi1>
    %230 = arith.select %229, %222, %227 : vector<3x16x128xi1>, vector<3x16x128xf32>
    %231 = arith.addf %221, %230 : vector<3x16x128xf32>
    %c1_i32_74 = arith.constant 1 : i32
    %232 = tpu.dynamic_rotate %231 by %c1_i32_74 dim 1 : vector<3x16x128xf32>, i32 -> vector<3x16x128xf32>
    %c15_i32_75 = arith.constant 15 : i32
    %233 = tpu.dynamic_rotate %231 by %c15_i32_75 dim 1 : vector<3x16x128xf32>, i32 -> vector<3x16x128xf32>
    %234 = arith.addf %231, %232 : vector<3x16x128xf32>
    %235 = arith.addf %234, %233 : vector<3x16x128xf32>
    %236 = arith.subf %233, %232 : vector<3x16x128xf32>
    %237 = arith.subf %232, %233 : vector<3x16x128xf32>
    %cst_76 = arith.constant 0.000000e+00 : f32
    %238 = vector.shape_cast %9 : vector<16x1xi1> to vector<1x16x1xi1>
    %239 = vector.broadcast %238 : vector<1x16x1xi1> to vector<3x16x128xi1>
    %240 = vector.broadcast %cst_76 : f32 to vector<3x16x128xf32>
    %241 = arith.select %239, %237, %240 : vector<3x16x128xi1>, vector<3x16x128xf32>
    %242 = vector.shape_cast %7 : vector<16x1xi1> to vector<1x16x1xi1>
    %243 = vector.broadcast %242 : vector<1x16x1xi1> to vector<3x16x128xi1>
    %244 = arith.select %243, %236, %241 : vector<3x16x128xi1>, vector<3x16x128xf32>
    %245 = arith.addf %235, %244 : vector<3x16x128xf32>
    %cst_77 = arith.constant 0.111111112 : f32
    %246 = vector.broadcast %cst_77 : f32 to vector<3x16x128xf32>
    %247 = arith.mulf %245, %246 : vector<3x16x128xf32>
    %248 = arith.mulf %185, %185 : vector<3x16x128xf32>
    %249 = arith.subf %216, %248 : vector<3x16x128xf32>
    %250 = arith.mulf %185, %15 : vector<3x16x128xf32>
    %cst_78 = arith.constant 9.99999974E-5 : f32
    %251 = vector.broadcast %cst_78 : f32 to vector<3x16x128xf32>
    %252 = arith.addf %250, %251 : vector<3x16x128xf32>
    %cst_79 = arith.constant 2.000000e+00 : f32
    %253 = vector.broadcast %cst_79 : f32 to vector<3x16x128xf32>
    %254 = arith.mulf %253, %247 : vector<3x16x128xf32>
    %255 = arith.subf %254, %250 : vector<3x16x128xf32>
    %cst_80 = arith.constant 8.99999984E-4 : f32
    %256 = vector.broadcast %cst_80 : f32 to vector<3x16x128xf32>
    %257 = arith.addf %255, %256 : vector<3x16x128xf32>
    %258 = arith.mulf %252, %257 : vector<3x16x128xf32>
    %259 = arith.addf %248, %16 : vector<3x16x128xf32>
    %260 = arith.addf %249, %17 : vector<3x16x128xf32>
    %261 = arith.mulf %259, %260 : vector<3x16x128xf32>
    %262 = tpu.reciprocal %261 {approx = true} : vector<3x16x128xf32> -> vector<3x16x128xf32>
    %263 = arith.mulf %261, %262 : vector<3x16x128xf32>
    %cst_81 = arith.constant 2.000000e+00 : f32
    %264 = vector.broadcast %cst_81 : f32 to vector<3x16x128xf32>
    %265 = arith.subf %264, %263 : vector<3x16x128xf32>
    %266 = arith.mulf %262, %265 : vector<3x16x128xf32>
    %267 = arith.mulf %261, %266 : vector<3x16x128xf32>
    %cst_82 = arith.constant 2.000000e+00 : f32
    %268 = vector.broadcast %cst_82 : f32 to vector<3x16x128xf32>
    %269 = arith.subf %268, %267 : vector<3x16x128xf32>
    %270 = arith.mulf %266, %269 : vector<3x16x128xf32>
    %271 = arith.mulf %258, %270 : vector<3x16x128xf32>
    %cst_83 = arith.constant 1.000000e+00 : f32
    %272 = vector.broadcast %cst_83 : f32 to vector<3x16x128xf32>
    %273 = arith.subf %272, %271 : vector<3x16x128xf32>
    %cst_84 = arith.constant 5.000000e-01 : f32
    %274 = vector.broadcast %cst_84 : f32 to vector<3x16x128xf32>
    %275 = arith.mulf %273, %274 : vector<3x16x128xf32>
    %cst_85 = arith.constant 0.000000e+00 : f32
    %cst_86 = arith.constant 1.000000e+00 : f32
    %276 = vector.broadcast %cst_85 : f32 to vector<3x16x128xf32>
    %277 = arith.maximumf %276, %275 : vector<3x16x128xf32>
    %278 = vector.broadcast %cst_86 : f32 to vector<3x16x128xf32>
    %279 = arith.minimumf %278, %277 : vector<3x16x128xf32>
    %cst_87 = arith.constant 8.500000e-01 : f32
    %280 = vector.broadcast %cst_87 : f32 to vector<3x16x128xf32>
    %281 = arith.mulf %280, %279 : vector<3x16x128xf32>
    %282 = arith.subf %155, %11 : vector<3x16x128xf32>
    %283 = math.absf %282 : vector<3x16x128xf32>
    %cst_88 = arith.constant 1.500000e-01 : f32
    %284 = vector.broadcast %cst_88 : f32 to vector<3x16x128xf32>
    %285 = arith.mulf %284, %283 : vector<3x16x128xf32>
    %286 = arith.addf %281, %285 : vector<3x16x128xf32>
    %cst_89 = arith.constant dense<0.000000e+00> : vector<16x128xf32>
    %287 = vector.multi_reduction <add>, %286, %cst_89 [0] : vector<3x16x128xf32> to vector<16x128xf32>
    %cst_90 = arith.constant 3.000000e+00 : f32
    %288 = vector.broadcast %cst_90 : f32 to vector<16x128xf32>
    %289 = arith.divf %287, %288 : vector<16x128xf32>
    %c0_i32_91 = arith.constant 0 : i32
    %290 = arith.cmpi eq, %arg1, %c0_i32_91 : i32
    %291 = arith.extui %290 : i1 to i32
    %c0_i32_92 = arith.constant 0 : i32
    %292 = arith.cmpi ne, %291, %c0_i32_92 : i32
    scf.if %292 {
      %c0_97 = arith.constant 0 : index
      %c0_98 = arith.constant 0 : index
      %299 = vector.load %arg13[%c0_97, %c0_98] : memref<16x128xf32, #tpu.memory_space<vmem>>, vector<16x128xf32>
      tpu.vector_store %arg13[%c0_97, %c0_98], %153 {strides = array<i32>} : memref<16x128xf32, #tpu.memory_space<vmem>>, vector<16x128xf32>,
      %c0_99 = arith.constant 0 : index
      %c0_100 = arith.constant 0 : index
      %300 = vector.load %arg14[%c0_99, %c0_100] : memref<16x128xf32, #tpu.memory_space<vmem>>, vector<16x128xf32>
      tpu.vector_store %arg14[%c0_99, %c0_100], %289 {strides = array<i32>} : memref<16x128xf32, #tpu.memory_space<vmem>>, vector<16x128xf32>,
    } else {
    }
    %c0_i32_93 = arith.constant 0 : i32
    %293 = arith.cmpi ne, %arg1, %c0_i32_93 : i32
    %294 = arith.extui %293 : i1 to i32
    %c0_i32_94 = arith.constant 0 : i32
    %295 = arith.cmpi ne, %294, %c0_i32_94 : i32
    scf.if %295 {
      %c0_97 = arith.constant 0 : index
      %c0_98 = arith.constant 0 : index
      %299 = vector.load %arg13[%c0_97, %c0_98] : memref<16x128xf32, #tpu.memory_space<vmem>>, vector<16x128xf32>
      %300 = arith.minimumf %299, %153 : vector<16x128xf32>
      %c0_99 = arith.constant 0 : index
      %c0_100 = arith.constant 0 : index
      %301 = vector.load %arg13[%c0_99, %c0_100] : memref<16x128xf32, #tpu.memory_space<vmem>>, vector<16x128xf32>
      tpu.vector_store %arg13[%c0_99, %c0_100], %300 {strides = array<i32>} : memref<16x128xf32, #tpu.memory_space<vmem>>, vector<16x128xf32>,
      %c0_101 = arith.constant 0 : index
      %c0_102 = arith.constant 0 : index
      %302 = vector.load %arg14[%c0_101, %c0_102] : memref<16x128xf32, #tpu.memory_space<vmem>>, vector<16x128xf32>
      %303 = arith.minimumf %302, %289 : vector<16x128xf32>
      %c0_103 = arith.constant 0 : index
      %c0_104 = arith.constant 0 : index
      %304 = vector.load %arg14[%c0_103, %c0_104] : memref<16x128xf32, #tpu.memory_space<vmem>>, vector<16x128xf32>
      tpu.vector_store %arg14[%c0_103, %c0_104], %303 {strides = array<i32>} : memref<16x128xf32, #tpu.memory_space<vmem>>, vector<16x128xf32>,
    } else {
    }
    %c1_i32_95 = arith.constant 1 : i32
    %296 = arith.cmpi eq, %arg1, %c1_i32_95 : i32
    %297 = arith.extui %296 : i1 to i32
    %c0_i32_96 = arith.constant 0 : i32
    %298 = arith.cmpi ne, %297, %c0_i32_96 : i32
    scf.if %298 {
      %c0_97 = arith.constant 0 : index
      %c0_98 = arith.constant 0 : index
      %c0_99 = arith.constant 0 : index
      %c0_100 = arith.constant 0 : index
      %299 = vector.load %arg6[%c0_97, %c0_98, %c0_99, %c0_100] : memref<1x1x16x128xf32, #tpu.memory_space<vmem>>, vector<1x1x16x128xf32>
      %300 = vector.shape_cast %299 : vector<1x1x16x128xf32> to vector<16x128xf32>
      %c0_101 = arith.constant 0 : index
      %c0_102 = arith.constant 0 : index
      %c0_103 = arith.constant 0 : index
      %c0_104 = arith.constant 0 : index
      %301 = vector.load %arg7[%c0_101, %c0_102, %c0_103, %c0_104] : memref<1x1x16x128xf32, #tpu.memory_space<vmem>>, vector<1x1x16x128xf32>
      %302 = vector.shape_cast %301 : vector<1x1x16x128xf32> to vector<16x128xf32>
      %c0_105 = arith.constant 0 : index
      %c0_106 = arith.constant 0 : index
      %c0_107 = arith.constant 0 : index
      %c0_108 = arith.constant 0 : index
      %303 = vector.load %arg8[%c0_105, %c0_106, %c0_107, %c0_108] : memref<1x1x16x128xf32, #tpu.memory_space<vmem>>, vector<1x1x16x128xf32>
      %304 = vector.shape_cast %303 : vector<1x1x16x128xf32> to vector<16x128xf32>
      %c0_109 = arith.constant 0 : index
      %c0_110 = arith.constant 0 : index
      %c0_111 = arith.constant 0 : index
      %c0_112 = arith.constant 0 : index
      %305 = vector.load %arg5[%c0_109, %c0_110, %c0_111, %c0_112] : memref<1x3x16x128xf32, #tpu.memory_space<vmem>>, vector<1x3x16x128xf32>
      %306 = vector.shape_cast %305 : vector<1x3x16x128xf32> to vector<3x16x128xf32>
      %c1_i32_113 = arith.constant 1 : i32
      %307 = tpu.dynamic_rotate %306 by %c1_i32_113 dim 2 : vector<3x16x128xf32>, i32 -> vector<3x16x128xf32>
      %c127_i32_114 = arith.constant 127 : i32
      %308 = tpu.dynamic_rotate %306 by %c127_i32_114 dim 2 : vector<3x16x128xf32>, i32 -> vector<3x16x128xf32>
      %309 = arith.addf %306, %307 : vector<3x16x128xf32>
      %310 = arith.addf %309, %308 : vector<3x16x128xf32>
      %311 = arith.subf %308, %307 : vector<3x16x128xf32>
      %312 = arith.subf %307, %308 : vector<3x16x128xf32>
      %cst_115 = arith.constant 0.000000e+00 : f32
      %313 = vector.shape_cast %5 : vector<1x128xi1> to vector<1x1x128xi1>
      %314 = vector.broadcast %313 : vector<1x1x128xi1> to vector<3x16x128xi1>
      %315 = vector.broadcast %cst_115 : f32 to vector<3x16x128xf32>
      %316 = arith.select %314, %312, %315 : vector<3x16x128xi1>, vector<3x16x128xf32>
      %317 = vector.shape_cast %3 : vector<1x128xi1> to vector<1x1x128xi1>
      %318 = vector.broadcast %317 : vector<1x1x128xi1> to vector<3x16x128xi1>
      %319 = arith.select %318, %311, %316 : vector<3x16x128xi1>, vector<3x16x128xf32>
      %320 = arith.addf %310, %319 : vector<3x16x128xf32>
      %c1_i32_116 = arith.constant 1 : i32
      %321 = tpu.dynamic_rotate %320 by %c1_i32_116 dim 1 : vector<3x16x128xf32>, i32 -> vector<3x16x128xf32>
      %c15_i32_117 = arith.constant 15 : i32
      %322 = tpu.dynamic_rotate %320 by %c15_i32_117 dim 1 : vector<3x16x128xf32>, i32 -> vector<3x16x128xf32>
      %323 = arith.addf %320, %321 : vector<3x16x128xf32>
      %324 = arith.addf %323, %322 : vector<3x16x128xf32>
      %325 = arith.subf %322, %321 : vector<3x16x128xf32>
      %326 = arith.subf %321, %322 : vector<3x16x128xf32>
      %cst_118 = arith.constant 0.000000e+00 : f32
      %327 = vector.shape_cast %9 : vector<16x1xi1> to vector<1x16x1xi1>
      %328 = vector.broadcast %327 : vector<1x16x1xi1> to vector<3x16x128xi1>
      %329 = vector.broadcast %cst_118 : f32 to vector<3x16x128xf32>
      %330 = arith.select %328, %326, %329 : vector<3x16x128xi1>, vector<3x16x128xf32>
      %331 = vector.shape_cast %7 : vector<16x1xi1> to vector<1x16x1xi1>
      %332 = vector.broadcast %331 : vector<1x16x1xi1> to vector<3x16x128xi1>
      %333 = arith.select %332, %325, %330 : vector<3x16x128xi1>, vector<3x16x128xf32>
      %334 = arith.addf %324, %333 : vector<3x16x128xf32>
      %cst_119 = arith.constant 0.111111112 : f32
      %335 = vector.broadcast %cst_119 : f32 to vector<3x16x128xf32>
      %336 = arith.mulf %334, %335 : vector<3x16x128xf32>
      %337 = arith.mulf %306, %306 : vector<3x16x128xf32>
      %c1_i32_120 = arith.constant 1 : i32
      %338 = tpu.dynamic_rotate %337 by %c1_i32_120 dim 2 : vector<3x16x128xf32>, i32 -> vector<3x16x128xf32>
      %c127_i32_121 = arith.constant 127 : i32
      %339 = tpu.dynamic_rotate %337 by %c127_i32_121 dim 2 : vector<3x16x128xf32>, i32 -> vector<3x16x128xf32>
      %340 = arith.addf %337, %338 : vector<3x16x128xf32>
      %341 = arith.addf %340, %339 : vector<3x16x128xf32>
      %342 = arith.subf %339, %338 : vector<3x16x128xf32>
      %343 = arith.subf %338, %339 : vector<3x16x128xf32>
      %cst_122 = arith.constant 0.000000e+00 : f32
      %344 = vector.shape_cast %5 : vector<1x128xi1> to vector<1x1x128xi1>
      %345 = vector.broadcast %344 : vector<1x1x128xi1> to vector<3x16x128xi1>
      %346 = vector.broadcast %cst_122 : f32 to vector<3x16x128xf32>
      %347 = arith.select %345, %343, %346 : vector<3x16x128xi1>, vector<3x16x128xf32>
      %348 = vector.shape_cast %3 : vector<1x128xi1> to vector<1x1x128xi1>
      %349 = vector.broadcast %348 : vector<1x1x128xi1> to vector<3x16x128xi1>
      %350 = arith.select %349, %342, %347 : vector<3x16x128xi1>, vector<3x16x128xf32>
      %351 = arith.addf %341, %350 : vector<3x16x128xf32>
      %c1_i32_123 = arith.constant 1 : i32
      %352 = tpu.dynamic_rotate %351 by %c1_i32_123 dim 1 : vector<3x16x128xf32>, i32 -> vector<3x16x128xf32>
      %c15_i32_124 = arith.constant 15 : i32
      %353 = tpu.dynamic_rotate %351 by %c15_i32_124 dim 1 : vector<3x16x128xf32>, i32 -> vector<3x16x128xf32>
      %354 = arith.addf %351, %352 : vector<3x16x128xf32>
      %355 = arith.addf %354, %353 : vector<3x16x128xf32>
      %356 = arith.subf %353, %352 : vector<3x16x128xf32>
      %357 = arith.subf %352, %353 : vector<3x16x128xf32>
      %cst_125 = arith.constant 0.000000e+00 : f32
      %358 = vector.shape_cast %9 : vector<16x1xi1> to vector<1x16x1xi1>
      %359 = vector.broadcast %358 : vector<1x16x1xi1> to vector<3x16x128xi1>
      %360 = vector.broadcast %cst_125 : f32 to vector<3x16x128xf32>
      %361 = arith.select %359, %357, %360 : vector<3x16x128xi1>, vector<3x16x128xf32>
      %362 = vector.shape_cast %7 : vector<16x1xi1> to vector<1x16x1xi1>
      %363 = vector.broadcast %362 : vector<1x16x1xi1> to vector<3x16x128xi1>
      %364 = arith.select %363, %356, %361 : vector<3x16x128xi1>, vector<3x16x128xf32>
      %365 = arith.addf %355, %364 : vector<3x16x128xf32>
      %cst_126 = arith.constant 0.111111112 : f32
      %366 = vector.broadcast %cst_126 : f32 to vector<3x16x128xf32>
      %367 = arith.mulf %365, %366 : vector<3x16x128xf32>
      %368 = arith.mulf %306, %11 : vector<3x16x128xf32>
      %c1_i32_127 = arith.constant 1 : i32
      %369 = tpu.dynamic_rotate %368 by %c1_i32_127 dim 2 : vector<3x16x128xf32>, i32 -> vector<3x16x128xf32>
      %c127_i32_128 = arith.constant 127 : i32
      %370 = tpu.dynamic_rotate %368 by %c127_i32_128 dim 2 : vector<3x16x128xf32>, i32 -> vector<3x16x128xf32>
      %371 = arith.addf %368, %369 : vector<3x16x128xf32>
      %372 = arith.addf %371, %370 : vector<3x16x128xf32>
      %373 = arith.subf %370, %369 : vector<3x16x128xf32>
      %374 = arith.subf %369, %370 : vector<3x16x128xf32>
      %cst_129 = arith.constant 0.000000e+00 : f32
      %375 = vector.shape_cast %5 : vector<1x128xi1> to vector<1x1x128xi1>
      %376 = vector.broadcast %375 : vector<1x1x128xi1> to vector<3x16x128xi1>
      %377 = vector.broadcast %cst_129 : f32 to vector<3x16x128xf32>
      %378 = arith.select %376, %374, %377 : vector<3x16x128xi1>, vector<3x16x128xf32>
      %379 = vector.shape_cast %3 : vector<1x128xi1> to vector<1x1x128xi1>
      %380 = vector.broadcast %379 : vector<1x1x128xi1> to vector<3x16x128xi1>
      %381 = arith.select %380, %373, %378 : vector<3x16x128xi1>, vector<3x16x128xf32>
      %382 = arith.addf %372, %381 : vector<3x16x128xf32>
      %c1_i32_130 = arith.constant 1 : i32
      %383 = tpu.dynamic_rotate %382 by %c1_i32_130 dim 1 : vector<3x16x128xf32>, i32 -> vector<3x16x128xf32>
      %c15_i32_131 = arith.constant 15 : i32
      %384 = tpu.dynamic_rotate %382 by %c15_i32_131 dim 1 : vector<3x16x128xf32>, i32 -> vector<3x16x128xf32>
      %385 = arith.addf %382, %383 : vector<3x16x128xf32>
      %386 = arith.addf %385, %384 : vector<3x16x128xf32>
      %387 = arith.subf %384, %383 : vector<3x16x128xf32>
      %388 = arith.subf %383, %384 : vector<3x16x128xf32>
      %cst_132 = arith.constant 0.000000e+00 : f32
      %389 = vector.shape_cast %9 : vector<16x1xi1> to vector<1x16x1xi1>
      %390 = vector.broadcast %389 : vector<1x16x1xi1> to vector<3x16x128xi1>
      %391 = vector.broadcast %cst_132 : f32 to vector<3x16x128xf32>
      %392 = arith.select %390, %388, %391 : vector<3x16x128xi1>, vector<3x16x128xf32>
      %393 = vector.shape_cast %7 : vector<16x1xi1> to vector<1x16x1xi1>
      %394 = vector.broadcast %393 : vector<1x16x1xi1> to vector<3x16x128xi1>
      %395 = arith.select %394, %387, %392 : vector<3x16x128xi1>, vector<3x16x128xf32>
      %396 = arith.addf %386, %395 : vector<3x16x128xf32>
      %cst_133 = arith.constant 0.111111112 : f32
      %397 = vector.broadcast %cst_133 : f32 to vector<3x16x128xf32>
      %398 = arith.mulf %396, %397 : vector<3x16x128xf32>
      %399 = arith.mulf %336, %336 : vector<3x16x128xf32>
      %400 = arith.subf %367, %399 : vector<3x16x128xf32>
      %401 = arith.mulf %336, %15 : vector<3x16x128xf32>
      %cst_134 = arith.constant 9.99999974E-5 : f32
      %402 = vector.broadcast %cst_134 : f32 to vector<3x16x128xf32>
      %403 = arith.addf %401, %402 : vector<3x16x128xf32>
      %cst_135 = arith.constant 2.000000e+00 : f32
      %404 = vector.broadcast %cst_135 : f32 to vector<3x16x128xf32>
      %405 = arith.mulf %404, %398 : vector<3x16x128xf32>
      %406 = arith.subf %405, %401 : vector<3x16x128xf32>
      %cst_136 = arith.constant 8.99999984E-4 : f32
      %407 = vector.broadcast %cst_136 : f32 to vector<3x16x128xf32>
      %408 = arith.addf %406, %407 : vector<3x16x128xf32>
      %409 = arith.mulf %403, %408 : vector<3x16x128xf32>
      %410 = arith.addf %399, %16 : vector<3x16x128xf32>
      %411 = arith.addf %400, %17 : vector<3x16x128xf32>
      %412 = arith.mulf %410, %411 : vector<3x16x128xf32>
      %413 = tpu.reciprocal %412 {approx = true} : vector<3x16x128xf32> -> vector<3x16x128xf32>
      %414 = arith.mulf %412, %413 : vector<3x16x128xf32>
      %cst_137 = arith.constant 2.000000e+00 : f32
      %415 = vector.broadcast %cst_137 : f32 to vector<3x16x128xf32>
      %416 = arith.subf %415, %414 : vector<3x16x128xf32>
      %417 = arith.mulf %413, %416 : vector<3x16x128xf32>
      %418 = arith.mulf %412, %417 : vector<3x16x128xf32>
      %cst_138 = arith.constant 2.000000e+00 : f32
      %419 = vector.broadcast %cst_138 : f32 to vector<3x16x128xf32>
      %420 = arith.subf %419, %418 : vector<3x16x128xf32>
      %421 = arith.mulf %417, %420 : vector<3x16x128xf32>
      %422 = arith.mulf %409, %421 : vector<3x16x128xf32>
      %cst_139 = arith.constant 1.000000e+00 : f32
      %423 = vector.broadcast %cst_139 : f32 to vector<3x16x128xf32>
      %424 = arith.subf %423, %422 : vector<3x16x128xf32>
      %cst_140 = arith.constant 5.000000e-01 : f32
      %425 = vector.broadcast %cst_140 : f32 to vector<3x16x128xf32>
      %426 = arith.mulf %424, %425 : vector<3x16x128xf32>
      %cst_141 = arith.constant 0.000000e+00 : f32
      %cst_142 = arith.constant 1.000000e+00 : f32
      %427 = vector.broadcast %cst_141 : f32 to vector<3x16x128xf32>
      %428 = arith.maximumf %427, %426 : vector<3x16x128xf32>
      %429 = vector.broadcast %cst_142 : f32 to vector<3x16x128xf32>
      %430 = arith.minimumf %429, %428 : vector<3x16x128xf32>
      %cst_143 = arith.constant 8.500000e-01 : f32
      %431 = vector.broadcast %cst_143 : f32 to vector<3x16x128xf32>
      %432 = arith.mulf %431, %430 : vector<3x16x128xf32>
      %433 = arith.subf %306, %11 : vector<3x16x128xf32>
      %434 = math.absf %433 : vector<3x16x128xf32>
      %cst_144 = arith.constant 1.500000e-01 : f32
      %435 = vector.broadcast %cst_144 : f32 to vector<3x16x128xf32>
      %436 = arith.mulf %435, %434 : vector<3x16x128xf32>
      %437 = arith.addf %432, %436 : vector<3x16x128xf32>
      %cst_145 = arith.constant dense<0.000000e+00> : vector<16x128xf32>
      %438 = vector.multi_reduction <add>, %437, %cst_145 [0] : vector<3x16x128xf32> to vector<16x128xf32>
      %cst_146 = arith.constant 3.000000e+00 : f32
      %439 = vector.broadcast %cst_146 : f32 to vector<16x128xf32>
      %440 = arith.divf %438, %439 : vector<16x128xf32>
      %cst_147 = arith.constant 0.000000e+00 : f32
      %441 = vector.broadcast %cst_147 : f32 to vector<16x128xf32>
      %442 = arith.cmpf ogt, %300, %441 : vector<16x128xf32>
      %cst_148 = arith.constant 1.000000e+03 : f32
      %443 = vector.broadcast %cst_148 : f32 to vector<16x128xf32>
      %444 = arith.select %442, %440, %443 : vector<16x128xi1>, vector<16x128xf32>
      %c0_149 = arith.constant 0 : index
      %c0_150 = arith.constant 0 : index
      %445 = vector.load %arg13[%c0_149, %c0_150] : memref<16x128xf32, #tpu.memory_space<vmem>>, vector<16x128xf32>
      %c0_151 = arith.constant 0 : index
      %c0_152 = arith.constant 0 : index
      %446 = vector.load %arg14[%c0_151, %c0_152] : memref<16x128xf32, #tpu.memory_space<vmem>>, vector<16x128xf32>
      %cst_153 = arith.constant 9.99999974E-6 : f32
      %447 = vector.broadcast %cst_153 : f32 to vector<16x128xf32>
      %448 = arith.mulf %304, %447 : vector<16x128xf32>
      %449 = arith.addf %446, %448 : vector<16x128xf32>
      %450 = arith.cmpf ole, %449, %445 : vector<16x128xf32>
      %451 = arith.cmpf ole, %449, %444 : vector<16x128xf32>
      %452 = arith.andi %450, %451 : vector<16x128xi1>
      %cst_154 = arith.constant dense<true> : vector<16x128xi1>
      %453 = arith.xori %452, %cst_154 : vector<16x128xi1>
      %454 = arith.cmpf olt, %444, %445 : vector<16x128xf32>
      %455 = arith.andi %453, %454 : vector<16x128xi1>
      %cst_155 = arith.constant dense<true> : vector<16x128xi1>
      %456 = arith.xori %452, %cst_155 : vector<16x128xi1>
      %457 = arith.extui %456 : vector<16x128xi1> to vector<16x128xi32>
      %458 = arith.sitofp %457 : vector<16x128xi32> to vector<16x128xf32>
      %459 = arith.extui %455 : vector<16x128xi1> to vector<16x128xi32>
      %460 = arith.sitofp %459 : vector<16x128xi32> to vector<16x128xf32>
      %461 = arith.subf %300, %302 : vector<16x128xf32>
      %462 = math.absf %461 : vector<16x128xf32>
      %cst_156 = arith.constant 1.000000e+00 : f32
      %463 = vector.broadcast %cst_156 : f32 to vector<16x128xf32>
      %464 = arith.addf %462, %463 : vector<16x128xf32>
      %465 = math.log %464 : vector<16x128xf32>
      %466 = arith.mulf %465, %460 : vector<16x128xf32>
      %467 = arith.mulf %445, %458 : vector<16x128xf32>
      %468 = arith.addf %467, %466 : vector<16x128xf32>
      %c0_157 = arith.constant 0 : index
      %c0_158 = arith.constant 0 : index
      %c0_159 = arith.constant 0 : index
      %c0_160 = arith.constant 0 : index
      %469 = vector.load %arg9[%c0_157, %c0_158, %c0_159, %c0_160] : memref<1x1x16x128xf32, #tpu.memory_space<vmem>>, vector<1x1x16x128xf32>
      %470 = vector.shape_cast %469 : vector<1x1x16x128xf32> to vector<16x128xf32>
      %471 = vector.shape_cast %468 : vector<16x128xf32> to vector<1x1x16x128xf32>
      tpu.vector_store %arg9[%c0_157, %c0_158, %c0_159, %c0_160], %471 {strides = array<i32>} : memref<1x1x16x128xf32, #tpu.memory_space<vmem>>, vector<1x1x16x128xf32>,
    } else {
    }
    return
  }
  func.func @transform_0(%arg0: i32, %arg1: i32) -> (i32, i32, i32, i32) {
    %c0_i32 = arith.constant 0 : i32
    %c0_i32_0 = arith.constant 0 : i32
    %c0_i32_1 = arith.constant 0 : i32
    %c0_i32_2 = arith.constant 0 : i32
    return %arg0, %c0_i32, %c0_i32_0, %c0_i32_1 : i32, i32, i32, i32
  }
  func.func @transform_1(%arg0: i32, %arg1: i32) -> (i32, i32, i32, i32, i32) {
    %c0_i32 = arith.constant 0 : i32
    %c0_i32_0 = arith.constant 0 : i32
    %c0_i32_1 = arith.constant 0 : i32
    %c0_i32_2 = arith.constant 0 : i32
    return %arg0, %arg1, %c0_i32, %c0_i32_0, %c0_i32_1 : i32, i32, i32, i32, i32
  }
  func.func @transform_2(%arg0: i32, %arg1: i32) -> (i32, i32, i32, i32, i32) {
    %c0_i32 = arith.constant 0 : i32
    %c0_i32_0 = arith.constant 0 : i32
    %c0_i32_1 = arith.constant 0 : i32
    %c0_i32_2 = arith.constant 0 : i32
    return %arg0, %arg1, %c0_i32, %c0_i32_0, %c0_i32_1 : i32, i32, i32, i32, i32
  }
  func.func @transform_3(%arg0: i32, %arg1: i32) -> (i32, i32, i32, i32) {
    %c0_i32 = arith.constant 0 : i32
    %c0_i32_0 = arith.constant 0 : i32
    %c0_i32_1 = arith.constant 0 : i32
    %c0_i32_2 = arith.constant 0 : i32
    return %arg0, %c0_i32, %c0_i32_0, %c0_i32_1 : i32, i32, i32, i32
  }
  func.func @transform_4(%arg0: i32, %arg1: i32) -> (i32, i32, i32, i32) {
    %c0_i32 = arith.constant 0 : i32
    %c0_i32_0 = arith.constant 0 : i32
    %c0_i32_1 = arith.constant 0 : i32
    %c0_i32_2 = arith.constant 0 : i32
    return %arg0, %c0_i32, %c0_i32_0, %c0_i32_1 : i32, i32, i32, i32
  }
  func.func @transform_5(%arg0: i32, %arg1: i32) -> (i32, i32, i32, i32) {
    %c0_i32 = arith.constant 0 : i32
    %c0_i32_0 = arith.constant 0 : i32
    %c0_i32_1 = arith.constant 0 : i32
    %c0_i32_2 = arith.constant 0 : i32
    return %arg0, %c0_i32, %c0_i32_0, %c0_i32_1 : i32, i32, i32, i32
  }
  func.func @transform_6(%arg0: i32, %arg1: i32) -> (i32, i32, i32, i32) {
    %c0_i32 = arith.constant 0 : i32
    %c0_i32_0 = arith.constant 0 : i32
    %c0_i32_1 = arith.constant 0 : i32
    %c0_i32_2 = arith.constant 0 : i32
    return %arg0, %c0_i32, %c0_i32_0, %c0_i32_1 : i32, i32, i32, i32
  }
  func.func @transform_7(%arg0: i32, %arg1: i32) -> (i32, i32, i32, i32) {
    %c0_i32 = arith.constant 0 : i32
    %c0_i32_0 = arith.constant 0 : i32
    %c0_i32_1 = arith.constant 0 : i32
    %c0_i32_2 = arith.constant 0 : i32
    return %arg0, %c0_i32, %c0_i32_0, %c0_i32_1 : i32, i32, i32, i32
  }
}

</mosaic_0001>

<llo_original>
// kernel: tpu_custom_call.1
$region0: #{tpu_custom_call.1}
  #allocation0 [shape = 'u32[]', space=smem, size = 0x4, offset = 0x4, fixed_abs, tag = 'smem constant byte address 0x4 - core index']
  #allocation1 [shape = 'u32[144,128]{1,0:T(1,128)}', space=vmem, size = 0x12000, scoped, tag = 'internal scratch']
  #allocation2 [shape = 'f32[3,16,128]{2,1,0:T(8,128)}', space=vmem, size = 0x6000, scoped, tag = 'scratch operand']
  #allocation3 [shape = 'f32[3,16,128]{2,1,0:T(8,128)}', space=vmem, size = 0x6000, scoped, tag = 'scratch operand']
  #allocation4 [shape = 'f32[3,16,128]{2,1,0:T(8,128)}', space=vmem, size = 0x6000, scoped, tag = 'scratch operand']
  #allocation5 [shape = 'f32[16,128]{1,0:T(8,128)}', space=vmem, size = 0x2000, scoped, tag = 'scratch operand']
  #allocation6 [shape = 'f32[16,128]{1,0:T(8,128)}', space=vmem, size = 0x2000, scoped, tag = 'scratch operand']
  %s0 = inlined_call_operand.hbm [shape: f32[2,3,16,128], index: 0, kind: input, shape index: {}]
  %s1 = inlined_call_operand.hbm [shape: f32[2,2,3,16,128], index: 1, kind: input, shape index: {}]
  %s2 = inlined_call_operand.hbm [shape: f32[2,2,3,16,128], index: 2, kind: input, shape index: {}]
  %s3 = inlined_call_operand.hbm [shape: f32[2,3,16,128], index: 3, kind: input, shape index: {}]
  %s4 = inlined_call_operand.hbm [shape: f32[2,1,16,128], index: 4, kind: input, shape index: {}]
  %s5 = inlined_call_operand.hbm [shape: f32[2,1,16,128], index: 5, kind: input, shape index: {}]
  %s6 = inlined_call_operand.hbm [shape: f32[2,1,16,128], index: 6, kind: input, shape index: {}]
  %s7 = inlined_call_operand.hbm [shape: f32[2,1,16,128], index: 7, kind: output, shape index: {}]
  %s8 = sld [smem:[#allocation0]]
  $region105: #{tpu_custom_call.1} parent=0
    _
  %s10 = ssub.s32 1, %s8
  %s11 = scalar_select 0, %s10, %s8
  $region1: #{tpu_custom_call.1} parent=0
    #allocation7 [shape = 'u8[49152]{0}', space=vmem, size = 0xc000, scoped, tag = 'input window, operand 0']
    #allocation8 [shape = 's32[2]{0}', space=sflag, size = 0x8, scoped, tag = 'scoped memory for tpu_custom_call.1']
    #allocation9 [shape = 's32[2]{0}', space=sflag, size = 0x8, scoped, tag = 'scoped memory for tpu_custom_call.1']
    #allocation10 [shape = 'u8[49152]{0}', space=vmem, size = 0xc000, scoped, tag = 'input window, operand 1']
    #allocation11 [shape = 's32[2]{0}', space=sflag, size = 0x8, scoped, tag = 'scoped memory for tpu_custom_call.1']
    #allocation12 [shape = 'u8[49152]{0}', space=vmem, size = 0xc000, scoped, tag = 'input window, operand 2']
    #allocation13 [shape = 'u8[49152]{0}', space=vmem, size = 0xc000, scoped, tag = 'input window, operand 3']
    #allocation14 [shape = 's32[2]{0}', space=sflag, size = 0x8, scoped, tag = 'scoped memory for tpu_custom_call.1']
    #allocation15 [shape = 'u8[16384]{0}', space=vmem, size = 0x4000, scoped, tag = 'input window, operand 4']
    #allocation16 [shape = 'u8[16384]{0}', space=vmem, size = 0x4000, scoped, tag = 'input window, operand 5']
    #allocation17 [shape = 's32[2]{0}', space=sflag, size = 0x8, scoped, tag = 'scoped memory for tpu_custom_call.1']
    #allocation18 [shape = 'u8[16384]{0}', space=vmem, size = 0x4000, scoped, tag = 'input window, operand 6']
    #allocation19 [shape = 'u8[16384]{0}', space=vmem, size = 0x4000, scoped, tag = 'output window, operand 0']
    %12 = vsyncpa [#allocation8], 0
    %s13 = scalar_lea.sflag [#allocation8], 1
    %14 = vsyncpa %s13, 0
    %15 = vsyncpa [#allocation11], 0
    %s16 = scalar_lea.sflag [#allocation11], 1
    %17 = vsyncpa %s16, 0
    %18 = vsyncpa [#allocation14], 0
    %s19 = scalar_lea.sflag [#allocation14], 1
    %20 = vsyncpa %s19, 0
    %21 = vsyncpa [#allocation17], 0
    %s22 = scalar_lea.sflag [#allocation17], 1
    %23 = vsyncpa %s22, 0
    %24 = vsyncpa [#allocation9], 0
    %s25 = scalar_lea.sflag [#allocation9], 1
    %26 = vsyncpa %s25, 0
    loop: start=0, step=1, limit=6
    $region2: #{tpu_custom_call.1} parent=1 // loop_pre_header
      _
    $region3: #{tpu_custom_call.1} parent=1 // loop_header
      %s28 = sphi 0, %s32
      %p29 = scmp.ge.s32.totalorder %s28, 6
      %s35 = sphi 0, %s47
      %s36 = sphi 0, %s43
      %s37 = sphi 0, %s35
      %s38 = sphi 0, %s36
      %s39 = sphi 0, %s37
      %s40 = sphi 0, %s38
      %s50 = sphi 0, %s52
      %s53 = sphi 0, %s50
      %s54 = sphi 0, %s53
      %s70 = sphi 0, %s54
      %s78 = sphi 0, %s80
      %s81 = sphi 0, %s78
      %s82 = sphi 0, %s81
      %s98 = sphi 0, %s82
      %s106 = sphi 0, %s108
      %s109 = sphi 0, %s106
      %s110 = sphi 0, %s109
      %s126 = sphi 0, %s110
      %s132 = sphi 0, %s134
      %s135 = sphi 0, %s132
      %s136 = sphi 0, %s135
      %s152 = sphi 0, %s136
      %s158 = sphi 0, %s160
      %s161 = sphi 0, %s158
      %s162 = sphi 0, %s161
      %s178 = sphi 0, %s162
      %s184 = sphi 0, %s186
      %s187 = sphi 0, %s184
      %s188 = sphi 0, %s187
      %s204 = sphi 0, %s188
      %s210 = sphi 0, %s212
      %s213 = sphi 0, %s210
      %s214 = sphi 0, %s213
      %s230 = sphi 0, %s214
      %s236 = sphi 0, %s238
      %s239 = sphi 0, %s236
      %s240 = sphi 0, %s239
      %s256 = sphi 0, %s240
    $region4: #{tpu_custom_call.1} parent=1 // loop_header_branch
      %31 = sbr.rel (%p29) target = $region8
    $region5: #{tpu_custom_call.1} parent=1 // loop_body
      %s33 = ssub.s32 %s28, 1
      %s34 = ssub.s32 %s28, 2
      %s41 = sadd.s32 1, %s36
      %p42 = scmp.ge.s32.totalorder %s41, 2
      %s43 = scalar_select %p42, 0, %s41
      %s44 = sadd.s32 1, %s35
      %s45 = scalar_select %p42, %s44, %s35
      %p46 = scmp.ge.s32.totalorder %s45, 2
      %s47 = scalar_select %p46, 0, %s45
      %s48 = ssub.s32 %s35, %s47
      %p49 = scmp.eq.s32.totalorder %s48, 0
      %s51 = sadd.s32 %s50, 1
      %s52 = scalar_select %p49, %s50, %s51
      %p55 = pneg %p49
      %p56 = scmp.eq.s32.totalorder %s28, 3
      %p57 = por %p55, %p56
      %p58 = scmp.ne.s32.totalorder %s50, %s53
      %p59 = scmp.eq.s32.totalorder %s28, 0
      %p60 = por %p58, %p59
      %p61 = scmp.ne.s32.totalorder %s50, %s53
      %p62 = scmp.eq.s32.totalorder %s33, 3
      %p63 = por %p61, %p62
      %p64 = scmp.ne.s32.totalorder %s53, %s54
      %p65 = scmp.eq.s32.totalorder %s33, 0
      %p66 = por %p64, %p65
      %p67 = scmp.ne.s32.totalorder %s53, %s54
      %p68 = scmp.eq.s32.totalorder %s34, 3
      %p69 = por %p67, %p68
      %p71 = scmp.ne.s32.totalorder %s54, %s70
      %p72 = scmp.eq.s32.totalorder %s34, 0
      %p73 = por %p71, %p72
      %s74 = ssub.s32 %s35, %s47
      %s75 = ssub.s32 %s36, %s43
      %s76 = sor.u32 %s74, %s75
      %p77 = scmp.eq.s32.totalorder %s76, 0
      %s79 = sadd.s32 %s78, 1
      %s80 = scalar_select %p77, %s78, %s79
      %p83 = pneg %p77
      %p84 = scmp.eq.s32.totalorder %s28, 3
      %p85 = por %p83, %p84
      %p86 = scmp.ne.s32.totalorder %s78, %s81
      %p87 = scmp.eq.s32.totalorder %s28, 0
      %p88 = por %p86, %p87
      %p89 = scmp.ne.s32.totalorder %s78, %s81
      %p90 = scmp.eq.s32.totalorder %s33, 3
      %p91 = por %p89, %p90
      %p92 = scmp.ne.s32.totalorder %s81, %s82
      %p93 = scmp.eq.s32.totalorder %s33, 0
      %p94 = por %p92, %p93
      %p95 = scmp.ne.s32.totalorder %s81, %s82
      %p96 = scmp.eq.s32.totalorder %s34, 3
      %p97 = por %p95, %p96
      %p99 = scmp.ne.s32.totalorder %s82, %s98
      %p100 = scmp.eq.s32.totalorder %s34, 0
      %p101 = por %p99, %p100
      %s102 = ssub.s32 %s35, %s47
      %s103 = ssub.s32 %s36, %s43
      %s104 = sor.u32 %s102, %s103
      %p105 = scmp.eq.s32.totalorder %s104, 0
      %s107 = sadd.s32 %s106, 1
      %s108 = scalar_select %p105, %s106, %s107
      %p111 = pneg %p105
      %p112 = scmp.eq.s32.totalorder %s28, 3
      %p113 = por %p111, %p112
      %p114 = scmp.ne.s32.totalorder %s106, %s109
      %p115 = scmp.eq.s32.totalorder %s28, 0
      %p116 = por %p114, %p115
      %p117 = scmp.ne.s32.totalorder %s106, %s109
      %p118 = scmp.eq.s32.totalorder %s33, 3
      %p119 = por %p117, %p118
      %p120 = scmp.ne.s32.totalorder %s109, %s110
      %p121 = scmp.eq.s32.totalorder %s33, 0
      %p122 = por %p120, %p121
      %p123 = scmp.ne.s32.totalorder %s109, %s110
      %p124 = scmp.eq.s32.totalorder %s34, 3
      %p125 = por %p123, %p124
      %p127 = scmp.ne.s32.totalorder %s110, %s126
      %p128 = scmp.eq.s32.totalorder %s34, 0
      %p129 = por %p127, %p128
      %s130 = ssub.s32 %s35, %s47
      %p131 = scmp.eq.s32.totalorder %s130, 0
      %s133 = sadd.s32 %s132, 1
      %s134 = scalar_select %p131, %s132, %s133
      %p137 = pneg %p131
      %p138 = scmp.eq.s32.totalorder %s28, 3
      %p139 = por %p137, %p138
      %p140 = scmp.ne.s32.totalorder %s132, %s135
      %p141 = scmp.eq.s32.totalorder %s28, 0
      %p142 = por %p140, %p141
      %p143 = scmp.ne.s32.totalorder %s132, %s135
      %p144 = scmp.eq.s32.totalorder %s33, 3
      %p145 = por %p143, %p144
      %p146 = scmp.ne.s32.totalorder %s135, %s136
      %p147 = scmp.eq.s32.totalorder %s33, 0
      %p148 = por %p146, %p147
      %p149 = scmp.ne.s32.totalorder %s135, %s136
      %p150 = scmp.eq.s32.totalorder %s34, 3
      %p151 = por %p149, %p150
      %p153 = scmp.ne.s32.totalorder %s136, %s152
      %p154 = scmp.eq.s32.totalorder %s34, 0
      %p155 = por %p153, %p154
      %s156 = ssub.s32 %s35, %s47
      %p157 = scmp.eq.s32.totalorder %s156, 0
      %s159 = sadd.s32 %s158, 1
      %s160 = scalar_select %p157, %s158, %s159
      %p163 = pneg %p157
      %p164 = scmp.eq.s32.totalorder %s28, 3
      %p165 = por %p163, %p164
      %p166 = scmp.ne.s32.totalorder %s158, %s161
      %p167 = scmp.eq.s32.totalorder %s28, 0
      %p168 = por %p166, %p167
      %p169 = scmp.ne.s32.totalorder %s158, %s161
      %p170 = scmp.eq.s32.totalorder %s33, 3
      %p171 = por %p169, %p170
      %p172 = scmp.ne.s32.totalorder %s161, %s162
      %p173 = scmp.eq.s32.totalorder %s33, 0
      %p174 = por %p172, %p173
      %p175 = scmp.ne.s32.totalorder %s161, %s162
      %p176 = scmp.eq.s32.totalorder %s34, 3
      %p177 = por %p175, %p176
      %p179 = scmp.ne.s32.totalorder %s162, %s178
      %p180 = scmp.eq.s32.totalorder %s34, 0
      %p181 = por %p179, %p180
      %s182 = ssub.s32 %s35, %s47
      %p183 = scmp.eq.s32.totalorder %s182, 0
      %s185 = sadd.s32 %s184, 1
      %s186 = scalar_select %p183, %s184, %s185
      %p189 = pneg %p183
      %p190 = scmp.eq.s32.totalorder %s28, 3
      %p191 = por %p189, %p190
      %p192 = scmp.ne.s32.totalorder %s184, %s187
      %p193 = scmp.eq.s32.totalorder %s28, 0
      %p194 = por %p192, %p193
      %p195 = scmp.ne.s32.totalorder %s184, %s187
      %p196 = scmp.eq.s32.totalorder %s33, 3
      %p197 = por %p195, %p196
      %p198 = scmp.ne.s32.totalorder %s187, %s188
      %p199 = scmp.eq.s32.totalorder %s33, 0
      %p200 = por %p198, %p199
      %p201 = scmp.ne.s32.totalorder %s187, %s188
      %p202 = scmp.eq.s32.totalorder %s34, 3
      %p203 = por %p201, %p202
      %p205 = scmp.ne.s32.totalorder %s188, %s204
      %p206 = scmp.eq.s32.totalorder %s34, 0
      %p207 = por %p205, %p206
      %s208 = ssub.s32 %s35, %s47
      %p209 = scmp.eq.s32.totalorder %s208, 0
      %s211 = sadd.s32 %s210, 1
      %s212 = scalar_select %p209, %s210, %s211
      %p215 = pneg %p209
      %p216 = scmp.eq.s32.totalorder %s28, 3
      %p217 = por %p215, %p216
      %p218 = scmp.ne.s32.totalorder %s210, %s213
      %p219 = scmp.eq.s32.totalorder %s28, 0
      %p220 = por %p218, %p219
      %p221 = scmp.ne.s32.totalorder %s210, %s213
      %p222 = scmp.eq.s32.totalorder %s33, 3
      %p223 = por %p221, %p222
      %p224 = scmp.ne.s32.totalorder %s213, %s214
      %p225 = scmp.eq.s32.totalorder %s33, 0
      %p226 = por %p224, %p225
      %p227 = scmp.ne.s32.totalorder %s213, %s214
      %p228 = scmp.eq.s32.totalorder %s34, 3
      %p229 = por %p227, %p228
      %p231 = scmp.ne.s32.totalorder %s214, %s230
      %p232 = scmp.eq.s32.totalorder %s34, 0
      %p233 = por %p231, %p232
      %s234 = ssub.s32 %s35, %s47
      %p235 = scmp.eq.s32.totalorder %s234, 0
      %s237 = sadd.s32 %s236, 1
      %s238 = scalar_select %p235, %s236, %s237
      %p241 = pneg %p235
      %p242 = scmp.eq.s32.totalorder %s28, 3
      %p243 = por %p241, %p242
      %p244 = scmp.ne.s32.totalorder %s236, %s239
      %p245 = scmp.eq.s32.totalorder %s28, 0
      %p246 = por %p244, %p245
      %p247 = scmp.ne.s32.totalorder %s236, %s239
      %p248 = scmp.eq.s32.totalorder %s33, 3
      %p249 = por %p247, %p248
      %p250 = scmp.ne.s32.totalorder %s239, %s240
      %p251 = scmp.eq.s32.totalorder %s33, 0
      %p252 = por %p250, %p251
      %p253 = scmp.ne.s32.totalorder %s239, %s240
      %p254 = scmp.eq.s32.totalorder %s34, 3
      %p255 = por %p253, %p254
      %p257 = scmp.ne.s32.totalorder %s240, %s256
      %p258 = scmp.eq.s32.totalorder %s34, 0
      %p259 = por %p257, %p258
      %p260 = scmp.le.s32.totalorder 1, %s28
      %p261 = scmp.lt.s32.totalorder %s28, 5
      %p262 = pnand %p260, %p261
      %p263 = pneg %p262
      // Predicated region
      $region9: #{tpu_custom_call.1} parent=5 // pred_check
        _
      $region10: #{tpu_custom_call.1} parent=5 // pred_check_branch
        %265 = sbr.rel (%p262) target = $region12
      $region11: #{tpu_custom_call.1} parent=5 // pred_region
        %s266 = ssub.s32 %s28, 1
      $region12: #{tpu_custom_call.1} parent=5 // pred_fallthru
        _
      %p267 = scmp.lt.s32.totalorder %s28, 4
      // Predicated region
      $region13: #{tpu_custom_call.1} parent=5 // pred_check
        %p268 = pneg %p267
      $region14: #{tpu_custom_call.1} parent=5 // pred_check_branch
        %270 = sbr.rel (%p268) target = $region16
      $region15: #{tpu_custom_call.1} parent=5 // pred_region
        // Predicated region
        $region17: #{tpu_custom_call.1} parent=15 // pred_check
          %p271 = pneg %p60
        $region18: #{tpu_custom_call.1} parent=15 // pred_check_branch
          %273 = sbr.rel (%p271) target = $region20
        $region19: #{tpu_custom_call.1} parent=15 // pred_region
          %s274 = sand.u32 %s50, 1
          %s275 = scalar_lea.sflag [#allocation8], %s274
          %s276 = sand.u32 %s50, 1
          %s277 = smul.addr %s276, 48
          %s278 = scalar_lea.vmem [#allocation7], %s277
          %s280 = ssub.s32 768, 768
          %281 = vsyncadd %s275, %s280
          %s282 = smul.addr %s35, 6
          %s283 = smul.addr %s282, 128
          %s284 = scalar_lea.hbm %s0, %s283
          %s285 = sshll.u32 %s278, 4
          %s286 = int_to_ptr.vmem [resolvable:$true] %s285
          %291 = dma.hbm_to_vmem [thread:$0]  %s284, 768, %s286, %s275, 128, 128, 8
        $region20: #{tpu_custom_call.1} parent=15 // pred_fallthru
          _
        // Predicated region
        $region21: #{tpu_custom_call.1} parent=15 // pred_check
          %p292 = pneg %p88
        $region22: #{tpu_custom_call.1} parent=15 // pred_check_branch
          %294 = sbr.rel (%p292) target = $region24
        $region23: #{tpu_custom_call.1} parent=15 // pred_region
          %s295 = sand.u32 %s28, 1
          %s296 = scalar_lea.sflag [#allocation11], %s295
          %s297 = sand.u32 %s78, 1
          %s298 = smul.addr %s297, 48
          %s299 = scalar_lea.vmem [#allocation10], %s298
          %s301 = ssub.s32 768, 768
          %302 = vsyncadd %s296, %s301
          %s303 = smul.addr %s36, 6
          %s304 = smul.addr %s35, 12
          %s305 = sadd.s32 %s303, %s304
          %s306 = smul.addr %s305, 128
          %s307 = scalar_lea.hbm %s1, %s306
          %s308 = sshll.u32 %s299, 4
          %s309 = int_to_ptr.vmem [resolvable:$true] %s308
          %314 = dma.hbm_to_vmem [thread:$0]  %s307, 768, %s309, %s296, 128, 128, 8
        $region24: #{tpu_custom_call.1} parent=15 // pred_fallthru
          _
        // Predicated region
        $region25: #{tpu_custom_call.1} parent=15 // pred_check
          %p315 = pneg %p116
        $region26: #{tpu_custom_call.1} parent=15 // pred_check_branch
          %317 = sbr.rel (%p315) target = $region28
        $region27: #{tpu_custom_call.1} parent=15 // pred_region
          %s318 = sand.u32 %s28, 1
          %s319 = scalar_lea.sflag [#allocation11], %s318
          %s320 = sand.u32 %s106, 1
          %s321 = smul.addr %s320, 48
          %s322 = scalar_lea.vmem [#allocation12], %s321
          %s324 = ssub.s32 768, 768
          %325 = vsyncadd %s319, %s324
          %s326 = smul.addr %s36, 6
          %s327 = smul.addr %s35, 12
          %s328 = sadd.s32 %s326, %s327
          %s329 = smul.addr %s328, 128
          %s330 = scalar_lea.hbm %s2, %s329
          %s331 = sshll.u32 %s322, 4
          %s332 = int_to_ptr.vmem [resolvable:$true] %s331
          %337 = dma.hbm_to_vmem [thread:$0]  %s330, 768, %s332, %s319, 128, 128, 8
        $region28: #{tpu_custom_call.1} parent=15 // pred_fallthru
          _
        // Predicated region
        $region29: #{tpu_custom_call.1} parent=15 // pred_check
          %p338 = pneg %p142
        $region30: #{tpu_custom_call.1} parent=15 // pred_check_branch
          %340 = sbr.rel (%p338) target = $region32
        $region31: #{tpu_custom_call.1} parent=15 // pred_region
          %s341 = sand.u32 %s28, 1
          %s342 = scalar_lea.sflag [#allocation14], %s341
          %s343 = sand.u32 %s132, 1
          %s344 = smul.addr %s343, 48
          %s345 = scalar_lea.vmem [#allocation13], %s344
          %s347 = ssub.s32 768, 768
          %348 = vsyncadd %s342, %s347
          %s349 = smul.addr %s35, 6
          %s350 = smul.addr %s349, 128
          %s351 = scalar_lea.hbm %s3, %s350
          %s352 = sshll.u32 %s345, 4
          %s353 = int_to_ptr.vmem [resolvable:$true] %s352
          %358 = dma.hbm_to_vmem [thread:$0]  %s351, 768, %s353, %s342, 128, 128, 8
        $region32: #{tpu_custom_call.1} parent=15 // pred_fallthru
          _
        // Predicated region
        $region33: #{tpu_custom_call.1} parent=15 // pred_check
          %p359 = pneg %p168
        $region34: #{tpu_custom_call.1} parent=15 // pred_check_branch
          %361 = sbr.rel (%p359) target = $region36
        $region35: #{tpu_custom_call.1} parent=15 // pred_region
          %s362 = sand.u32 %s28, 1
          %s363 = scalar_lea.sflag [#allocation14], %s362
          %s364 = sand.u32 %s158, 1
          %s365 = smul.addr %s364, 16
          %s366 = scalar_lea.vmem [#allocation15], %s365
          %s368 = ssub.s32 256, 256
          %369 = vsyncadd %s363, %s368
          %s370 = smul.addr %s35, 2
          %s371 = smul.addr %s370, 128
          %s372 = scalar_lea.hbm %s4, %s371
          %s373 = sshll.u32 %s366, 4
          %s374 = int_to_ptr.vmem [resolvable:$true] %s373
          %379 = dma.hbm_to_vmem [thread:$0]  %s372, 256, %s374, %s363, 128, 128, 8
        $region36: #{tpu_custom_call.1} parent=15 // pred_fallthru
          _
        // Predicated region
        $region37: #{tpu_custom_call.1} parent=15 // pred_check
          %p380 = pneg %p194
        $region38: #{tpu_custom_call.1} parent=15 // pred_check_branch
          %382 = sbr.rel (%p380) target = $region40
        $region39: #{tpu_custom_call.1} parent=15 // pred_region
          %s383 = sand.u32 %s28, 1
          %s384 = scalar_lea.sflag [#allocation17], %s383
          %s385 = sand.u32 %s184, 1
          %s386 = smul.addr %s385, 16
          %s387 = scalar_lea.vmem [#allocation16], %s386
          %s389 = ssub.s32 256, 256
          %390 = vsyncadd %s384, %s389
          %s391 = smul.addr %s35, 2
          %s392 = smul.addr %s391, 128
          %s393 = scalar_lea.hbm %s5, %s392
          %s394 = sshll.u32 %s387, 4
          %s395 = int_to_ptr.vmem [resolvable:$true] %s394
          %400 = dma.hbm_to_vmem [thread:$0]  %s393, 256, %s395, %s384, 128, 128, 8
        $region40: #{tpu_custom_call.1} parent=15 // pred_fallthru
          _
        // Predicated region
        $region41: #{tpu_custom_call.1} parent=15 // pred_check
          %p401 = pneg %p220
        $region42: #{tpu_custom_call.1} parent=15 // pred_check_branch
          %403 = sbr.rel (%p401) target = $region44
        $region43: #{tpu_custom_call.1} parent=15 // pred_region
          %s404 = sand.u32 %s28, 1
          %s405 = scalar_lea.sflag [#allocation17], %s404
          %s406 = sand.u32 %s210, 1
          %s407 = smul.addr %s406, 16
          %s408 = scalar_lea.vmem [#allocation18], %s407
          %s410 = ssub.s32 256, 256
          %411 = vsyncadd %s405, %s410
          %s412 = smul.addr %s35, 2
          %s413 = smul.addr %s412, 128
          %s414 = scalar_lea.hbm %s6, %s413
          %s415 = sshll.u32 %s408, 4
          %s416 = int_to_ptr.vmem [resolvable:$true] %s415
          %421 = dma.hbm_to_vmem [thread:$0]  %s414, 256, %s416, %s405, 128, 128, 8
        $region44: #{tpu_custom_call.1} parent=15 // pred_fallthru
          _
      $region16: #{tpu_custom_call.1} parent=5 // pred_fallthru
        _
      %p422 = scmp.le.s32.totalorder 1, %s28
      %p423 = scmp.lt.s32.totalorder %s28, 5
      %p424 = pnand %p422, %p423
      %p425 = pneg %p424
      // Predicated region
      $region45: #{tpu_custom_call.1} parent=5 // pred_check
        _
      $region46: #{tpu_custom_call.1} parent=5 // pred_check_branch
        %427 = sbr.rel (%p424) target = $region48
      $region47: #{tpu_custom_call.1} parent=5 // pred_region
        %s428 = ssub.s32 %s28, 1
        %s429 = sand.u32 %s53, 1
        %s430 = scalar_lea.sflag [#allocation8], %s429
        %s431 = sand.u32 %s53, 1
        %s432 = smul.addr %s431, 48
        %s433 = scalar_lea.vmem [#allocation7], %s432
        // Predicated region
        $region49: #{tpu_custom_call.1} parent=47 // pred_check
          %p434 = pneg %p66
        $region50: #{tpu_custom_call.1} parent=47 // pred_check_branch
          %436 = sbr.rel (%p434) target = $region52
        $region51: #{tpu_custom_call.1} parent=47 // pred_region
          %437 = dma.done %s430, 768
        $region52: #{tpu_custom_call.1} parent=47 // pred_fallthru
          _
        %s438 = sand.u32 %s33, 1
        %s439 = scalar_lea.sflag [#allocation11], %s438
        %s440 = sand.u32 %s81, 1
        %s441 = smul.addr %s440, 48
        %s442 = scalar_lea.vmem [#allocation10], %s441
        // Predicated region
        $region53: #{tpu_custom_call.1} parent=47 // pred_check
          %p443 = pneg %p94
        $region54: #{tpu_custom_call.1} parent=47 // pred_check_branch
          %445 = sbr.rel (%p443) target = $region56
        $region55: #{tpu_custom_call.1} parent=47 // pred_region
          %446 = dma.done %s439, 768
        $region56: #{tpu_custom_call.1} parent=47 // pred_fallthru
          _
        %s447 = sand.u32 %s33, 1
        %s448 = scalar_lea.sflag [#allocation11], %s447
        %s449 = sand.u32 %s109, 1
        %s450 = smul.addr %s449, 48
        %s451 = scalar_lea.vmem [#allocation12], %s450
        // Predicated region
        $region57: #{tpu_custom_call.1} parent=47 // pred_check
          %p452 = pneg %p122
        $region58: #{tpu_custom_call.1} parent=47 // pred_check_branch
          %454 = sbr.rel (%p452) target = $region60
        $region59: #{tpu_custom_call.1} parent=47 // pred_region
          %455 = dma.done %s448, 768
        $region60: #{tpu_custom_call.1} parent=47 // pred_fallthru
          _
        %s456 = sand.u32 %s33, 1
        %s457 = scalar_lea.sflag [#allocation14], %s456
        %s458 = sand.u32 %s135, 1
        %s459 = smul.addr %s458, 48
        %s460 = scalar_lea.vmem [#allocation13], %s459
        // Predicated region
        $region61: #{tpu_custom_call.1} parent=47 // pred_check
          %p461 = pneg %p148
        $region62: #{tpu_custom_call.1} parent=47 // pred_check_branch
          %463 = sbr.rel (%p461) target = $region64
        $region63: #{tpu_custom_call.1} parent=47 // pred_region
          %464 = dma.done %s457, 768
        $region64: #{tpu_custom_call.1} parent=47 // pred_fallthru
          _
        %s465 = sand.u32 %s33, 1
        %s466 = scalar_lea.sflag [#allocation14], %s465
        %s467 = sand.u32 %s161, 1
        %s468 = smul.addr %s467, 16
        %s469 = scalar_lea.vmem [#allocation15], %s468
        // Predicated region
        $region65: #{tpu_custom_call.1} parent=47 // pred_check
          %p470 = pneg %p174
        $region66: #{tpu_custom_call.1} parent=47 // pred_check_branch
          %472 = sbr.rel (%p470) target = $region68
        $region67: #{tpu_custom_call.1} parent=47 // pred_region
          %473 = dma.done %s466, 256
        $region68: #{tpu_custom_call.1} parent=47 // pred_fallthru
          _
        %s474 = sand.u32 %s33, 1
        %s475 = scalar_lea.sflag [#allocation17], %s474
        %s476 = sand.u32 %s187, 1
        %s477 = smul.addr %s476, 16
        %s478 = scalar_lea.vmem [#allocation16], %s477
        // Predicated region
        $region69: #{tpu_custom_call.1} parent=47 // pred_check
          %p479 = pneg %p200
        $region70: #{tpu_custom_call.1} parent=47 // pred_check_branch
          %481 = sbr.rel (%p479) target = $region72
        $region71: #{tpu_custom_call.1} parent=47 // pred_region
          %482 = dma.done %s475, 256
        $region72: #{tpu_custom_call.1} parent=47 // pred_fallthru
          _
        %s483 = sand.u32 %s33, 1
        %s484 = scalar_lea.sflag [#allocation17], %s483
        %s485 = sand.u32 %s213, 1
        %s486 = smul.addr %s485, 16
        %s487 = scalar_lea.vmem [#allocation18], %s486
        // Predicated region
        $region73: #{tpu_custom_call.1} parent=47 // pred_check
          %p488 = pneg %p226
        $region74: #{tpu_custom_call.1} parent=47 // pred_check_branch
          %490 = sbr.rel (%p488) target = $region76
        $region75: #{tpu_custom_call.1} parent=47 // pred_region
          %491 = dma.done %s484, 256
        $region76: #{tpu_custom_call.1} parent=47 // pred_fallthru
          _
        %s492 = sand.u32 %s53, 1
        %s493 = scalar_lea.sflag [#allocation8], %s492
        %s494 = sand.u32 %s53, 1
        %s495 = smul.addr %s494, 48
        %s496 = scalar_lea.vmem [#allocation7], %s495
        %p497 = pneg %p66
        %p498 = pneg %p63
        %s499 = sand.u32 %s33, 1
        %s500 = scalar_lea.sflag [#allocation11], %s499
        %s501 = sand.u32 %s81, 1
        %s502 = smul.addr %s501, 48
        %s503 = scalar_lea.vmem [#allocation10], %s502
        %p504 = pneg %p94
        %p505 = pneg %p91
        %s506 = sand.u32 %s33, 1
        %s507 = scalar_lea.sflag [#allocation11], %s506
        %s508 = sand.u32 %s109, 1
        %s509 = smul.addr %s508, 48
        %s510 = scalar_lea.vmem [#allocation12], %s509
        %p511 = pneg %p122
        %p512 = pneg %p119
        %s513 = sand.u32 %s33, 1
        %s514 = scalar_lea.sflag [#allocation14], %s513
        %s515 = sand.u32 %s135, 1
        %s516 = smul.addr %s515, 48
        %s517 = scalar_lea.vmem [#allocation13], %s516
        %p518 = pneg %p148
        %p519 = pneg %p145
        %s520 = sand.u32 %s33, 1
        %s521 = scalar_lea.sflag [#allocation14], %s520
        %s522 = sand.u32 %s161, 1
        %s523 = smul.addr %s522, 16
        %s524 = scalar_lea.vmem [#allocation15], %s523
        %p525 = pneg %p174
        %p526 = pneg %p171
        %s527 = sand.u32 %s33, 1
        %s528 = scalar_lea.sflag [#allocation17], %s527
        %s529 = sand.u32 %s187, 1
        %s530 = smul.addr %s529, 16
        %s531 = scalar_lea.vmem [#allocation16], %s530
        %p532 = pneg %p200
        %p533 = pneg %p197
        %s534 = sand.u32 %s33, 1
        %s535 = scalar_lea.sflag [#allocation17], %s534
        %s536 = sand.u32 %s213, 1
        %s537 = smul.addr %s536, 16
        %s538 = scalar_lea.vmem [#allocation18], %s537
        %p539 = pneg %p226
        %p540 = pneg %p223
        %p541 = pneg %p252
        %p542 = pneg %p249
        %s543 = sand.u32 %s239, 1
        %s544 = scalar_lea.sflag [#allocation9], %s543
        %s545 = sand.u32 %s239, 1
        %s546 = smul.addr %s545, 16
        %s547 = scalar_lea.vmem [#allocation19], %s546
        %v548 = vlaneseq
        %v549 = vand.u32 %v548, 127
        %v550 = vlaneseq
        %v551 = vshrl.u32 %v550, 7
        %v552 = vadd.s32 %v551, 8
        %vm553 = vcmp.eq.s32.totalorder %v549, 0
        %vm554 = vcmp.eq.s32.totalorder %v549, 127
        %vm555 = vcmp.eq.s32.totalorder %v551, 0
        %vm556 = vcmp.eq.s32.totalorder %v552, 0
        %vm557 = vcmp.eq.s32.totalorder %v551, 15
        %vm558 = vcmp.eq.s32.totalorder %v552, 15
        %v559 = vld [vmem:[%s433] sm:$0xff]
        %v560 = vld [vmem:[%s433 + $0x8] sm:$0xff]
        %v561 = vld [vmem:[%s433 + $0x10] sm:$0xff]
        %v562 = vld [vmem:[%s433 + $0x18] sm:$0xff]
        %v563 = vld [vmem:[%s433 + $0x20] sm:$0xff]
        %v564 = vld [vmem:[%s433 + $0x28] sm:$0xff]
        %p565 = scmp.eq.s32.totalorder %s38, 0
        // Predicated region
        $region77: #{tpu_custom_call.1} parent=47 // pred_check
          %p566 = pneg %p565
        $region78: #{tpu_custom_call.1} parent=47 // pred_check_branch
          %568 = sbr.rel (%p566) target = $region80
        $region79: #{tpu_custom_call.1} parent=47 // pred_region
          %569 = vrot.lane.b32.xlu0 %v559, 1
          %v570 = vpop.permute.xlu0 %569
          %571 = vrot.lane.b32.xlu0 %v560, 1
          %v572 = vpop.permute.xlu0 %571
          %573 = vrot.lane.b32.xlu0 %v561, 1
          %v574 = vpop.permute.xlu0 %573
          %575 = vrot.lane.b32.xlu0 %v562, 1
          %v576 = vpop.permute.xlu0 %575
          %577 = vrot.lane.b32.xlu0 %v563, 1
          %v578 = vpop.permute.xlu0 %577
          %579 = vrot.lane.b32.xlu0 %v564, 1
          %v580 = vpop.permute.xlu0 %579
          %581 = vrot.lane.b32.xlu0 %v559, 127
          %v582 = vpop.permute.xlu0 %581
          %583 = vrot.lane.b32.xlu0 %v560, 127
          %v584 = vpop.permute.xlu0 %583
          %585 = vrot.lane.b32.xlu0 %v561, 127
          %v586 = vpop.permute.xlu0 %585
          %587 = vrot.lane.b32.xlu0 %v562, 127
          %v588 = vpop.permute.xlu0 %587
          %589 = vrot.lane.b32.xlu0 %v563, 127
          %v590 = vpop.permute.xlu0 %589
          %591 = vrot.lane.b32.xlu0 %v564, 127
          %v592 = vpop.permute.xlu0 %591
          %v593 = vadd.f32 %v559, %v570
          %v594 = vadd.f32 %v560, %v572
          %v595 = vadd.f32 %v561, %v574
          %v596 = vadd.f32 %v562, %v576
          %v597 = vadd.f32 %v563, %v578
          %v598 = vadd.f32 %v564, %v580
          %v599 = vadd.f32 %v593, %v582
          %v600 = vadd.f32 %v594, %v584
          %v601 = vadd.f32 %v595, %v586
          %v602 = vadd.f32 %v596, %v588
          %v603 = vadd.f32 %v597, %v590
          %v604 = vadd.f32 %v598, %v592
          %v605 = vsub.f32 %v582, %v570
          %v606 = vsub.f32 %v584, %v572
          %v607 = vsub.f32 %v586, %v574
          %v608 = vsub.f32 %v588, %v576
          %v609 = vsub.f32 %v590, %v578
          %v610 = vsub.f32 %v592, %v580
          %v611 = vsub.f32 %v570, %v582
          %v612 = vsub.f32 %v572, %v584
          %v613 = vsub.f32 %v574, %v586
          %v614 = vsub.f32 %v576, %v588
          %v615 = vsub.f32 %v578, %v590
          %v616 = vsub.f32 %v580, %v592
          %v617 = vsel %vm554, 1, 0
          %vm618 = vcmp.eq.s32.totalorder %v617, 1
          %v619 = vsel %vm618, %v611, 0.0
          %v620 = vsel %vm618, %v612, 0.0
          %v621 = vsel %vm618, %v613, 0.0
          %v622 = vsel %vm618, %v614, 0.0
          %v623 = vsel %vm618, %v615, 0.0
          %v624 = vsel %vm618, %v616, 0.0
          %v625 = vsel %vm553, 1, 0
          %vm626 = vcmp.eq.s32.totalorder %v625, 1
          %v627 = vsel %vm626, %v605, %v619
          %v628 = vsel %vm626, %v606, %v620
          %v629 = vsel %vm626, %v607, %v621
          %v630 = vsel %vm626, %v608, %v622
          %v631 = vsel %vm626, %v609, %v623
          %v632 = vsel %vm626, %v610, %v624
          %v633 = vadd.f32 %v599, %v627
          %v634 = vadd.f32 %v600, %v628
          %v635 = vadd.f32 %v601, %v629
          %v636 = vadd.f32 %v602, %v630
          %v637 = vadd.f32 %v603, %v631
          %v638 = vadd.f32 %v604, %v632
          %v639 = vrot.slane %v633, 7
          %v640 = vrot.slane %v635, 7
          %v641 = vrot.slane %v637, 7
          %v642 = vrot.slane %v634, 7
          %v643 = vrot.slane %v636, 7
          %v644 = vrot.slane %v638, 7
          %vm645 = vcmp.lt.s32.totalorder %v551, 1
          %v646 = vsel %vm645, %v639, %v642
          %v647 = vsel %vm645, %v640, %v643
          %v648 = vsel %vm645, %v641, %v644
          %v649 = vsel %vm645, %v642, %v639
          %v650 = vsel %vm645, %v643, %v640
          %v651 = vsel %vm645, %v644, %v641
          %v652 = vrot.slane %v633, 1
          %v653 = vrot.slane %v635, 1
          %v654 = vrot.slane %v637, 1
          %v655 = vrot.slane %v634, 1
          %v656 = vrot.slane %v636, 1
          %v657 = vrot.slane %v638, 1
          %vm658 = vcmp.lt.s32.totalorder %v551, 7
          %v659 = vsel %vm658, %v652, %v655
          %v660 = vsel %vm658, %v653, %v656
          %v661 = vsel %vm658, %v654, %v657
          %v662 = vsel %vm658, %v655, %v652
          %v663 = vsel %vm658, %v656, %v653
          %v664 = vsel %vm658, %v657, %v654
          %v665 = vadd.f32 %v633, %v649
          %v666 = vadd.f32 %v634, %v646
          %v667 = vadd.f32 %v635, %v650
          %v668 = vadd.f32 %v636, %v647
          %v669 = vadd.f32 %v637, %v651
          %v670 = vadd.f32 %v638, %v648
          %v671 = vadd.f32 %v665, %v659
          %v672 = vadd.f32 %v666, %v662
          %v673 = vadd.f32 %v667, %v660
          %v674 = vadd.f32 %v668, %v663
          %v675 = vadd.f32 %v669, %v661
          %v676 = vadd.f32 %v670, %v664
          %v677 = vsub.f32 %v659, %v649
          %v678 = vsub.f32 %v662, %v646
          %v679 = vsub.f32 %v660, %v650
          %v680 = vsub.f32 %v663, %v647
          %v681 = vsub.f32 %v661, %v651
          %v682 = vsub.f32 %v664, %v648
          %v683 = vsub.f32 %v649, %v659
          %v684 = vsub.f32 %v646, %v662
          %v685 = vsub.f32 %v650, %v660
          %v686 = vsub.f32 %v647, %v663
          %v687 = vsub.f32 %v651, %v661
          %v688 = vsub.f32 %v648, %v664
          %v689 = vsel %vm557, 1, 0
          %v690 = vsel %vm558, 1, 0
          %vm691 = vcmp.eq.s32.totalorder %v689, 1
          %vm692 = vcmp.eq.s32.totalorder %v690, 1
          %v693 = vsel %vm691, %v683, 0.0
          %v694 = vsel %vm692, %v684, 0.0
          %v695 = vsel %vm691, %v685, 0.0
          %v696 = vsel %vm692, %v686, 0.0
          %v697 = vsel %vm691, %v687, 0.0
          %v698 = vsel %vm692, %v688, 0.0
          %v699 = vsel %vm555, 1, 0
          %v700 = vsel %vm556, 1, 0
          %vm701 = vcmp.eq.s32.totalorder %v699, 1
          %vm702 = vcmp.eq.s32.totalorder %v700, 1
          %v703 = vsel %vm701, %v677, %v693
          %v704 = vsel %vm702, %v678, %v694
          %v705 = vsel %vm701, %v679, %v695
          %v706 = vsel %vm702, %v680, %v696
          %v707 = vsel %vm701, %v681, %v697
          %v708 = vsel %vm702, %v682, %v698
          %v709 = vadd.f32 %v671, %v703
          %v710 = vadd.f32 %v672, %v704
          %v711 = vadd.f32 %v673, %v705
          %v712 = vadd.f32 %v674, %v706
          %v713 = vadd.f32 %v675, %v707
          %v714 = vadd.f32 %v676, %v708
          %v715 = vmul.f32 %v709, 0.11111111
          %v716 = vmul.f32 %v710, 0.11111111
          %v717 = vmul.f32 %v711, 0.11111111
          %v718 = vmul.f32 %v712, 0.11111111
          %v719 = vmul.f32 %v713, 0.11111111
          %v720 = vmul.f32 %v714, 0.11111111
          %v721 = vmul.f32 %v715, %v715
          %v722 = vmul.f32 %v716, %v716
          %v723 = vmul.f32 %v717, %v717
          %v724 = vmul.f32 %v718, %v718
          %v725 = vmul.f32 %v719, %v719
          %v726 = vmul.f32 %v720, %v720
          %v727 = vadd.f32 %v715, %v715
          %v728 = vadd.f32 %v716, %v716
          %v729 = vadd.f32 %v717, %v717
          %v730 = vadd.f32 %v718, %v718
          %v731 = vadd.f32 %v719, %v719
          %v732 = vadd.f32 %v720, %v720
          %733 = vst [vmem:[#allocation2] sm:$0xff] %v727
          %734 = vst [vmem:[#allocation2 + $0x8] sm:$0xff] %v728
          %735 = vst [vmem:[#allocation2 + $0x10] sm:$0xff] %v729
          %736 = vst [vmem:[#allocation2 + $0x18] sm:$0xff] %v730
          %737 = vst [vmem:[#allocation2 + $0x20] sm:$0xff] %v731
          %738 = vst [vmem:[#allocation2 + $0x28] sm:$0xff] %v732
          %v739 = vadd.f32 %v721, 0.0001
          %v740 = vadd.f32 %v722, 0.0001
          %v741 = vadd.f32 %v723, 0.0001
          %v742 = vadd.f32 %v724, 0.0001
          %v743 = vadd.f32 %v725, 0.0001
          %v744 = vadd.f32 %v726, 0.0001
          %745 = vst [vmem:[#allocation3] sm:$0xff] %v739
          %746 = vst [vmem:[#allocation3 + $0x8] sm:$0xff] %v740
          %747 = vst [vmem:[#allocation3 + $0x10] sm:$0xff] %v741
          %748 = vst [vmem:[#allocation3 + $0x18] sm:$0xff] %v742
          %749 = vst [vmem:[#allocation3 + $0x20] sm:$0xff] %v743
          %750 = vst [vmem:[#allocation3 + $0x28] sm:$0xff] %v744
          %v751 = vmul.f32 %v559, %v559
          %v752 = vmul.f32 %v560, %v560
          %v753 = vmul.f32 %v561, %v561
          %v754 = vmul.f32 %v562, %v562
          %v755 = vmul.f32 %v563, %v563
          %v756 = vmul.f32 %v564, %v564
          %757 = vrot.lane.b32.xlu0 %v751, 1
          %v758 = vpop.permute.xlu0 %757
          %759 = vrot.lane.b32.xlu0 %v752, 1
          %v760 = vpop.permute.xlu0 %759
          %761 = vrot.lane.b32.xlu0 %v753, 1
          %v762 = vpop.permute.xlu0 %761
          %763 = vrot.lane.b32.xlu0 %v754, 1
          %v764 = vpop.permute.xlu0 %763
          %765 = vrot.lane.b32.xlu0 %v755, 1
          %v766 = vpop.permute.xlu0 %765
          %767 = vrot.lane.b32.xlu0 %v756, 1
          %v768 = vpop.permute.xlu0 %767
          %769 = vrot.lane.b32.xlu0 %v751, 127
          %v770 = vpop.permute.xlu0 %769
          %771 = vrot.lane.b32.xlu0 %v752, 127
          %v772 = vpop.permute.xlu0 %771
          %773 = vrot.lane.b32.xlu0 %v753, 127
          %v774 = vpop.permute.xlu0 %773
          %775 = vrot.lane.b32.xlu0 %v754, 127
          %v776 = vpop.permute.xlu0 %775
          %777 = vrot.lane.b32.xlu0 %v755, 127
          %v778 = vpop.permute.xlu0 %777
          %779 = vrot.lane.b32.xlu0 %v756, 127
          %v780 = vpop.permute.xlu0 %779
          %v781 = vadd.f32 %v751, %v758
          %v782 = vadd.f32 %v752, %v760
          %v783 = vadd.f32 %v753, %v762
          %v784 = vadd.f32 %v754, %v764
          %v785 = vadd.f32 %v755, %v766
          %v786 = vadd.f32 %v756, %v768
          %v787 = vadd.f32 %v781, %v770
          %v788 = vadd.f32 %v782, %v772
          %v789 = vadd.f32 %v783, %v774
          %v790 = vadd.f32 %v784, %v776
          %v791 = vadd.f32 %v785, %v778
          %v792 = vadd.f32 %v786, %v780
          %v793 = vsub.f32 %v770, %v758
          %v794 = vsub.f32 %v772, %v760
          %v795 = vsub.f32 %v774, %v762
          %v796 = vsub.f32 %v776, %v764
          %v797 = vsub.f32 %v778, %v766
          %v798 = vsub.f32 %v780, %v768
          %v799 = vsub.f32 %v758, %v770
          %v800 = vsub.f32 %v760, %v772
          %v801 = vsub.f32 %v762, %v774
          %v802 = vsub.f32 %v764, %v776
          %v803 = vsub.f32 %v766, %v778
          %v804 = vsub.f32 %v768, %v780
          %v805 = vsel %vm618, %v799, 0.0
          %v806 = vsel %vm618, %v800, 0.0
          %v807 = vsel %vm618, %v801, 0.0
          %v808 = vsel %vm618, %v802, 0.0
          %v809 = vsel %vm618, %v803, 0.0
          %v810 = vsel %vm618, %v804, 0.0
          %v811 = vsel %vm626, %v793, %v805
          %v812 = vsel %vm626, %v794, %v806
          %v813 = vsel %vm626, %v795, %v807
          %v814 = vsel %vm626, %v796, %v808
          %v815 = vsel %vm626, %v797, %v809
          %v816 = vsel %vm626, %v798, %v810
          %v817 = vadd.f32 %v787, %v811
          %v818 = vadd.f32 %v788, %v812
          %v819 = vadd.f32 %v789, %v813
          %v820 = vadd.f32 %v790, %v814
          %v821 = vadd.f32 %v791, %v815
          %v822 = vadd.f32 %v792, %v816
          %v823 = vrot.slane %v817, 7
          %v824 = vrot.slane %v819, 7
          %v825 = vrot.slane %v821, 7
          %v826 = vrot.slane %v818, 7
          %v827 = vrot.slane %v820, 7
          %v828 = vrot.slane %v822, 7
          %v829 = vsel %vm645, %v823, %v826
          %v830 = vsel %vm645, %v824, %v827
          %v831 = vsel %vm645, %v825, %v828
          %v832 = vsel %vm645, %v826, %v823
          %v833 = vsel %vm645, %v827, %v824
          %v834 = vsel %vm645, %v828, %v825
          %v835 = vrot.slane %v817, 1
          %v836 = vrot.slane %v819, 1
          %v837 = vrot.slane %v821, 1
          %v838 = vrot.slane %v818, 1
          %v839 = vrot.slane %v820, 1
          %v840 = vrot.slane %v822, 1
          %v841 = vsel %vm658, %v835, %v838
          %v842 = vsel %vm658, %v836, %v839
          %v843 = vsel %vm658, %v837, %v840
          %v844 = vsel %vm658, %v838, %v835
          %v845 = vsel %vm658, %v839, %v836
          %v846 = vsel %vm658, %v840, %v837
          %v847 = vadd.f32 %v817, %v832
          %v848 = vadd.f32 %v818, %v829
          %v849 = vadd.f32 %v819, %v833
          %v850 = vadd.f32 %v820, %v830
          %v851 = vadd.f32 %v821, %v834
          %v852 = vadd.f32 %v822, %v831
          %v853 = vadd.f32 %v847, %v841
          %v854 = vadd.f32 %v848, %v844
          %v855 = vadd.f32 %v849, %v842
          %v856 = vadd.f32 %v850, %v845
          %v857 = vadd.f32 %v851, %v843
          %v858 = vadd.f32 %v852, %v846
          %v859 = vsub.f32 %v841, %v832
          %v860 = vsub.f32 %v844, %v829
          %v861 = vsub.f32 %v842, %v833
          %v862 = vsub.f32 %v845, %v830
          %v863 = vsub.f32 %v843, %v834
          %v864 = vsub.f32 %v846, %v831
          %v865 = vsub.f32 %v832, %v841
          %v866 = vsub.f32 %v829, %v844
          %v867 = vsub.f32 %v833, %v842
          %v868 = vsub.f32 %v830, %v845
          %v869 = vsub.f32 %v834, %v843
          %v870 = vsub.f32 %v831, %v846
          %v871 = vsel %vm691, %v865, 0.0
          %v872 = vsel %vm692, %v866, 0.0
          %v873 = vsel %vm691, %v867, 0.0
          %v874 = vsel %vm692, %v868, 0.0
          %v875 = vsel %vm691, %v869, 0.0
          %v876 = vsel %vm692, %v870, 0.0
          %v877 = vsel %vm701, %v859, %v871
          %v878 = vsel %vm702, %v860, %v872
          %v879 = vsel %vm701, %v861, %v873
          %v880 = vsel %vm702, %v862, %v874
          %v881 = vsel %vm701, %v863, %v875
          %v882 = vsel %vm702, %v864, %v876
          %v883 = vadd.f32 %v853, %v877
          %v884 = vadd.f32 %v854, %v878
          %v885 = vadd.f32 %v855, %v879
          %v886 = vadd.f32 %v856, %v880
          %v887 = vadd.f32 %v857, %v881
          %v888 = vadd.f32 %v858, %v882
          %v889 = vmul.f32 %v883, 0.11111111
          %v890 = vmul.f32 %v884, 0.11111111
          %v891 = vmul.f32 %v885, 0.11111111
          %v892 = vmul.f32 %v886, 0.11111111
          %v893 = vmul.f32 %v887, 0.11111111
          %v894 = vmul.f32 %v888, 0.11111111
          %v895 = vsub.f32 %v889, %v721
          %v896 = vsub.f32 %v890, %v722
          %v897 = vsub.f32 %v891, %v723
          %v898 = vsub.f32 %v892, %v724
          %v899 = vsub.f32 %v893, %v725
          %v900 = vsub.f32 %v894, %v726
          %v901 = vadd.f32 %v895, 0.0009
          %v902 = vadd.f32 %v896, 0.0009
          %v903 = vadd.f32 %v897, 0.0009
          %v904 = vadd.f32 %v898, 0.0009
          %v905 = vadd.f32 %v899, 0.0009
          %v906 = vadd.f32 %v900, 0.0009
          %907 = vst [vmem:[#allocation4] sm:$0xff] %v901
          %908 = vst [vmem:[#allocation4 + $0x8] sm:$0xff] %v902
          %909 = vst [vmem:[#allocation4 + $0x10] sm:$0xff] %v903
          %910 = vst [vmem:[#allocation4 + $0x18] sm:$0xff] %v904
          %911 = vst [vmem:[#allocation4 + $0x20] sm:$0xff] %v905
          %912 = vst [vmem:[#allocation4 + $0x28] sm:$0xff] %v906
        $region80: #{tpu_custom_call.1} parent=47 // pred_fallthru
          _
        %v913 = vld [vmem:[#allocation2] sm:$0xff]
        %v914 = vld [vmem:[#allocation2 + $0x8] sm:$0xff]
        %v915 = vld [vmem:[#allocation2 + $0x10] sm:$0xff]
        %v916 = vld [vmem:[#allocation2 + $0x18] sm:$0xff]
        %v917 = vld [vmem:[#allocation2 + $0x20] sm:$0xff]
        %v918 = vld [vmem:[#allocation2 + $0x28] sm:$0xff]
        %v919 = vld [vmem:[#allocation3] sm:$0xff]
        %v920 = vld [vmem:[#allocation3 + $0x8] sm:$0xff]
        %v921 = vld [vmem:[#allocation3 + $0x10] sm:$0xff]
        %v922 = vld [vmem:[#allocation3 + $0x18] sm:$0xff]
        %v923 = vld [vmem:[#allocation3 + $0x20] sm:$0xff]
        %v924 = vld [vmem:[#allocation3 + $0x28] sm:$0xff]
        %v925 = vld [vmem:[#allocation4] sm:$0xff]
        %v926 = vld [vmem:[#allocation4 + $0x8] sm:$0xff]
        %v927 = vld [vmem:[#allocation4 + $0x10] sm:$0xff]
        %v928 = vld [vmem:[#allocation4 + $0x18] sm:$0xff]
        %v929 = vld [vmem:[#allocation4 + $0x20] sm:$0xff]
        %v930 = vld [vmem:[#allocation4 + $0x28] sm:$0xff]
        %v931 = vld [vmem:[%s442] sm:$0xff]
        %v932 = vld [vmem:[%s442 + $0x8] sm:$0xff]
        %v933 = vld [vmem:[%s442 + $0x10] sm:$0xff]
        %v934 = vld [vmem:[%s442 + $0x18] sm:$0xff]
        %v935 = vld [vmem:[%s442 + $0x20] sm:$0xff]
        %v936 = vld [vmem:[%s442 + $0x28] sm:$0xff]
        %937 = vrot.lane.b32.xlu0 %v931, 1
        %v938 = vpop.permute.xlu0 %937
        %939 = vrot.lane.b32.xlu0 %v932, 1
        %v940 = vpop.permute.xlu0 %939
        %941 = vrot.lane.b32.xlu0 %v933, 1
        %v942 = vpop.permute.xlu0 %941
        %943 = vrot.lane.b32.xlu0 %v934, 1
        %v944 = vpop.permute.xlu0 %943
        %945 = vrot.lane.b32.xlu0 %v935, 1
        %v946 = vpop.permute.xlu0 %945
        %947 = vrot.lane.b32.xlu0 %v936, 1
        %v948 = vpop.permute.xlu0 %947
        %949 = vrot.lane.b32.xlu0 %v931, 127
        %v950 = vpop.permute.xlu0 %949
        %951 = vrot.lane.b32.xlu0 %v932, 127
        %v952 = vpop.permute.xlu0 %951
        %953 = vrot.lane.b32.xlu0 %v933, 127
        %v954 = vpop.permute.xlu0 %953
        %955 = vrot.lane.b32.xlu0 %v934, 127
        %v956 = vpop.permute.xlu0 %955
        %957 = vrot.lane.b32.xlu0 %v935, 127
        %v958 = vpop.permute.xlu0 %957
        %959 = vrot.lane.b32.xlu0 %v936, 127
        %v960 = vpop.permute.xlu0 %959
        %v961 = vadd.f32 %v931, %v938
        %v962 = vadd.f32 %v932, %v940
        %v963 = vadd.f32 %v933, %v942
        %v964 = vadd.f32 %v934, %v944
        %v965 = vadd.f32 %v935, %v946
        %v966 = vadd.f32 %v936, %v948
        %v967 = vadd.f32 %v961, %v950
        %v968 = vadd.f32 %v962, %v952
        %v969 = vadd.f32 %v963, %v954
        %v970 = vadd.f32 %v964, %v956
        %v971 = vadd.f32 %v965, %v958
        %v972 = vadd.f32 %v966, %v960
        %v973 = vsub.f32 %v950, %v938
        %v974 = vsub.f32 %v952, %v940
        %v975 = vsub.f32 %v954, %v942
        %v976 = vsub.f32 %v956, %v944
        %v977 = vsub.f32 %v958, %v946
        %v978 = vsub.f32 %v960, %v948
        %v979 = vsub.f32 %v938, %v950
        %v980 = vsub.f32 %v940, %v952
        %v981 = vsub.f32 %v942, %v954
        %v982 = vsub.f32 %v944, %v956
        %v983 = vsub.f32 %v946, %v958
        %v984 = vsub.f32 %v948, %v960
        %v985 = vsel %vm554, 1, 0
        %vm986 = vcmp.eq.s32.totalorder %v985, 1
        %v987 = vsel %vm986, %v979, 0.0
        %v988 = vsel %vm986, %v980, 0.0
        %v989 = vsel %vm986, %v981, 0.0
        %v990 = vsel %vm986, %v982, 0.0
        %v991 = vsel %vm986, %v983, 0.0
        %v992 = vsel %vm986, %v984, 0.0
        %v993 = vsel %vm553, 1, 0
        %vm994 = vcmp.eq.s32.totalorder %v993, 1
        %v995 = vsel %vm994, %v973, %v987
        %v996 = vsel %vm994, %v974, %v988
        %v997 = vsel %vm994, %v975, %v989
        %v998 = vsel %vm994, %v976, %v990
        %v999 = vsel %vm994, %v977, %v991
        %v1000 = vsel %vm994, %v978, %v992
        %v1001 = vadd.f32 %v967, %v995
        %v1002 = vadd.f32 %v968, %v996
        %v1003 = vadd.f32 %v969, %v997
        %v1004 = vadd.f32 %v970, %v998
        %v1005 = vadd.f32 %v971, %v999
        %v1006 = vadd.f32 %v972, %v1000
        %v1007 = vrot.slane %v1001, 7
        %v1008 = vrot.slane %v1003, 7
        %v1009 = vrot.slane %v1005, 7
        %v1010 = vrot.slane %v1002, 7
        %v1011 = vrot.slane %v1004, 7
        %v1012 = vrot.slane %v1006, 7
        %vm1013 = vcmp.lt.s32.totalorder %v551, 1
        %v1014 = vsel %vm1013, %v1007, %v1010
        %v1015 = vsel %vm1013, %v1008, %v1011
        %v1016 = vsel %vm1013, %v1009, %v1012
        %v1017 = vsel %vm1013, %v1010, %v1007
        %v1018 = vsel %vm1013, %v1011, %v1008
        %v1019 = vsel %vm1013, %v1012, %v1009
        %v1020 = vrot.slane %v1001, 1
        %v1021 = vrot.slane %v1003, 1
        %v1022 = vrot.slane %v1005, 1
        %v1023 = vrot.slane %v1002, 1
        %v1024 = vrot.slane %v1004, 1
        %v1025 = vrot.slane %v1006, 1
        %vm1026 = vcmp.lt.s32.totalorder %v551, 7
        %v1027 = vsel %vm1026, %v1020, %v1023
        %v1028 = vsel %vm1026, %v1021, %v1024
        %v1029 = vsel %vm1026, %v1022, %v1025
        %v1030 = vsel %vm1026, %v1023, %v1020
        %v1031 = vsel %vm1026, %v1024, %v1021
        %v1032 = vsel %vm1026, %v1025, %v1022
        %v1033 = vadd.f32 %v1001, %v1017
        %v1034 = vadd.f32 %v1002, %v1014
        %v1035 = vadd.f32 %v1003, %v1018
        %v1036 = vadd.f32 %v1004, %v1015
        %v1037 = vadd.f32 %v1005, %v1019
        %v1038 = vadd.f32 %v1006, %v1016
        %v1039 = vadd.f32 %v1033, %v1027
        %v1040 = vadd.f32 %v1034, %v1030
        %v1041 = vadd.f32 %v1035, %v1028
        %v1042 = vadd.f32 %v1036, %v1031
        %v1043 = vadd.f32 %v1037, %v1029
        %v1044 = vadd.f32 %v1038, %v1032
        %v1045 = vsub.f32 %v1027, %v1017
        %v1046 = vsub.f32 %v1030, %v1014
        %v1047 = vsub.f32 %v1028, %v1018
        %v1048 = vsub.f32 %v1031, %v1015
        %v1049 = vsub.f32 %v1029, %v1019
        %v1050 = vsub.f32 %v1032, %v1016
        %v1051 = vsub.f32 %v1017, %v1027
        %v1052 = vsub.f32 %v1014, %v1030
        %v1053 = vsub.f32 %v1018, %v1028
        %v1054 = vsub.f32 %v1015, %v1031
        %v1055 = vsub.f32 %v1019, %v1029
        %v1056 = vsub.f32 %v1016, %v1032
        %v1057 = vsel %vm557, 1, 0
        %v1058 = vsel %vm558, 1, 0
        %vm1059 = vcmp.eq.s32.totalorder %v1057, 1
        %vm1060 = vcmp.eq.s32.totalorder %v1058, 1
        %v1061 = vsel %vm1059, %v1051, 0.0
        %v1062 = vsel %vm1060, %v1052, 0.0
        %v1063 = vsel %vm1059, %v1053, 0.0
        %v1064 = vsel %vm1060, %v1054, 0.0
        %v1065 = vsel %vm1059, %v1055, 0.0
        %v1066 = vsel %vm1060, %v1056, 0.0
        %v1067 = vsel %vm555, 1, 0
        %v1068 = vsel %vm556, 1, 0
        %vm1069 = vcmp.eq.s32.totalorder %v1067, 1
        %vm1070 = vcmp.eq.s32.totalorder %v1068, 1
        %v1071 = vsel %vm1069, %v1045, %v1061
        %v1072 = vsel %vm1070, %v1046, %v1062
        %v1073 = vsel %vm1069, %v1047, %v1063
        %v1074 = vsel %vm1070, %v1048, %v1064
        %v1075 = vsel %vm1069, %v1049, %v1065
        %v1076 = vsel %vm1070, %v1050, %v1066
        %v1077 = vadd.f32 %v1039, %v1071
        %v1078 = vadd.f32 %v1040, %v1072
        %v1079 = vadd.f32 %v1041, %v1073
        %v1080 = vadd.f32 %v1042, %v1074
        %v1081 = vadd.f32 %v1043, %v1075
        %v1082 = vadd.f32 %v1044, %v1076
        %v1083 = vmul.f32 %v1077, 0.11111111
        %v1084 = vmul.f32 %v1078, 0.11111111
        %v1085 = vmul.f32 %v1079, 0.11111111
        %v1086 = vmul.f32 %v1080, 0.11111111
        %v1087 = vmul.f32 %v1081, 0.11111111
        %v1088 = vmul.f32 %v1082, 0.11111111
        %v1089 = vmul.f32 %v931, %v931
        %v1090 = vmul.f32 %v932, %v932
        %v1091 = vmul.f32 %v933, %v933
        %v1092 = vmul.f32 %v934, %v934
        %v1093 = vmul.f32 %v935, %v935
        %v1094 = vmul.f32 %v936, %v936
        %1095 = vrot.lane.b32.xlu0 %v1089, 1
        %v1096 = vpop.permute.xlu0 %1095
        %1097 = vrot.lane.b32.xlu0 %v1090, 1
        %v1098 = vpop.permute.xlu0 %1097
        %1099 = vrot.lane.b32.xlu0 %v1091, 1
        %v1100 = vpop.permute.xlu0 %1099
        %1101 = vrot.lane.b32.xlu0 %v1092, 1
        %v1102 = vpop.permute.xlu0 %1101
        %1103 = vrot.lane.b32.xlu0 %v1093, 1
        %v1104 = vpop.permute.xlu0 %1103
        %1105 = vrot.lane.b32.xlu0 %v1094, 1
        %v1106 = vpop.permute.xlu0 %1105
        %1107 = vrot.lane.b32.xlu0 %v1089, 127
        %v1108 = vpop.permute.xlu0 %1107
        %1109 = vrot.lane.b32.xlu0 %v1090, 127
        %v1110 = vpop.permute.xlu0 %1109
        %1111 = vrot.lane.b32.xlu0 %v1091, 127
        %v1112 = vpop.permute.xlu0 %1111
        %1113 = vrot.lane.b32.xlu0 %v1092, 127
        %v1114 = vpop.permute.xlu0 %1113
        %1115 = vrot.lane.b32.xlu0 %v1093, 127
        %v1116 = vpop.permute.xlu0 %1115
        %1117 = vrot.lane.b32.xlu0 %v1094, 127
        %v1118 = vpop.permute.xlu0 %1117
        %v1119 = vadd.f32 %v1089, %v1096
        %v1120 = vadd.f32 %v1090, %v1098
        %v1121 = vadd.f32 %v1091, %v1100
        %v1122 = vadd.f32 %v1092, %v1102
        %v1123 = vadd.f32 %v1093, %v1104
        %v1124 = vadd.f32 %v1094, %v1106
        %v1125 = vadd.f32 %v1119, %v1108
        %v1126 = vadd.f32 %v1120, %v1110
        %v1127 = vadd.f32 %v1121, %v1112
        %v1128 = vadd.f32 %v1122, %v1114
        %v1129 = vadd.f32 %v1123, %v1116
        %v1130 = vadd.f32 %v1124, %v1118
        %v1131 = vsub.f32 %v1108, %v1096
        %v1132 = vsub.f32 %v1110, %v1098
        %v1133 = vsub.f32 %v1112, %v1100
        %v1134 = vsub.f32 %v1114, %v1102
        %v1135 = vsub.f32 %v1116, %v1104
        %v1136 = vsub.f32 %v1118, %v1106
        %v1137 = vsub.f32 %v1096, %v1108
        %v1138 = vsub.f32 %v1098, %v1110
        %v1139 = vsub.f32 %v1100, %v1112
        %v1140 = vsub.f32 %v1102, %v1114
        %v1141 = vsub.f32 %v1104, %v1116
        %v1142 = vsub.f32 %v1106, %v1118
        %v1143 = vsel %vm986, %v1137, 0.0
        %v1144 = vsel %vm986, %v1138, 0.0
        %v1145 = vsel %vm986, %v1139, 0.0
        %v1146 = vsel %vm986, %v1140, 0.0
        %v1147 = vsel %vm986, %v1141, 0.0
        %v1148 = vsel %vm986, %v1142, 0.0
        %v1149 = vsel %vm994, %v1131, %v1143
        %v1150 = vsel %vm994, %v1132, %v1144
        %v1151 = vsel %vm994, %v1133, %v1145
        %v1152 = vsel %vm994, %v1134, %v1146
        %v1153 = vsel %vm994, %v1135, %v1147
        %v1154 = vsel %vm994, %v1136, %v1148
        %v1155 = vadd.f32 %v1125, %v1149
        %v1156 = vadd.f32 %v1126, %v1150
        %v1157 = vadd.f32 %v1127, %v1151
        %v1158 = vadd.f32 %v1128, %v1152
        %v1159 = vadd.f32 %v1129, %v1153
        %v1160 = vadd.f32 %v1130, %v1154
        %v1161 = vrot.slane %v1155, 7
        %v1162 = vrot.slane %v1157, 7
        %v1163 = vrot.slane %v1159, 7
        %v1164 = vrot.slane %v1156, 7
        %v1165 = vrot.slane %v1158, 7
        %v1166 = vrot.slane %v1160, 7
        %v1167 = vsel %vm1013, %v1161, %v1164
        %v1168 = vsel %vm1013, %v1162, %v1165
        %v1169 = vsel %vm1013, %v1163, %v1166
        %v1170 = vsel %vm1013, %v1164, %v1161
        %v1171 = vsel %vm1013, %v1165, %v1162
        %v1172 = vsel %vm1013, %v1166, %v1163
        %v1173 = vrot.slane %v1155, 1
        %v1174 = vrot.slane %v1157, 1
        %v1175 = vrot.slane %v1159, 1
        %v1176 = vrot.slane %v1156, 1
        %v1177 = vrot.slane %v1158, 1
        %v1178 = vrot.slane %v1160, 1
        %v1179 = vsel %vm1026, %v1173, %v1176
        %v1180 = vsel %vm1026, %v1174, %v1177
        %v1181 = vsel %vm1026, %v1175, %v1178
        %v1182 = vsel %vm1026, %v1176, %v1173
        %v1183 = vsel %vm1026, %v1177, %v1174
        %v1184 = vsel %vm1026, %v1178, %v1175
        %v1185 = vadd.f32 %v1155, %v1170
        %v1186 = vadd.f32 %v1156, %v1167
        %v1187 = vadd.f32 %v1157, %v1171
        %v1188 = vadd.f32 %v1158, %v1168
        %v1189 = vadd.f32 %v1159, %v1172
        %v1190 = vadd.f32 %v1160, %v1169
        %v1191 = vadd.f32 %v1185, %v1179
        %v1192 = vadd.f32 %v1186, %v1182
        %v1193 = vadd.f32 %v1187, %v1180
        %v1194 = vadd.f32 %v1188, %v1183
        %v1195 = vadd.f32 %v1189, %v1181
        %v1196 = vadd.f32 %v1190, %v1184
        %v1197 = vsub.f32 %v1179, %v1170
        %v1198 = vsub.f32 %v1182, %v1167
        %v1199 = vsub.f32 %v1180, %v1171
        %v1200 = vsub.f32 %v1183, %v1168
        %v1201 = vsub.f32 %v1181, %v1172
        %v1202 = vsub.f32 %v1184, %v1169
        %v1203 = vsub.f32 %v1170, %v1179
        %v1204 = vsub.f32 %v1167, %v1182
        %v1205 = vsub.f32 %v1171, %v1180
        %v1206 = vsub.f32 %v1168, %v1183
        %v1207 = vsub.f32 %v1172, %v1181
        %v1208 = vsub.f32 %v1169, %v1184
        %v1209 = vsel %vm1059, %v1203, 0.0
        %v1210 = vsel %vm1060, %v1204, 0.0
        %v1211 = vsel %vm1059, %v1205, 0.0
        %v1212 = vsel %vm1060, %v1206, 0.0
        %v1213 = vsel %vm1059, %v1207, 0.0
        %v1214 = vsel %vm1060, %v1208, 0.0
        %v1215 = vsel %vm1069, %v1197, %v1209
        %v1216 = vsel %vm1070, %v1198, %v1210
        %v1217 = vsel %vm1069, %v1199, %v1211
        %v1218 = vsel %vm1070, %v1200, %v1212
        %v1219 = vsel %vm1069, %v1201, %v1213
        %v1220 = vsel %vm1070, %v1202, %v1214
        %v1221 = vadd.f32 %v1191, %v1215
        %v1222 = vadd.f32 %v1192, %v1216
        %v1223 = vadd.f32 %v1193, %v1217
        %v1224 = vadd.f32 %v1194, %v1218
        %v1225 = vadd.f32 %v1195, %v1219
        %v1226 = vadd.f32 %v1196, %v1220
        %v1227 = vmul.f32 %v1221, 0.11111111
        %v1228 = vmul.f32 %v1222, 0.11111111
        %v1229 = vmul.f32 %v1223, 0.11111111
        %v1230 = vmul.f32 %v1224, 0.11111111
        %v1231 = vmul.f32 %v1225, 0.11111111
        %v1232 = vmul.f32 %v1226, 0.11111111
        %v1233 = vmul.f32 %v931, %v559
        %v1234 = vmul.f32 %v932, %v560
        %v1235 = vmul.f32 %v933, %v561
        %v1236 = vmul.f32 %v934, %v562
        %v1237 = vmul.f32 %v935, %v563
        %v1238 = vmul.f32 %v936, %v564
        %1239 = vrot.lane.b32.xlu0 %v1233, 1
        %v1240 = vpop.permute.xlu0 %1239
        %1241 = vrot.lane.b32.xlu0 %v1234, 1
        %v1242 = vpop.permute.xlu0 %1241
        %1243 = vrot.lane.b32.xlu0 %v1235, 1
        %v1244 = vpop.permute.xlu0 %1243
        %1245 = vrot.lane.b32.xlu0 %v1236, 1
        %v1246 = vpop.permute.xlu0 %1245
        %1247 = vrot.lane.b32.xlu0 %v1237, 1
        %v1248 = vpop.permute.xlu0 %1247
        %1249 = vrot.lane.b32.xlu0 %v1238, 1
        %v1250 = vpop.permute.xlu0 %1249
        %1251 = vrot.lane.b32.xlu0 %v1233, 127
        %v1252 = vpop.permute.xlu0 %1251
        %1253 = vrot.lane.b32.xlu0 %v1234, 127
        %v1254 = vpop.permute.xlu0 %1253
        %1255 = vrot.lane.b32.xlu0 %v1235, 127
        %v1256 = vpop.permute.xlu0 %1255
        %1257 = vrot.lane.b32.xlu0 %v1236, 127
        %v1258 = vpop.permute.xlu0 %1257
        %1259 = vrot.lane.b32.xlu0 %v1237, 127
        %v1260 = vpop.permute.xlu0 %1259
        %1261 = vrot.lane.b32.xlu0 %v1238, 127
        %v1262 = vpop.permute.xlu0 %1261
        %v1263 = vadd.f32 %v1233, %v1240
        %v1264 = vadd.f32 %v1234, %v1242
        %v1265 = vadd.f32 %v1235, %v1244
        %v1266 = vadd.f32 %v1236, %v1246
        %v1267 = vadd.f32 %v1237, %v1248
        %v1268 = vadd.f32 %v1238, %v1250
        %v1269 = vadd.f32 %v1263, %v1252
        %v1270 = vadd.f32 %v1264, %v1254
        %v1271 = vadd.f32 %v1265, %v1256
        %v1272 = vadd.f32 %v1266, %v1258
        %v1273 = vadd.f32 %v1267, %v1260
        %v1274 = vadd.f32 %v1268, %v1262
        %v1275 = vsub.f32 %v1252, %v1240
        %v1276 = vsub.f32 %v1254, %v1242
        %v1277 = vsub.f32 %v1256, %v1244
        %v1278 = vsub.f32 %v1258, %v1246
        %v1279 = vsub.f32 %v1260, %v1248
        %v1280 = vsub.f32 %v1262, %v1250
        %v1281 = vsub.f32 %v1240, %v1252
        %v1282 = vsub.f32 %v1242, %v1254
        %v1283 = vsub.f32 %v1244, %v1256
        %v1284 = vsub.f32 %v1246, %v1258
        %v1285 = vsub.f32 %v1248, %v1260
        %v1286 = vsub.f32 %v1250, %v1262
        %v1287 = vsel %vm986, %v1281, 0.0
        %v1288 = vsel %vm986, %v1282, 0.0
        %v1289 = vsel %vm986, %v1283, 0.0
        %v1290 = vsel %vm986, %v1284, 0.0
        %v1291 = vsel %vm986, %v1285, 0.0
        %v1292 = vsel %vm986, %v1286, 0.0
        %v1293 = vsel %vm994, %v1275, %v1287
        %v1294 = vsel %vm994, %v1276, %v1288
        %v1295 = vsel %vm994, %v1277, %v1289
        %v1296 = vsel %vm994, %v1278, %v1290
        %v1297 = vsel %vm994, %v1279, %v1291
        %v1298 = vsel %vm994, %v1280, %v1292
        %v1299 = vadd.f32 %v1269, %v1293
        %v1300 = vadd.f32 %v1270, %v1294
        %v1301 = vadd.f32 %v1271, %v1295
        %v1302 = vadd.f32 %v1272, %v1296
        %v1303 = vadd.f32 %v1273, %v1297
        %v1304 = vadd.f32 %v1274, %v1298
        %v1305 = vrot.slane %v1299, 7
        %v1306 = vrot.slane %v1301, 7
        %v1307 = vrot.slane %v1303, 7
        %v1308 = vrot.slane %v1300, 7
        %v1309 = vrot.slane %v1302, 7
        %v1310 = vrot.slane %v1304, 7
        %v1311 = vsel %vm1013, %v1305, %v1308
        %v1312 = vsel %vm1013, %v1306, %v1309
        %v1313 = vsel %vm1013, %v1307, %v1310
        %v1314 = vsel %vm1013, %v1308, %v1305
        %v1315 = vsel %vm1013, %v1309, %v1306
        %v1316 = vsel %vm1013, %v1310, %v1307
        %v1317 = vrot.slane %v1299, 1
        %v1318 = vrot.slane %v1301, 1
        %v1319 = vrot.slane %v1303, 1
        %v1320 = vrot.slane %v1300, 1
        %v1321 = vrot.slane %v1302, 1
        %v1322 = vrot.slane %v1304, 1
        %v1323 = vsel %vm1026, %v1317, %v1320
        %v1324 = vsel %vm1026, %v1318, %v1321
        %v1325 = vsel %vm1026, %v1319, %v1322
        %v1326 = vsel %vm1026, %v1320, %v1317
        %v1327 = vsel %vm1026, %v1321, %v1318
        %v1328 = vsel %vm1026, %v1322, %v1319
        %v1329 = vadd.f32 %v1299, %v1314
        %v1330 = vadd.f32 %v1300, %v1311
        %v1331 = vadd.f32 %v1301, %v1315
        %v1332 = vadd.f32 %v1302, %v1312
        %v1333 = vadd.f32 %v1303, %v1316
        %v1334 = vadd.f32 %v1304, %v1313
        %v1335 = vadd.f32 %v1329, %v1323
        %v1336 = vadd.f32 %v1330, %v1326
        %v1337 = vadd.f32 %v1331, %v1324
        %v1338 = vadd.f32 %v1332, %v1327
        %v1339 = vadd.f32 %v1333, %v1325
        %v1340 = vadd.f32 %v1334, %v1328
        %v1341 = vsub.f32 %v1323, %v1314
        %v1342 = vsub.f32 %v1326, %v1311
        %v1343 = vsub.f32 %v1324, %v1315
        %v1344 = vsub.f32 %v1327, %v1312
        %v1345 = vsub.f32 %v1325, %v1316
        %v1346 = vsub.f32 %v1328, %v1313
        %v1347 = vsub.f32 %v1314, %v1323
        %v1348 = vsub.f32 %v1311, %v1326
        %v1349 = vsub.f32 %v1315, %v1324
        %v1350 = vsub.f32 %v1312, %v1327
        %v1351 = vsub.f32 %v1316, %v1325
        %v1352 = vsub.f32 %v1313, %v1328
        %v1353 = vsel %vm1059, %v1347, 0.0
        %v1354 = vsel %vm1060, %v1348, 0.0
        %v1355 = vsel %vm1059, %v1349, 0.0
        %v1356 = vsel %vm1060, %v1350, 0.0
        %v1357 = vsel %vm1059, %v1351, 0.0
        %v1358 = vsel %vm1060, %v1352, 0.0
        %v1359 = vsel %vm1069, %v1341, %v1353
        %v1360 = vsel %vm1070, %v1342, %v1354
        %v1361 = vsel %vm1069, %v1343, %v1355
        %v1362 = vsel %vm1070, %v1344, %v1356
        %v1363 = vsel %vm1069, %v1345, %v1357
        %v1364 = vsel %vm1070, %v1346, %v1358
        %v1365 = vadd.f32 %v1335, %v1359
        %v1366 = vadd.f32 %v1336, %v1360
        %v1367 = vadd.f32 %v1337, %v1361
        %v1368 = vadd.f32 %v1338, %v1362
        %v1369 = vadd.f32 %v1339, %v1363
        %v1370 = vadd.f32 %v1340, %v1364
        %v1371 = vmul.f32 %v1365, 0.11111111
        %v1372 = vmul.f32 %v1366, 0.11111111
        %v1373 = vmul.f32 %v1367, 0.11111111
        %v1374 = vmul.f32 %v1368, 0.11111111
        %v1375 = vmul.f32 %v1369, 0.11111111
        %v1376 = vmul.f32 %v1370, 0.11111111
        %v1377 = vmul.f32 %v1083, %v1083
        %v1378 = vmul.f32 %v1084, %v1084
        %v1379 = vmul.f32 %v1085, %v1085
        %v1380 = vmul.f32 %v1086, %v1086
        %v1381 = vmul.f32 %v1087, %v1087
        %v1382 = vmul.f32 %v1088, %v1088
        %v1383 = vsub.f32 %v1227, %v1377
        %v1384 = vsub.f32 %v1228, %v1378
        %v1385 = vsub.f32 %v1229, %v1379
        %v1386 = vsub.f32 %v1230, %v1380
        %v1387 = vsub.f32 %v1231, %v1381
        %v1388 = vsub.f32 %v1232, %v1382
        %v1389 = vmul.f32 %v1083, %v913
        %v1390 = vmul.f32 %v1084, %v914
        %v1391 = vmul.f32 %v1085, %v915
        %v1392 = vmul.f32 %v1086, %v916
        %v1393 = vmul.f32 %v1087, %v917
        %v1394 = vmul.f32 %v1088, %v918
        %v1395 = vadd.f32 %v1389, 0.0001
        %v1396 = vadd.f32 %v1390, 0.0001
        %v1397 = vadd.f32 %v1391, 0.0001
        %v1398 = vadd.f32 %v1392, 0.0001
        %v1399 = vadd.f32 %v1393, 0.0001
        %v1400 = vadd.f32 %v1394, 0.0001
        %v1401 = vmul.f32 %v1371, 2.0
        %v1402 = vmul.f32 %v1372, 2.0
        %v1403 = vmul.f32 %v1373, 2.0
        %v1404 = vmul.f32 %v1374, 2.0
        %v1405 = vmul.f32 %v1375, 2.0
        %v1406 = vmul.f32 %v1376, 2.0
        %v1407 = vsub.f32 %v1401, %v1389
        %v1408 = vsub.f32 %v1402, %v1390
        %v1409 = vsub.f32 %v1403, %v1391
        %v1410 = vsub.f32 %v1404, %v1392
        %v1411 = vsub.f32 %v1405, %v1393
        %v1412 = vsub.f32 %v1406, %v1394
        %v1413 = vadd.f32 %v1407, 0.0009
        %v1414 = vadd.f32 %v1408, 0.0009
        %v1415 = vadd.f32 %v1409, 0.0009
        %v1416 = vadd.f32 %v1410, 0.0009
        %v1417 = vadd.f32 %v1411, 0.0009
        %v1418 = vadd.f32 %v1412, 0.0009
        %v1419 = vmul.f32 %v1395, %v1413
        %v1420 = vmul.f32 %v1396, %v1414
        %v1421 = vmul.f32 %v1397, %v1415
        %v1422 = vmul.f32 %v1398, %v1416
        %v1423 = vmul.f32 %v1399, %v1417
        %v1424 = vmul.f32 %v1400, %v1418
        %v1425 = vadd.f32 %v1377, %v919
        %v1426 = vadd.f32 %v1378, %v920
        %v1427 = vadd.f32 %v1379, %v921
        %v1428 = vadd.f32 %v1380, %v922
        %v1429 = vadd.f32 %v1381, %v923
        %v1430 = vadd.f32 %v1382, %v924
        %v1431 = vadd.f32 %v1383, %v925
        %v1432 = vadd.f32 %v1384, %v926
        %v1433 = vadd.f32 %v1385, %v927
        %v1434 = vadd.f32 %v1386, %v928
        %v1435 = vadd.f32 %v1387, %v929
        %v1436 = vadd.f32 %v1388, %v930
        %v1437 = vmul.f32 %v1425, %v1431
        %v1438 = vmul.f32 %v1426, %v1432
        %v1439 = vmul.f32 %v1427, %v1433
        %v1440 = vmul.f32 %v1428, %v1434
        %v1441 = vmul.f32 %v1429, %v1435
        %v1442 = vmul.f32 %v1430, %v1436
        %v1443 = vrcp.pop %v1437
        %v1444 = vrcp.pop %v1438
        %v1445 = vrcp.pop %v1439
        %v1446 = vrcp.pop %v1440
        %v1447 = vrcp.pop %v1441
        %v1448 = vrcp.pop %v1442
        %v1449 = vmul.f32 %v1437, %v1443
        %v1450 = vmul.f32 %v1438, %v1444
        %v1451 = vmul.f32 %v1439, %v1445
        %v1452 = vmul.f32 %v1440, %v1446
        %v1453 = vmul.f32 %v1441, %v1447
        %v1454 = vmul.f32 %v1442, %v1448
        %v1455 = vsub.f32 2.0, %v1449
        %v1456 = vsub.f32 2.0, %v1450
        %v1457 = vsub.f32 2.0, %v1451
        %v1458 = vsub.f32 2.0, %v1452
        %v1459 = vsub.f32 2.0, %v1453
        %v1460 = vsub.f32 2.0, %v1454
        %v1461 = vmul.f32 %v1443, %v1455
        %v1462 = vmul.f32 %v1444, %v1456
        %v1463 = vmul.f32 %v1445, %v1457
        %v1464 = vmul.f32 %v1446, %v1458
        %v1465 = vmul.f32 %v1447, %v1459
        %v1466 = vmul.f32 %v1448, %v1460
        %v1467 = vmul.f32 %v1437, %v1461
        %v1468 = vmul.f32 %v1438, %v1462
        %v1469 = vmul.f32 %v1439, %v1463
        %v1470 = vmul.f32 %v1440, %v1464
        %v1471 = vmul.f32 %v1441, %v1465
        %v1472 = vmul.f32 %v1442, %v1466
        %v1473 = vsub.f32 2.0, %v1467
        %v1474 = vsub.f32 2.0, %v1468
        %v1475 = vsub.f32 2.0, %v1469
        %v1476 = vsub.f32 2.0, %v1470
        %v1477 = vsub.f32 2.0, %v1471
        %v1478 = vsub.f32 2.0, %v1472
        %v1479 = vmul.f32 %v1461, %v1473
        %v1480 = vmul.f32 %v1462, %v1474
        %v1481 = vmul.f32 %v1463, %v1475
        %v1482 = vmul.f32 %v1464, %v1476
        %v1483 = vmul.f32 %v1465, %v1477
        %v1484 = vmul.f32 %v1466, %v1478
        %v1485 = vmul.f32 %v1419, %v1479
        %v1486 = vmul.f32 %v1420, %v1480
        %v1487 = vmul.f32 %v1421, %v1481
        %v1488 = vmul.f32 %v1422, %v1482
        %v1489 = vmul.f32 %v1423, %v1483
        %v1490 = vmul.f32 %v1424, %v1484
        %v1491 = vsub.f32 1.0, %v1485
        %v1492 = vsub.f32 1.0, %v1486
        %v1493 = vsub.f32 1.0, %v1487
        %v1494 = vsub.f32 1.0, %v1488
        %v1495 = vsub.f32 1.0, %v1489
        %v1496 = vsub.f32 1.0, %v1490
        %v1497 = vmul.f32 %v1491, 0.5
        %v1498 = vmul.f32 %v1492, 0.5
        %v1499 = vmul.f32 %v1493, 0.5
        %v1500 = vmul.f32 %v1494, 0.5
        %v1501 = vmul.f32 %v1495, 0.5
        %v1502 = vmul.f32 %v1496, 0.5
        %v1503 = vmax.f32 %v1497, 0.0
        %v1504 = vmax.f32 %v1498, 0.0
        %v1505 = vmax.f32 %v1499, 0.0
        %v1506 = vmax.f32 %v1500, 0.0
        %v1507 = vmax.f32 %v1501, 0.0
        %v1508 = vmax.f32 %v1502, 0.0
        %v1509 = vmin.f32 %v1503, 1.0
        %v1510 = vmin.f32 %v1504, 1.0
        %v1511 = vmin.f32 %v1505, 1.0
        %v1512 = vmin.f32 %v1506, 1.0
        %v1513 = vmin.f32 %v1507, 1.0
        %v1514 = vmin.f32 %v1508, 1.0
        %v1515 = vmul.f32 %v1509, 0.85
        %v1516 = vmul.f32 %v1510, 0.85
        %v1517 = vmul.f32 %v1511, 0.85
        %v1518 = vmul.f32 %v1512, 0.85
        %v1519 = vmul.f32 %v1513, 0.85
        %v1520 = vmul.f32 %v1514, 0.85
        %v1521 = vsub.f32 %v931, %v559
        %v1522 = vsub.f32 %v932, %v560
        %v1523 = vsub.f32 %v933, %v561
        %v1524 = vsub.f32 %v934, %v562
        %v1525 = vsub.f32 %v935, %v563
        %v1526 = vsub.f32 %v936, %v564
        %v1527 = vand.u32 2147483647, %v1521
        %v1528 = vand.u32 2147483647, %v1522
        %v1529 = vand.u32 2147483647, %v1523
        %v1530 = vand.u32 2147483647, %v1524
        %v1531 = vand.u32 2147483647, %v1525
        %v1532 = vand.u32 2147483647, %v1526
        %v1533 = vmul.f32 %v1527, 0.15
        %v1534 = vmul.f32 %v1528, 0.15
        %v1535 = vmul.f32 %v1529, 0.15
        %v1536 = vmul.f32 %v1530, 0.15
        %v1537 = vmul.f32 %v1531, 0.15
        %v1538 = vmul.f32 %v1532, 0.15
        %v1539 = vadd.f32 %v1515, %v1533
        %v1540 = vadd.f32 %v1516, %v1534
        %v1541 = vadd.f32 %v1517, %v1535
        %v1542 = vadd.f32 %v1518, %v1536
        %v1543 = vadd.f32 %v1519, %v1537
        %v1544 = vadd.f32 %v1520, %v1538
        %v1545 = vadd.f32 %v1539, %v1541
        %v1546 = vadd.f32 %v1545, %v1543
        %v1547 = vadd.f32 %v1540, %v1542
        %v1548 = vadd.f32 %v1547, %v1544
        %v1549 = vrcp.pop 3.0
        %v1550 = vmul.f32 %v1546, %v1549
        %v1551 = vmul.f32 %v1548, %v1549
        %v1552 = vld [vmem:[%s451] sm:$0xff]
        %v1553 = vld [vmem:[%s451 + $0x8] sm:$0xff]
        %v1554 = vld [vmem:[%s451 + $0x10] sm:$0xff]
        %v1555 = vld [vmem:[%s451 + $0x18] sm:$0xff]
        %v1556 = vld [vmem:[%s451 + $0x20] sm:$0xff]
        %v1557 = vld [vmem:[%s451 + $0x28] sm:$0xff]
        %1558 = vrot.lane.b32.xlu0 %v1552, 1
        %v1559 = vpop.permute.xlu0 %1558
        %1560 = vrot.lane.b32.xlu0 %v1553, 1
        %v1561 = vpop.permute.xlu0 %1560
        %1562 = vrot.lane.b32.xlu0 %v1554, 1
        %v1563 = vpop.permute.xlu0 %1562
        %1564 = vrot.lane.b32.xlu0 %v1555, 1
        %v1565 = vpop.permute.xlu0 %1564
        %1566 = vrot.lane.b32.xlu0 %v1556, 1
        %v1567 = vpop.permute.xlu0 %1566
        %1568 = vrot.lane.b32.xlu0 %v1557, 1
        %v1569 = vpop.permute.xlu0 %1568
        %1570 = vrot.lane.b32.xlu0 %v1552, 127
        %v1571 = vpop.permute.xlu0 %1570
        %1572 = vrot.lane.b32.xlu0 %v1553, 127
        %v1573 = vpop.permute.xlu0 %1572
        %1574 = vrot.lane.b32.xlu0 %v1554, 127
        %v1575 = vpop.permute.xlu0 %1574
        %1576 = vrot.lane.b32.xlu0 %v1555, 127
        %v1577 = vpop.permute.xlu0 %1576
        %1578 = vrot.lane.b32.xlu0 %v1556, 127
        %v1579 = vpop.permute.xlu0 %1578
        %1580 = vrot.lane.b32.xlu0 %v1557, 127
        %v1581 = vpop.permute.xlu0 %1580
        %v1582 = vadd.f32 %v1552, %v1559
        %v1583 = vadd.f32 %v1553, %v1561
        %v1584 = vadd.f32 %v1554, %v1563
        %v1585 = vadd.f32 %v1555, %v1565
        %v1586 = vadd.f32 %v1556, %v1567
        %v1587 = vadd.f32 %v1557, %v1569
        %v1588 = vadd.f32 %v1582, %v1571
        %v1589 = vadd.f32 %v1583, %v1573
        %v1590 = vadd.f32 %v1584, %v1575
        %v1591 = vadd.f32 %v1585, %v1577
        %v1592 = vadd.f32 %v1586, %v1579
        %v1593 = vadd.f32 %v1587, %v1581
        %v1594 = vsub.f32 %v1571, %v1559
        %v1595 = vsub.f32 %v1573, %v1561
        %v1596 = vsub.f32 %v1575, %v1563
        %v1597 = vsub.f32 %v1577, %v1565
        %v1598 = vsub.f32 %v1579, %v1567
        %v1599 = vsub.f32 %v1581, %v1569
        %v1600 = vsub.f32 %v1559, %v1571
        %v1601 = vsub.f32 %v1561, %v1573
        %v1602 = vsub.f32 %v1563, %v1575
        %v1603 = vsub.f32 %v1565, %v1577
        %v1604 = vsub.f32 %v1567, %v1579
        %v1605 = vsub.f32 %v1569, %v1581
        %v1606 = vsel %vm986, %v1600, 0.0
        %v1607 = vsel %vm986, %v1601, 0.0
        %v1608 = vsel %vm986, %v1602, 0.0
        %v1609 = vsel %vm986, %v1603, 0.0
        %v1610 = vsel %vm986, %v1604, 0.0
        %v1611 = vsel %vm986, %v1605, 0.0
        %v1612 = vsel %vm994, %v1594, %v1606
        %v1613 = vsel %vm994, %v1595, %v1607
        %v1614 = vsel %vm994, %v1596, %v1608
        %v1615 = vsel %vm994, %v1597, %v1609
        %v1616 = vsel %vm994, %v1598, %v1610
        %v1617 = vsel %vm994, %v1599, %v1611
        %v1618 = vadd.f32 %v1588, %v1612
        %v1619 = vadd.f32 %v1589, %v1613
        %v1620 = vadd.f32 %v1590, %v1614
        %v1621 = vadd.f32 %v1591, %v1615
        %v1622 = vadd.f32 %v1592, %v1616
        %v1623 = vadd.f32 %v1593, %v1617
        %v1624 = vrot.slane %v1618, 7
        %v1625 = vrot.slane %v1620, 7
        %v1626 = vrot.slane %v1622, 7
        %v1627 = vrot.slane %v1619, 7
        %v1628 = vrot.slane %v1621, 7
        %v1629 = vrot.slane %v1623, 7
        %v1630 = vsel %vm1013, %v1624, %v1627
        %v1631 = vsel %vm1013, %v1625, %v1628
        %v1632 = vsel %vm1013, %v1626, %v1629
        %v1633 = vsel %vm1013, %v1627, %v1624
        %v1634 = vsel %vm1013, %v1628, %v1625
        %v1635 = vsel %vm1013, %v1629, %v1626
        %v1636 = vrot.slane %v1618, 1
        %v1637 = vrot.slane %v1620, 1
        %v1638 = vrot.slane %v1622, 1
        %v1639 = vrot.slane %v1619, 1
        %v1640 = vrot.slane %v1621, 1
        %v1641 = vrot.slane %v1623, 1
        %v1642 = vsel %vm1026, %v1636, %v1639
        %v1643 = vsel %vm1026, %v1637, %v1640
        %v1644 = vsel %vm1026, %v1638, %v1641
        %v1645 = vsel %vm1026, %v1639, %v1636
        %v1646 = vsel %vm1026, %v1640, %v1637
        %v1647 = vsel %vm1026, %v1641, %v1638
        %v1648 = vadd.f32 %v1618, %v1633
        %v1649 = vadd.f32 %v1619, %v1630
        %v1650 = vadd.f32 %v1620, %v1634
        %v1651 = vadd.f32 %v1621, %v1631
        %v1652 = vadd.f32 %v1622, %v1635
        %v1653 = vadd.f32 %v1623, %v1632
        %v1654 = vadd.f32 %v1648, %v1642
        %v1655 = vadd.f32 %v1649, %v1645
        %v1656 = vadd.f32 %v1650, %v1643
        %v1657 = vadd.f32 %v1651, %v1646
        %v1658 = vadd.f32 %v1652, %v1644
        %v1659 = vadd.f32 %v1653, %v1647
        %v1660 = vsub.f32 %v1642, %v1633
        %v1661 = vsub.f32 %v1645, %v1630
        %v1662 = vsub.f32 %v1643, %v1634
        %v1663 = vsub.f32 %v1646, %v1631
        %v1664 = vsub.f32 %v1644, %v1635
        %v1665 = vsub.f32 %v1647, %v1632
        %v1666 = vsub.f32 %v1633, %v1642
        %v1667 = vsub.f32 %v1630, %v1645
        %v1668 = vsub.f32 %v1634, %v1643
        %v1669 = vsub.f32 %v1631, %v1646
        %v1670 = vsub.f32 %v1635, %v1644
        %v1671 = vsub.f32 %v1632, %v1647
        %v1672 = vsel %vm1059, %v1666, 0.0
        %v1673 = vsel %vm1060, %v1667, 0.0
        %v1674 = vsel %vm1059, %v1668, 0.0
        %v1675 = vsel %vm1060, %v1669, 0.0
        %v1676 = vsel %vm1059, %v1670, 0.0
        %v1677 = vsel %vm1060, %v1671, 0.0
        %v1678 = vsel %vm1069, %v1660, %v1672
        %v1679 = vsel %vm1070, %v1661, %v1673
        %v1680 = vsel %vm1069, %v1662, %v1674
        %v1681 = vsel %vm1070, %v1663, %v1675
        %v1682 = vsel %vm1069, %v1664, %v1676
        %v1683 = vsel %vm1070, %v1665, %v1677
        %v1684 = vadd.f32 %v1654, %v1678
        %v1685 = vadd.f32 %v1655, %v1679
        %v1686 = vadd.f32 %v1656, %v1680
        %v1687 = vadd.f32 %v1657, %v1681
        %v1688 = vadd.f32 %v1658, %v1682
        %v1689 = vadd.f32 %v1659, %v1683
        %v1690 = vmul.f32 %v1684, 0.11111111
        %v1691 = vmul.f32 %v1685, 0.11111111
        %v1692 = vmul.f32 %v1686, 0.11111111
        %v1693 = vmul.f32 %v1687, 0.11111111
        %v1694 = vmul.f32 %v1688, 0.11111111
        %v1695 = vmul.f32 %v1689, 0.11111111
        %v1696 = vmul.f32 %v1552, %v1552
        %v1697 = vmul.f32 %v1553, %v1553
        %v1698 = vmul.f32 %v1554, %v1554
        %v1699 = vmul.f32 %v1555, %v1555
        %v1700 = vmul.f32 %v1556, %v1556
        %v1701 = vmul.f32 %v1557, %v1557
        %1702 = vrot.lane.b32.xlu0 %v1696, 1
        %v1703 = vpop.permute.xlu0 %1702
        %1704 = vrot.lane.b32.xlu0 %v1697, 1
        %v1705 = vpop.permute.xlu0 %1704
        %1706 = vrot.lane.b32.xlu0 %v1698, 1
        %v1707 = vpop.permute.xlu0 %1706
        %1708 = vrot.lane.b32.xlu0 %v1699, 1
        %v1709 = vpop.permute.xlu0 %1708
        %1710 = vrot.lane.b32.xlu0 %v1700, 1
        %v1711 = vpop.permute.xlu0 %1710
        %1712 = vrot.lane.b32.xlu0 %v1701, 1
        %v1713 = vpop.permute.xlu0 %1712
        %1714 = vrot.lane.b32.xlu0 %v1696, 127
        %v1715 = vpop.permute.xlu0 %1714
        %1716 = vrot.lane.b32.xlu0 %v1697, 127
        %v1717 = vpop.permute.xlu0 %1716
        %1718 = vrot.lane.b32.xlu0 %v1698, 127
        %v1719 = vpop.permute.xlu0 %1718
        %1720 = vrot.lane.b32.xlu0 %v1699, 127
        %v1721 = vpop.permute.xlu0 %1720
        %1722 = vrot.lane.b32.xlu0 %v1700, 127
        %v1723 = vpop.permute.xlu0 %1722
        %1724 = vrot.lane.b32.xlu0 %v1701, 127
        %v1725 = vpop.permute.xlu0 %1724
        %v1726 = vadd.f32 %v1696, %v1703
        %v1727 = vadd.f32 %v1697, %v1705
        %v1728 = vadd.f32 %v1698, %v1707
        %v1729 = vadd.f32 %v1699, %v1709
        %v1730 = vadd.f32 %v1700, %v1711
        %v1731 = vadd.f32 %v1701, %v1713
        %v1732 = vadd.f32 %v1726, %v1715
        %v1733 = vadd.f32 %v1727, %v1717
        %v1734 = vadd.f32 %v1728, %v1719
        %v1735 = vadd.f32 %v1729, %v1721
        %v1736 = vadd.f32 %v1730, %v1723
        %v1737 = vadd.f32 %v1731, %v1725
        %v1738 = vsub.f32 %v1715, %v1703
        %v1739 = vsub.f32 %v1717, %v1705
        %v1740 = vsub.f32 %v1719, %v1707
        %v1741 = vsub.f32 %v1721, %v1709
        %v1742 = vsub.f32 %v1723, %v1711
        %v1743 = vsub.f32 %v1725, %v1713
        %v1744 = vsub.f32 %v1703, %v1715
        %v1745 = vsub.f32 %v1705, %v1717
        %v1746 = vsub.f32 %v1707, %v1719
        %v1747 = vsub.f32 %v1709, %v1721
        %v1748 = vsub.f32 %v1711, %v1723
        %v1749 = vsub.f32 %v1713, %v1725
        %v1750 = vsel %vm986, %v1744, 0.0
        %v1751 = vsel %vm986, %v1745, 0.0
        %v1752 = vsel %vm986, %v1746, 0.0
        %v1753 = vsel %vm986, %v1747, 0.0
        %v1754 = vsel %vm986, %v1748, 0.0
        %v1755 = vsel %vm986, %v1749, 0.0
        %v1756 = vsel %vm994, %v1738, %v1750
        %v1757 = vsel %vm994, %v1739, %v1751
        %v1758 = vsel %vm994, %v1740, %v1752
        %v1759 = vsel %vm994, %v1741, %v1753
        %v1760 = vsel %vm994, %v1742, %v1754
        %v1761 = vsel %vm994, %v1743, %v1755
        %v1762 = vadd.f32 %v1732, %v1756
        %v1763 = vadd.f32 %v1733, %v1757
        %v1764 = vadd.f32 %v1734, %v1758
        %v1765 = vadd.f32 %v1735, %v1759
        %v1766 = vadd.f32 %v1736, %v1760
        %v1767 = vadd.f32 %v1737, %v1761
        %v1768 = vrot.slane %v1762, 7
        %v1769 = vrot.slane %v1764, 7
        %v1770 = vrot.slane %v1766, 7
        %v1771 = vrot.slane %v1763, 7
        %v1772 = vrot.slane %v1765, 7
        %v1773 = vrot.slane %v1767, 7
        %v1774 = vsel %vm1013, %v1768, %v1771
        %v1775 = vsel %vm1013, %v1769, %v1772
        %v1776 = vsel %vm1013, %v1770, %v1773
        %v1777 = vsel %vm1013, %v1771, %v1768
        %v1778 = vsel %vm1013, %v1772, %v1769
        %v1779 = vsel %vm1013, %v1773, %v1770
        %v1780 = vrot.slane %v1762, 1
        %v1781 = vrot.slane %v1764, 1
        %v1782 = vrot.slane %v1766, 1
        %v1783 = vrot.slane %v1763, 1
        %v1784 = vrot.slane %v1765, 1
        %v1785 = vrot.slane %v1767, 1
        %v1786 = vsel %vm1026, %v1780, %v1783
        %v1787 = vsel %vm1026, %v1781, %v1784
        %v1788 = vsel %vm1026, %v1782, %v1785
        %v1789 = vsel %vm1026, %v1783, %v1780
        %v1790 = vsel %vm1026, %v1784, %v1781
        %v1791 = vsel %vm1026, %v1785, %v1782
        %v1792 = vadd.f32 %v1762, %v1777
        %v1793 = vadd.f32 %v1763, %v1774
        %v1794 = vadd.f32 %v1764, %v1778
        %v1795 = vadd.f32 %v1765, %v1775
        %v1796 = vadd.f32 %v1766, %v1779
        %v1797 = vadd.f32 %v1767, %v1776
        %v1798 = vadd.f32 %v1792, %v1786
        %v1799 = vadd.f32 %v1793, %v1789
        %v1800 = vadd.f32 %v1794, %v1787
        %v1801 = vadd.f32 %v1795, %v1790
        %v1802 = vadd.f32 %v1796, %v1788
        %v1803 = vadd.f32 %v1797, %v1791
        %v1804 = vsub.f32 %v1786, %v1777
        %v1805 = vsub.f32 %v1789, %v1774
        %v1806 = vsub.f32 %v1787, %v1778
        %v1807 = vsub.f32 %v1790, %v1775
        %v1808 = vsub.f32 %v1788, %v1779
        %v1809 = vsub.f32 %v1791, %v1776
        %v1810 = vsub.f32 %v1777, %v1786
        %v1811 = vsub.f32 %v1774, %v1789
        %v1812 = vsub.f32 %v1778, %v1787
        %v1813 = vsub.f32 %v1775, %v1790
        %v1814 = vsub.f32 %v1779, %v1788
        %v1815 = vsub.f32 %v1776, %v1791
        %v1816 = vsel %vm1059, %v1810, 0.0
        %v1817 = vsel %vm1060, %v1811, 0.0
        %v1818 = vsel %vm1059, %v1812, 0.0
        %v1819 = vsel %vm1060, %v1813, 0.0
        %v1820 = vsel %vm1059, %v1814, 0.0
        %v1821 = vsel %vm1060, %v1815, 0.0
        %v1822 = vsel %vm1069, %v1804, %v1816
        %v1823 = vsel %vm1070, %v1805, %v1817
        %v1824 = vsel %vm1069, %v1806, %v1818
        %v1825 = vsel %vm1070, %v1807, %v1819
        %v1826 = vsel %vm1069, %v1808, %v1820
        %v1827 = vsel %vm1070, %v1809, %v1821
        %v1828 = vadd.f32 %v1798, %v1822
        %v1829 = vadd.f32 %v1799, %v1823
        %v1830 = vadd.f32 %v1800, %v1824
        %v1831 = vadd.f32 %v1801, %v1825
        %v1832 = vadd.f32 %v1802, %v1826
        %v1833 = vadd.f32 %v1803, %v1827
        %v1834 = vmul.f32 %v1828, 0.11111111
        %v1835 = vmul.f32 %v1829, 0.11111111
        %v1836 = vmul.f32 %v1830, 0.11111111
        %v1837 = vmul.f32 %v1831, 0.11111111
        %v1838 = vmul.f32 %v1832, 0.11111111
        %v1839 = vmul.f32 %v1833, 0.11111111
        %v1840 = vmul.f32 %v1552, %v559
        %v1841 = vmul.f32 %v1553, %v560
        %v1842 = vmul.f32 %v1554, %v561
        %v1843 = vmul.f32 %v1555, %v562
        %v1844 = vmul.f32 %v1556, %v563
        %v1845 = vmul.f32 %v1557, %v564
        %1846 = vrot.lane.b32.xlu0 %v1840, 1
        %v1847 = vpop.permute.xlu0 %1846
        %1848 = vrot.lane.b32.xlu0 %v1841, 1
        %v1849 = vpop.permute.xlu0 %1848
        %1850 = vrot.lane.b32.xlu0 %v1842, 1
        %v1851 = vpop.permute.xlu0 %1850
        %1852 = vrot.lane.b32.xlu0 %v1843, 1
        %v1853 = vpop.permute.xlu0 %1852
        %1854 = vrot.lane.b32.xlu0 %v1844, 1
        %v1855 = vpop.permute.xlu0 %1854
        %1856 = vrot.lane.b32.xlu0 %v1845, 1
        %v1857 = vpop.permute.xlu0 %1856
        %1858 = vrot.lane.b32.xlu0 %v1840, 127
        %v1859 = vpop.permute.xlu0 %1858
        %1860 = vrot.lane.b32.xlu0 %v1841, 127
        %v1861 = vpop.permute.xlu0 %1860
        %1862 = vrot.lane.b32.xlu0 %v1842, 127
        %v1863 = vpop.permute.xlu0 %1862
        %1864 = vrot.lane.b32.xlu0 %v1843, 127
        %v1865 = vpop.permute.xlu0 %1864
        %1866 = vrot.lane.b32.xlu0 %v1844, 127
        %v1867 = vpop.permute.xlu0 %1866
        %1868 = vrot.lane.b32.xlu0 %v1845, 127
        %v1869 = vpop.permute.xlu0 %1868
        %v1870 = vadd.f32 %v1840, %v1847
        %v1871 = vadd.f32 %v1841, %v1849
        %v1872 = vadd.f32 %v1842, %v1851
        %v1873 = vadd.f32 %v1843, %v1853
        %v1874 = vadd.f32 %v1844, %v1855
        %v1875 = vadd.f32 %v1845, %v1857
        %v1876 = vadd.f32 %v1870, %v1859
        %v1877 = vadd.f32 %v1871, %v1861
        %v1878 = vadd.f32 %v1872, %v1863
        %v1879 = vadd.f32 %v1873, %v1865
        %v1880 = vadd.f32 %v1874, %v1867
        %v1881 = vadd.f32 %v1875, %v1869
        %v1882 = vsub.f32 %v1859, %v1847
        %v1883 = vsub.f32 %v1861, %v1849
        %v1884 = vsub.f32 %v1863, %v1851
        %v1885 = vsub.f32 %v1865, %v1853
        %v1886 = vsub.f32 %v1867, %v1855
        %v1887 = vsub.f32 %v1869, %v1857
        %v1888 = vsub.f32 %v1847, %v1859
        %v1889 = vsub.f32 %v1849, %v1861
        %v1890 = vsub.f32 %v1851, %v1863
        %v1891 = vsub.f32 %v1853, %v1865
        %v1892 = vsub.f32 %v1855, %v1867
        %v1893 = vsub.f32 %v1857, %v1869
        %v1894 = vsel %vm986, %v1888, 0.0
        %v1895 = vsel %vm986, %v1889, 0.0
        %v1896 = vsel %vm986, %v1890, 0.0
        %v1897 = vsel %vm986, %v1891, 0.0
        %v1898 = vsel %vm986, %v1892, 0.0
        %v1899 = vsel %vm986, %v1893, 0.0
        %v1900 = vsel %vm994, %v1882, %v1894
        %v1901 = vsel %vm994, %v1883, %v1895
        %v1902 = vsel %vm994, %v1884, %v1896
        %v1903 = vsel %vm994, %v1885, %v1897
        %v1904 = vsel %vm994, %v1886, %v1898
        %v1905 = vsel %vm994, %v1887, %v1899
        %v1906 = vadd.f32 %v1876, %v1900
        %v1907 = vadd.f32 %v1877, %v1901
        %v1908 = vadd.f32 %v1878, %v1902
        %v1909 = vadd.f32 %v1879, %v1903
        %v1910 = vadd.f32 %v1880, %v1904
        %v1911 = vadd.f32 %v1881, %v1905
        %v1912 = vrot.slane %v1906, 7
        %v1913 = vrot.slane %v1908, 7
        %v1914 = vrot.slane %v1910, 7
        %v1915 = vrot.slane %v1907, 7
        %v1916 = vrot.slane %v1909, 7
        %v1917 = vrot.slane %v1911, 7
        %v1918 = vsel %vm1013, %v1912, %v1915
        %v1919 = vsel %vm1013, %v1913, %v1916
        %v1920 = vsel %vm1013, %v1914, %v1917
        %v1921 = vsel %vm1013, %v1915, %v1912
        %v1922 = vsel %vm1013, %v1916, %v1913
        %v1923 = vsel %vm1013, %v1917, %v1914
        %v1924 = vrot.slane %v1906, 1
        %v1925 = vrot.slane %v1908, 1
        %v1926 = vrot.slane %v1910, 1
        %v1927 = vrot.slane %v1907, 1
        %v1928 = vrot.slane %v1909, 1
        %v1929 = vrot.slane %v1911, 1
        %v1930 = vsel %vm1026, %v1924, %v1927
        %v1931 = vsel %vm1026, %v1925, %v1928
        %v1932 = vsel %vm1026, %v1926, %v1929
        %v1933 = vsel %vm1026, %v1927, %v1924
        %v1934 = vsel %vm1026, %v1928, %v1925
        %v1935 = vsel %vm1026, %v1929, %v1926
        %v1936 = vadd.f32 %v1906, %v1921
        %v1937 = vadd.f32 %v1907, %v1918
        %v1938 = vadd.f32 %v1908, %v1922
        %v1939 = vadd.f32 %v1909, %v1919
        %v1940 = vadd.f32 %v1910, %v1923
        %v1941 = vadd.f32 %v1911, %v1920
        %v1942 = vadd.f32 %v1936, %v1930
        %v1943 = vadd.f32 %v1937, %v1933
        %v1944 = vadd.f32 %v1938, %v1931
        %v1945 = vadd.f32 %v1939, %v1934
        %v1946 = vadd.f32 %v1940, %v1932
        %v1947 = vadd.f32 %v1941, %v1935
        %v1948 = vsub.f32 %v1930, %v1921
        %v1949 = vsub.f32 %v1933, %v1918
        %v1950 = vsub.f32 %v1931, %v1922
        %v1951 = vsub.f32 %v1934, %v1919
        %v1952 = vsub.f32 %v1932, %v1923
        %v1953 = vsub.f32 %v1935, %v1920
        %v1954 = vsub.f32 %v1921, %v1930
        %v1955 = vsub.f32 %v1918, %v1933
        %v1956 = vsub.f32 %v1922, %v1931
        %v1957 = vsub.f32 %v1919, %v1934
        %v1958 = vsub.f32 %v1923, %v1932
        %v1959 = vsub.f32 %v1920, %v1935
        %v1960 = vsel %vm1059, %v1954, 0.0
        %v1961 = vsel %vm1060, %v1955, 0.0
        %v1962 = vsel %vm1059, %v1956, 0.0
        %v1963 = vsel %vm1060, %v1957, 0.0
        %v1964 = vsel %vm1059, %v1958, 0.0
        %v1965 = vsel %vm1060, %v1959, 0.0
        %v1966 = vsel %vm1069, %v1948, %v1960
        %v1967 = vsel %vm1070, %v1949, %v1961
        %v1968 = vsel %vm1069, %v1950, %v1962
        %v1969 = vsel %vm1070, %v1951, %v1963
        %v1970 = vsel %vm1069, %v1952, %v1964
        %v1971 = vsel %vm1070, %v1953, %v1965
        %v1972 = vadd.f32 %v1942, %v1966
        %v1973 = vadd.f32 %v1943, %v1967
        %v1974 = vadd.f32 %v1944, %v1968
        %v1975 = vadd.f32 %v1945, %v1969
        %v1976 = vadd.f32 %v1946, %v1970
        %v1977 = vadd.f32 %v1947, %v1971
        %v1978 = vmul.f32 %v1972, 0.11111111
        %v1979 = vmul.f32 %v1973, 0.11111111
        %v1980 = vmul.f32 %v1974, 0.11111111
        %v1981 = vmul.f32 %v1975, 0.11111111
        %v1982 = vmul.f32 %v1976, 0.11111111
        %v1983 = vmul.f32 %v1977, 0.11111111
        %v1984 = vmul.f32 %v1690, %v1690
        %v1985 = vmul.f32 %v1691, %v1691
        %v1986 = vmul.f32 %v1692, %v1692
        %v1987 = vmul.f32 %v1693, %v1693
        %v1988 = vmul.f32 %v1694, %v1694
        %v1989 = vmul.f32 %v1695, %v1695
        %v1990 = vsub.f32 %v1834, %v1984
        %v1991 = vsub.f32 %v1835, %v1985
        %v1992 = vsub.f32 %v1836, %v1986
        %v1993 = vsub.f32 %v1837, %v1987
        %v1994 = vsub.f32 %v1838, %v1988
        %v1995 = vsub.f32 %v1839, %v1989
        %v1996 = vmul.f32 %v1690, %v913
        %v1997 = vmul.f32 %v1691, %v914
        %v1998 = vmul.f32 %v1692, %v915
        %v1999 = vmul.f32 %v1693, %v916
        %v2000 = vmul.f32 %v1694, %v917
        %v2001 = vmul.f32 %v1695, %v918
        %v2002 = vadd.f32 %v1996, 0.0001
        %v2003 = vadd.f32 %v1997, 0.0001
        %v2004 = vadd.f32 %v1998, 0.0001
        %v2005 = vadd.f32 %v1999, 0.0001
        %v2006 = vadd.f32 %v2000, 0.0001
        %v2007 = vadd.f32 %v2001, 0.0001
        %v2008 = vmul.f32 %v1978, 2.0
        %v2009 = vmul.f32 %v1979, 2.0
        %v2010 = vmul.f32 %v1980, 2.0
        %v2011 = vmul.f32 %v1981, 2.0
        %v2012 = vmul.f32 %v1982, 2.0
        %v2013 = vmul.f32 %v1983, 2.0
        %v2014 = vsub.f32 %v2008, %v1996
        %v2015 = vsub.f32 %v2009, %v1997
        %v2016 = vsub.f32 %v2010, %v1998
        %v2017 = vsub.f32 %v2011, %v1999
        %v2018 = vsub.f32 %v2012, %v2000
        %v2019 = vsub.f32 %v2013, %v2001
        %v2020 = vadd.f32 %v2014, 0.0009
        %v2021 = vadd.f32 %v2015, 0.0009
        %v2022 = vadd.f32 %v2016, 0.0009
        %v2023 = vadd.f32 %v2017, 0.0009
        %v2024 = vadd.f32 %v2018, 0.0009
        %v2025 = vadd.f32 %v2019, 0.0009
        %v2026 = vmul.f32 %v2002, %v2020
        %v2027 = vmul.f32 %v2003, %v2021
        %v2028 = vmul.f32 %v2004, %v2022
        %v2029 = vmul.f32 %v2005, %v2023
        %v2030 = vmul.f32 %v2006, %v2024
        %v2031 = vmul.f32 %v2007, %v2025
        %v2032 = vadd.f32 %v1984, %v919
        %v2033 = vadd.f32 %v1985, %v920
        %v2034 = vadd.f32 %v1986, %v921
        %v2035 = vadd.f32 %v1987, %v922
        %v2036 = vadd.f32 %v1988, %v923
        %v2037 = vadd.f32 %v1989, %v924
        %v2038 = vadd.f32 %v1990, %v925
        %v2039 = vadd.f32 %v1991, %v926
        %v2040 = vadd.f32 %v1992, %v927
        %v2041 = vadd.f32 %v1993, %v928
        %v2042 = vadd.f32 %v1994, %v929
        %v2043 = vadd.f32 %v1995, %v930
        %v2044 = vmul.f32 %v2032, %v2038
        %v2045 = vmul.f32 %v2033, %v2039
        %v2046 = vmul.f32 %v2034, %v2040
        %v2047 = vmul.f32 %v2035, %v2041
        %v2048 = vmul.f32 %v2036, %v2042
        %v2049 = vmul.f32 %v2037, %v2043
        %v2050 = vrcp.pop %v2044
        %v2051 = vrcp.pop %v2045
        %v2052 = vrcp.pop %v2046
        %v2053 = vrcp.pop %v2047
        %v2054 = vrcp.pop %v2048
        %v2055 = vrcp.pop %v2049
        %v2056 = vmul.f32 %v2044, %v2050
        %v2057 = vmul.f32 %v2045, %v2051
        %v2058 = vmul.f32 %v2046, %v2052
        %v2059 = vmul.f32 %v2047, %v2053
        %v2060 = vmul.f32 %v2048, %v2054
        %v2061 = vmul.f32 %v2049, %v2055
        %v2062 = vsub.f32 2.0, %v2056
        %v2063 = vsub.f32 2.0, %v2057
        %v2064 = vsub.f32 2.0, %v2058
        %v2065 = vsub.f32 2.0, %v2059
        %v2066 = vsub.f32 2.0, %v2060
        %v2067 = vsub.f32 2.0, %v2061
        %v2068 = vmul.f32 %v2050, %v2062
        %v2069 = vmul.f32 %v2051, %v2063
        %v2070 = vmul.f32 %v2052, %v2064
        %v2071 = vmul.f32 %v2053, %v2065
        %v2072 = vmul.f32 %v2054, %v2066
        %v2073 = vmul.f32 %v2055, %v2067
        %v2074 = vmul.f32 %v2044, %v2068
        %v2075 = vmul.f32 %v2045, %v2069
        %v2076 = vmul.f32 %v2046, %v2070
        %v2077 = vmul.f32 %v2047, %v2071
        %v2078 = vmul.f32 %v2048, %v2072
        %v2079 = vmul.f32 %v2049, %v2073
        %v2080 = vsub.f32 2.0, %v2074
        %v2081 = vsub.f32 2.0, %v2075
        %v2082 = vsub.f32 2.0, %v2076
        %v2083 = vsub.f32 2.0, %v2077
        %v2084 = vsub.f32 2.0, %v2078
        %v2085 = vsub.f32 2.0, %v2079
        %v2086 = vmul.f32 %v2068, %v2080
        %v2087 = vmul.f32 %v2069, %v2081
        %v2088 = vmul.f32 %v2070, %v2082
        %v2089 = vmul.f32 %v2071, %v2083
        %v2090 = vmul.f32 %v2072, %v2084
        %v2091 = vmul.f32 %v2073, %v2085
        %v2092 = vmul.f32 %v2026, %v2086
        %v2093 = vmul.f32 %v2027, %v2087
        %v2094 = vmul.f32 %v2028, %v2088
        %v2095 = vmul.f32 %v2029, %v2089
        %v2096 = vmul.f32 %v2030, %v2090
        %v2097 = vmul.f32 %v2031, %v2091
        %v2098 = vsub.f32 1.0, %v2092
        %v2099 = vsub.f32 1.0, %v2093
        %v2100 = vsub.f32 1.0, %v2094
        %v2101 = vsub.f32 1.0, %v2095
        %v2102 = vsub.f32 1.0, %v2096
        %v2103 = vsub.f32 1.0, %v2097
        %v2104 = vmul.f32 %v2098, 0.5
        %v2105 = vmul.f32 %v2099, 0.5
        %v2106 = vmul.f32 %v2100, 0.5
        %v2107 = vmul.f32 %v2101, 0.5
        %v2108 = vmul.f32 %v2102, 0.5
        %v2109 = vmul.f32 %v2103, 0.5
        %v2110 = vmax.f32 %v2104, 0.0
        %v2111 = vmax.f32 %v2105, 0.0
        %v2112 = vmax.f32 %v2106, 0.0
        %v2113 = vmax.f32 %v2107, 0.0
        %v2114 = vmax.f32 %v2108, 0.0
        %v2115 = vmax.f32 %v2109, 0.0
        %v2116 = vmin.f32 %v2110, 1.0
        %v2117 = vmin.f32 %v2111, 1.0
        %v2118 = vmin.f32 %v2112, 1.0
        %v2119 = vmin.f32 %v2113, 1.0
        %v2120 = vmin.f32 %v2114, 1.0
        %v2121 = vmin.f32 %v2115, 1.0
        %v2122 = vmul.f32 %v2116, 0.85
        %v2123 = vmul.f32 %v2117, 0.85
        %v2124 = vmul.f32 %v2118, 0.85
        %v2125 = vmul.f32 %v2119, 0.85
        %v2126 = vmul.f32 %v2120, 0.85
        %v2127 = vmul.f32 %v2121, 0.85
        %v2128 = vsub.f32 %v1552, %v559
        %v2129 = vsub.f32 %v1553, %v560
        %v2130 = vsub.f32 %v1554, %v561
        %v2131 = vsub.f32 %v1555, %v562
        %v2132 = vsub.f32 %v1556, %v563
        %v2133 = vsub.f32 %v1557, %v564
        %v2134 = vand.u32 2147483647, %v2128
        %v2135 = vand.u32 2147483647, %v2129
        %v2136 = vand.u32 2147483647, %v2130
        %v2137 = vand.u32 2147483647, %v2131
        %v2138 = vand.u32 2147483647, %v2132
        %v2139 = vand.u32 2147483647, %v2133
        %v2140 = vmul.f32 %v2134, 0.15
        %v2141 = vmul.f32 %v2135, 0.15
        %v2142 = vmul.f32 %v2136, 0.15
        %v2143 = vmul.f32 %v2137, 0.15
        %v2144 = vmul.f32 %v2138, 0.15
        %v2145 = vmul.f32 %v2139, 0.15
        %v2146 = vadd.f32 %v2122, %v2140
        %v2147 = vadd.f32 %v2123, %v2141
        %v2148 = vadd.f32 %v2124, %v2142
        %v2149 = vadd.f32 %v2125, %v2143
        %v2150 = vadd.f32 %v2126, %v2144
        %v2151 = vadd.f32 %v2127, %v2145
        %v2152 = vadd.f32 %v2146, %v2148
        %v2153 = vadd.f32 %v2152, %v2150
        %v2154 = vadd.f32 %v2147, %v2149
        %v2155 = vadd.f32 %v2154, %v2151
        %v2156 = vmul.f32 %v2153, %v1549
        %v2157 = vmul.f32 %v2155, %v1549
        // Predicated region
        $region81: #{tpu_custom_call.1} parent=47 // pred_check
          %p2158 = pneg %p565
        $region82: #{tpu_custom_call.1} parent=47 // pred_check_branch
          %2160 = sbr.rel (%p2158) target = $region84
        $region83: #{tpu_custom_call.1} parent=47 // pred_region
          %2161 = vst [vmem:[#allocation5] sm:$0xff] %v1550
          %2162 = vst [vmem:[#allocation5 + $0x8] sm:$0xff] %v1551
          %2163 = vst [vmem:[#allocation6] sm:$0xff] %v2156
          %2164 = vst [vmem:[#allocation6 + $0x8] sm:$0xff] %v2157
        $region84: #{tpu_custom_call.1} parent=47 // pred_fallthru
          _
        %p2165 = scmp.ne.s32.totalorder %s38, 0
        // Predicated region
        $region85: #{tpu_custom_call.1} parent=47 // pred_check
          %p2166 = pneg %p2165
        $region86: #{tpu_custom_call.1} parent=47 // pred_check_branch
          %2168 = sbr.rel (%p2166) target = $region88
        $region87: #{tpu_custom_call.1} parent=47 // pred_region
          %v2169 = vld [vmem:[#allocation5] sm:$0xff]
          %v2170 = vld [vmem:[#allocation5 + $0x8] sm:$0xff]
          %v2171 = vmin.f32 %v2169, %v1550
          %v2172 = vmin.f32 %v2170, %v1551
          %2173 = vst [vmem:[#allocation5] sm:$0xff] %v2171
          %2174 = vst [vmem:[#allocation5 + $0x8] sm:$0xff] %v2172
          %v2175 = vld [vmem:[#allocation6] sm:$0xff]
          %v2176 = vld [vmem:[#allocation6 + $0x8] sm:$0xff]
          %v2177 = vmin.f32 %v2175, %v2156
          %v2178 = vmin.f32 %v2176, %v2157
          %2179 = vst [vmem:[#allocation6] sm:$0xff] %v2177
          %2180 = vst [vmem:[#allocation6 + $0x8] sm:$0xff] %v2178
        $region88: #{tpu_custom_call.1} parent=47 // pred_fallthru
          _
        %p2181 = scmp.eq.s32.totalorder %s38, 1
        // Predicated region
        $region89: #{tpu_custom_call.1} parent=47 // pred_check
          %p2182 = pneg %p2181
        $region90: #{tpu_custom_call.1} parent=47 // pred_check_branch
          %2184 = sbr.rel (%p2182) target = $region92
        $region91: #{tpu_custom_call.1} parent=47 // pred_region
          %v2185 = vld [vmem:[%s469] sm:$0xff]
          %v2186 = vld [vmem:[%s469 + $0x8] sm:$0xff]
          %v2187 = vld [vmem:[%s478] sm:$0xff]
          %v2188 = vld [vmem:[%s478 + $0x8] sm:$0xff]
          %v2189 = vld [vmem:[%s487] sm:$0xff]
          %v2190 = vld [vmem:[%s487 + $0x8] sm:$0xff]
          %v2191 = vld [vmem:[%s460] sm:$0xff]
          %v2192 = vld [vmem:[%s460 + $0x8] sm:$0xff]
          %v2193 = vld [vmem:[%s460 + $0x10] sm:$0xff]
          %v2194 = vld [vmem:[%s460 + $0x18] sm:$0xff]
          %v2195 = vld [vmem:[%s460 + $0x20] sm:$0xff]
          %v2196 = vld [vmem:[%s460 + $0x28] sm:$0xff]
          %2197 = vrot.lane.b32.xlu0 %v2191, 1
          %v2198 = vpop.permute.xlu0 %2197
          %2199 = vrot.lane.b32.xlu0 %v2192, 1
          %v2200 = vpop.permute.xlu0 %2199
          %2201 = vrot.lane.b32.xlu0 %v2193, 1
          %v2202 = vpop.permute.xlu0 %2201
          %2203 = vrot.lane.b32.xlu0 %v2194, 1
          %v2204 = vpop.permute.xlu0 %2203
          %2205 = vrot.lane.b32.xlu0 %v2195, 1
          %v2206 = vpop.permute.xlu0 %2205
          %2207 = vrot.lane.b32.xlu0 %v2196, 1
          %v2208 = vpop.permute.xlu0 %2207
          %2209 = vrot.lane.b32.xlu0 %v2191, 127
          %v2210 = vpop.permute.xlu0 %2209
          %2211 = vrot.lane.b32.xlu0 %v2192, 127
          %v2212 = vpop.permute.xlu0 %2211
          %2213 = vrot.lane.b32.xlu0 %v2193, 127
          %v2214 = vpop.permute.xlu0 %2213
          %2215 = vrot.lane.b32.xlu0 %v2194, 127
          %v2216 = vpop.permute.xlu0 %2215
          %2217 = vrot.lane.b32.xlu0 %v2195, 127
          %v2218 = vpop.permute.xlu0 %2217
          %2219 = vrot.lane.b32.xlu0 %v2196, 127
          %v2220 = vpop.permute.xlu0 %2219
          %v2221 = vadd.f32 %v2191, %v2198
          %v2222 = vadd.f32 %v2192, %v2200
          %v2223 = vadd.f32 %v2193, %v2202
          %v2224 = vadd.f32 %v2194, %v2204
          %v2225 = vadd.f32 %v2195, %v2206
          %v2226 = vadd.f32 %v2196, %v2208
          %v2227 = vadd.f32 %v2221, %v2210
          %v2228 = vadd.f32 %v2222, %v2212
          %v2229 = vadd.f32 %v2223, %v2214
          %v2230 = vadd.f32 %v2224, %v2216
          %v2231 = vadd.f32 %v2225, %v2218
          %v2232 = vadd.f32 %v2226, %v2220
          %v2233 = vsub.f32 %v2210, %v2198
          %v2234 = vsub.f32 %v2212, %v2200
          %v2235 = vsub.f32 %v2214, %v2202
          %v2236 = vsub.f32 %v2216, %v2204
          %v2237 = vsub.f32 %v2218, %v2206
          %v2238 = vsub.f32 %v2220, %v2208
          %v2239 = vsub.f32 %v2198, %v2210
          %v2240 = vsub.f32 %v2200, %v2212
          %v2241 = vsub.f32 %v2202, %v2214
          %v2242 = vsub.f32 %v2204, %v2216
          %v2243 = vsub.f32 %v2206, %v2218
          %v2244 = vsub.f32 %v2208, %v2220
          %v2245 = vsel %vm986, %v2239, 0.0
          %v2246 = vsel %vm986, %v2240, 0.0
          %v2247 = vsel %vm986, %v2241, 0.0
          %v2248 = vsel %vm986, %v2242, 0.0
          %v2249 = vsel %vm986, %v2243, 0.0
          %v2250 = vsel %vm986, %v2244, 0.0
          %v2251 = vsel %vm994, %v2233, %v2245
          %v2252 = vsel %vm994, %v2234, %v2246
          %v2253 = vsel %vm994, %v2235, %v2247
          %v2254 = vsel %vm994, %v2236, %v2248
          %v2255 = vsel %vm994, %v2237, %v2249
          %v2256 = vsel %vm994, %v2238, %v2250
          %v2257 = vadd.f32 %v2227, %v2251
          %v2258 = vadd.f32 %v2228, %v2252
          %v2259 = vadd.f32 %v2229, %v2253
          %v2260 = vadd.f32 %v2230, %v2254
          %v2261 = vadd.f32 %v2231, %v2255
          %v2262 = vadd.f32 %v2232, %v2256
          %v2263 = vrot.slane %v2257, 7
          %v2264 = vrot.slane %v2259, 7
          %v2265 = vrot.slane %v2261, 7
          %v2266 = vrot.slane %v2258, 7
          %v2267 = vrot.slane %v2260, 7
          %v2268 = vrot.slane %v2262, 7
          %v2269 = vsel %vm1013, %v2263, %v2266
          %v2270 = vsel %vm1013, %v2264, %v2267
          %v2271 = vsel %vm1013, %v2265, %v2268
          %v2272 = vsel %vm1013, %v2266, %v2263
          %v2273 = vsel %vm1013, %v2267, %v2264
          %v2274 = vsel %vm1013, %v2268, %v2265
          %v2275 = vrot.slane %v2257, 1
          %v2276 = vrot.slane %v2259, 1
          %v2277 = vrot.slane %v2261, 1
          %v2278 = vrot.slane %v2258, 1
          %v2279 = vrot.slane %v2260, 1
          %v2280 = vrot.slane %v2262, 1
          %v2281 = vsel %vm1026, %v2275, %v2278
          %v2282 = vsel %vm1026, %v2276, %v2279
          %v2283 = vsel %vm1026, %v2277, %v2280
          %v2284 = vsel %vm1026, %v2278, %v2275
          %v2285 = vsel %vm1026, %v2279, %v2276
          %v2286 = vsel %vm1026, %v2280, %v2277
          %v2287 = vadd.f32 %v2257, %v2272
          %v2288 = vadd.f32 %v2258, %v2269
          %v2289 = vadd.f32 %v2259, %v2273
          %v2290 = vadd.f32 %v2260, %v2270
          %v2291 = vadd.f32 %v2261, %v2274
          %v2292 = vadd.f32 %v2262, %v2271
          %v2293 = vadd.f32 %v2287, %v2281
          %v2294 = vadd.f32 %v2288, %v2284
          %v2295 = vadd.f32 %v2289, %v2282
          %v2296 = vadd.f32 %v2290, %v2285
          %v2297 = vadd.f32 %v2291, %v2283
          %v2298 = vadd.f32 %v2292, %v2286
          %v2299 = vsub.f32 %v2281, %v2272
          %v2300 = vsub.f32 %v2284, %v2269
          %v2301 = vsub.f32 %v2282, %v2273
          %v2302 = vsub.f32 %v2285, %v2270
          %v2303 = vsub.f32 %v2283, %v2274
          %v2304 = vsub.f32 %v2286, %v2271
          %v2305 = vsub.f32 %v2272, %v2281
          %v2306 = vsub.f32 %v2269, %v2284
          %v2307 = vsub.f32 %v2273, %v2282
          %v2308 = vsub.f32 %v2270, %v2285
          %v2309 = vsub.f32 %v2274, %v2283
          %v2310 = vsub.f32 %v2271, %v2286
          %v2311 = vsel %vm1059, %v2305, 0.0
          %v2312 = vsel %vm1060, %v2306, 0.0
          %v2313 = vsel %vm1059, %v2307, 0.0
          %v2314 = vsel %vm1060, %v2308, 0.0
          %v2315 = vsel %vm1059, %v2309, 0.0
          %v2316 = vsel %vm1060, %v2310, 0.0
          %v2317 = vsel %vm1069, %v2299, %v2311
          %v2318 = vsel %vm1070, %v2300, %v2312
          %v2319 = vsel %vm1069, %v2301, %v2313
          %v2320 = vsel %vm1070, %v2302, %v2314
          %v2321 = vsel %vm1069, %v2303, %v2315
          %v2322 = vsel %vm1070, %v2304, %v2316
          %v2323 = vadd.f32 %v2293, %v2317
          %v2324 = vadd.f32 %v2294, %v2318
          %v2325 = vadd.f32 %v2295, %v2319
          %v2326 = vadd.f32 %v2296, %v2320
          %v2327 = vadd.f32 %v2297, %v2321
          %v2328 = vadd.f32 %v2298, %v2322
          %v2329 = vmul.f32 %v2323, 0.11111111
          %v2330 = vmul.f32 %v2324, 0.11111111
          %v2331 = vmul.f32 %v2325, 0.11111111
          %v2332 = vmul.f32 %v2326, 0.11111111
          %v2333 = vmul.f32 %v2327, 0.11111111
          %v2334 = vmul.f32 %v2328, 0.11111111
          %v2335 = vmul.f32 %v2191, %v2191
          %v2336 = vmul.f32 %v2192, %v2192
          %v2337 = vmul.f32 %v2193, %v2193
          %v2338 = vmul.f32 %v2194, %v2194
          %v2339 = vmul.f32 %v2195, %v2195
          %v2340 = vmul.f32 %v2196, %v2196
          %2341 = vrot.lane.b32.xlu0 %v2335, 1
          %v2342 = vpop.permute.xlu0 %2341
          %2343 = vrot.lane.b32.xlu0 %v2336, 1
          %v2344 = vpop.permute.xlu0 %2343
          %2345 = vrot.lane.b32.xlu0 %v2337, 1
          %v2346 = vpop.permute.xlu0 %2345
          %2347 = vrot.lane.b32.xlu0 %v2338, 1
          %v2348 = vpop.permute.xlu0 %2347
          %2349 = vrot.lane.b32.xlu0 %v2339, 1
          %v2350 = vpop.permute.xlu0 %2349
          %2351 = vrot.lane.b32.xlu0 %v2340, 1
          %v2352 = vpop.permute.xlu0 %2351
          %2353 = vrot.lane.b32.xlu0 %v2335, 127
          %v2354 = vpop.permute.xlu0 %2353
          %2355 = vrot.lane.b32.xlu0 %v2336, 127
          %v2356 = vpop.permute.xlu0 %2355
          %2357 = vrot.lane.b32.xlu0 %v2337, 127
          %v2358 = vpop.permute.xlu0 %2357
          %2359 = vrot.lane.b32.xlu0 %v2338, 127
          %v2360 = vpop.permute.xlu0 %2359
          %2361 = vrot.lane.b32.xlu0 %v2339, 127
          %v2362 = vpop.permute.xlu0 %2361
          %2363 = vrot.lane.b32.xlu0 %v2340, 127
          %v2364 = vpop.permute.xlu0 %2363
          %v2365 = vadd.f32 %v2335, %v2342
          %v2366 = vadd.f32 %v2336, %v2344
          %v2367 = vadd.f32 %v2337, %v2346
          %v2368 = vadd.f32 %v2338, %v2348
          %v2369 = vadd.f32 %v2339, %v2350
          %v2370 = vadd.f32 %v2340, %v2352
          %v2371 = vadd.f32 %v2365, %v2354
          %v2372 = vadd.f32 %v2366, %v2356
          %v2373 = vadd.f32 %v2367, %v2358
          %v2374 = vadd.f32 %v2368, %v2360
          %v2375 = vadd.f32 %v2369, %v2362
          %v2376 = vadd.f32 %v2370, %v2364
          %v2377 = vsub.f32 %v2354, %v2342
          %v2378 = vsub.f32 %v2356, %v2344
          %v2379 = vsub.f32 %v2358, %v2346
          %v2380 = vsub.f32 %v2360, %v2348
          %v2381 = vsub.f32 %v2362, %v2350
          %v2382 = vsub.f32 %v2364, %v2352
          %v2383 = vsub.f32 %v2342, %v2354
          %v2384 = vsub.f32 %v2344, %v2356
          %v2385 = vsub.f32 %v2346, %v2358
          %v2386 = vsub.f32 %v2348, %v2360
          %v2387 = vsub.f32 %v2350, %v2362
          %v2388 = vsub.f32 %v2352, %v2364
          %v2389 = vsel %vm986, %v2383, 0.0
          %v2390 = vsel %vm986, %v2384, 0.0
          %v2391 = vsel %vm986, %v2385, 0.0
          %v2392 = vsel %vm986, %v2386, 0.0
          %v2393 = vsel %vm986, %v2387, 0.0
          %v2394 = vsel %vm986, %v2388, 0.0
          %v2395 = vsel %vm994, %v2377, %v2389
          %v2396 = vsel %vm994, %v2378, %v2390
          %v2397 = vsel %vm994, %v2379, %v2391
          %v2398 = vsel %vm994, %v2380, %v2392
          %v2399 = vsel %vm994, %v2381, %v2393
          %v2400 = vsel %vm994, %v2382, %v2394
          %v2401 = vadd.f32 %v2371, %v2395
          %v2402 = vadd.f32 %v2372, %v2396
          %v2403 = vadd.f32 %v2373, %v2397
          %v2404 = vadd.f32 %v2374, %v2398
          %v2405 = vadd.f32 %v2375, %v2399
          %v2406 = vadd.f32 %v2376, %v2400
          %v2407 = vrot.slane %v2401, 7
          %v2408 = vrot.slane %v2403, 7
          %v2409 = vrot.slane %v2405, 7
          %v2410 = vrot.slane %v2402, 7
          %v2411 = vrot.slane %v2404, 7
          %v2412 = vrot.slane %v2406, 7
          %v2413 = vsel %vm1013, %v2407, %v2410
          %v2414 = vsel %vm1013, %v2408, %v2411
          %v2415 = vsel %vm1013, %v2409, %v2412
          %v2416 = vsel %vm1013, %v2410, %v2407
          %v2417 = vsel %vm1013, %v2411, %v2408
          %v2418 = vsel %vm1013, %v2412, %v2409
          %v2419 = vrot.slane %v2401, 1
          %v2420 = vrot.slane %v2403, 1
          %v2421 = vrot.slane %v2405, 1
          %v2422 = vrot.slane %v2402, 1
          %v2423 = vrot.slane %v2404, 1
          %v2424 = vrot.slane %v2406, 1
          %v2425 = vsel %vm1026, %v2419, %v2422
          %v2426 = vsel %vm1026, %v2420, %v2423
          %v2427 = vsel %vm1026, %v2421, %v2424
          %v2428 = vsel %vm1026, %v2422, %v2419
          %v2429 = vsel %vm1026, %v2423, %v2420
          %v2430 = vsel %vm1026, %v2424, %v2421
          %v2431 = vadd.f32 %v2401, %v2416
          %v2432 = vadd.f32 %v2402, %v2413
          %v2433 = vadd.f32 %v2403, %v2417
          %v2434 = vadd.f32 %v2404, %v2414
          %v2435 = vadd.f32 %v2405, %v2418
          %v2436 = vadd.f32 %v2406, %v2415
          %v2437 = vadd.f32 %v2431, %v2425
          %v2438 = vadd.f32 %v2432, %v2428
          %v2439 = vadd.f32 %v2433, %v2426
          %v2440 = vadd.f32 %v2434, %v2429
          %v2441 = vadd.f32 %v2435, %v2427
          %v2442 = vadd.f32 %v2436, %v2430
          %v2443 = vsub.f32 %v2425, %v2416
          %v2444 = vsub.f32 %v2428, %v2413
          %v2445 = vsub.f32 %v2426, %v2417
          %v2446 = vsub.f32 %v2429, %v2414
          %v2447 = vsub.f32 %v2427, %v2418
          %v2448 = vsub.f32 %v2430, %v2415
          %v2449 = vsub.f32 %v2416, %v2425
          %v2450 = vsub.f32 %v2413, %v2428
          %v2451 = vsub.f32 %v2417, %v2426
          %v2452 = vsub.f32 %v2414, %v2429
          %v2453 = vsub.f32 %v2418, %v2427
          %v2454 = vsub.f32 %v2415, %v2430
          %v2455 = vsel %vm1059, %v2449, 0.0
          %v2456 = vsel %vm1060, %v2450, 0.0
          %v2457 = vsel %vm1059, %v2451, 0.0
          %v2458 = vsel %vm1060, %v2452, 0.0
          %v2459 = vsel %vm1059, %v2453, 0.0
          %v2460 = vsel %vm1060, %v2454, 0.0
          %v2461 = vsel %vm1069, %v2443, %v2455
          %v2462 = vsel %vm1070, %v2444, %v2456
          %v2463 = vsel %vm1069, %v2445, %v2457
          %v2464 = vsel %vm1070, %v2446, %v2458
          %v2465 = vsel %vm1069, %v2447, %v2459
          %v2466 = vsel %vm1070, %v2448, %v2460
          %v2467 = vadd.f32 %v2437, %v2461
          %v2468 = vadd.f32 %v2438, %v2462
          %v2469 = vadd.f32 %v2439, %v2463
          %v2470 = vadd.f32 %v2440, %v2464
          %v2471 = vadd.f32 %v2441, %v2465
          %v2472 = vadd.f32 %v2442, %v2466
          %v2473 = vmul.f32 %v2467, 0.11111111
          %v2474 = vmul.f32 %v2468, 0.11111111
          %v2475 = vmul.f32 %v2469, 0.11111111
          %v2476 = vmul.f32 %v2470, 0.11111111
          %v2477 = vmul.f32 %v2471, 0.11111111
          %v2478 = vmul.f32 %v2472, 0.11111111
          %v2479 = vmul.f32 %v2191, %v559
          %v2480 = vmul.f32 %v2192, %v560
          %v2481 = vmul.f32 %v2193, %v561
          %v2482 = vmul.f32 %v2194, %v562
          %v2483 = vmul.f32 %v2195, %v563
          %v2484 = vmul.f32 %v2196, %v564
          %2485 = vrot.lane.b32.xlu0 %v2479, 1
          %v2486 = vpop.permute.xlu0 %2485
          %2487 = vrot.lane.b32.xlu0 %v2480, 1
          %v2488 = vpop.permute.xlu0 %2487
          %2489 = vrot.lane.b32.xlu0 %v2481, 1
          %v2490 = vpop.permute.xlu0 %2489
          %2491 = vrot.lane.b32.xlu0 %v2482, 1
          %v2492 = vpop.permute.xlu0 %2491
          %2493 = vrot.lane.b32.xlu0 %v2483, 1
          %v2494 = vpop.permute.xlu0 %2493
          %2495 = vrot.lane.b32.xlu0 %v2484, 1
          %v2496 = vpop.permute.xlu0 %2495
          %2497 = vrot.lane.b32.xlu0 %v2479, 127
          %v2498 = vpop.permute.xlu0 %2497
          %2499 = vrot.lane.b32.xlu0 %v2480, 127
          %v2500 = vpop.permute.xlu0 %2499
          %2501 = vrot.lane.b32.xlu0 %v2481, 127
          %v2502 = vpop.permute.xlu0 %2501
          %2503 = vrot.lane.b32.xlu0 %v2482, 127
          %v2504 = vpop.permute.xlu0 %2503
          %2505 = vrot.lane.b32.xlu0 %v2483, 127
          %v2506 = vpop.permute.xlu0 %2505
          %2507 = vrot.lane.b32.xlu0 %v2484, 127
          %v2508 = vpop.permute.xlu0 %2507
          %v2509 = vadd.f32 %v2479, %v2486
          %v2510 = vadd.f32 %v2480, %v2488
          %v2511 = vadd.f32 %v2481, %v2490
          %v2512 = vadd.f32 %v2482, %v2492
          %v2513 = vadd.f32 %v2483, %v2494
          %v2514 = vadd.f32 %v2484, %v2496
          %v2515 = vadd.f32 %v2509, %v2498
          %v2516 = vadd.f32 %v2510, %v2500
          %v2517 = vadd.f32 %v2511, %v2502
          %v2518 = vadd.f32 %v2512, %v2504
          %v2519 = vadd.f32 %v2513, %v2506
          %v2520 = vadd.f32 %v2514, %v2508
          %v2521 = vsub.f32 %v2498, %v2486
          %v2522 = vsub.f32 %v2500, %v2488
          %v2523 = vsub.f32 %v2502, %v2490
          %v2524 = vsub.f32 %v2504, %v2492
          %v2525 = vsub.f32 %v2506, %v2494
          %v2526 = vsub.f32 %v2508, %v2496
          %v2527 = vsub.f32 %v2486, %v2498
          %v2528 = vsub.f32 %v2488, %v2500
          %v2529 = vsub.f32 %v2490, %v2502
          %v2530 = vsub.f32 %v2492, %v2504
          %v2531 = vsub.f32 %v2494, %v2506
          %v2532 = vsub.f32 %v2496, %v2508
          %v2533 = vsel %vm986, %v2527, 0.0
          %v2534 = vsel %vm986, %v2528, 0.0
          %v2535 = vsel %vm986, %v2529, 0.0
          %v2536 = vsel %vm986, %v2530, 0.0
          %v2537 = vsel %vm986, %v2531, 0.0
          %v2538 = vsel %vm986, %v2532, 0.0
          %v2539 = vsel %vm994, %v2521, %v2533
          %v2540 = vsel %vm994, %v2522, %v2534
          %v2541 = vsel %vm994, %v2523, %v2535
          %v2542 = vsel %vm994, %v2524, %v2536
          %v2543 = vsel %vm994, %v2525, %v2537
          %v2544 = vsel %vm994, %v2526, %v2538
          %v2545 = vadd.f32 %v2515, %v2539
          %v2546 = vadd.f32 %v2516, %v2540
          %v2547 = vadd.f32 %v2517, %v2541
          %v2548 = vadd.f32 %v2518, %v2542
          %v2549 = vadd.f32 %v2519, %v2543
          %v2550 = vadd.f32 %v2520, %v2544
          %v2551 = vrot.slane %v2545, 7
          %v2552 = vrot.slane %v2547, 7
          %v2553 = vrot.slane %v2549, 7
          %v2554 = vrot.slane %v2546, 7
          %v2555 = vrot.slane %v2548, 7
          %v2556 = vrot.slane %v2550, 7
          %v2557 = vsel %vm1013, %v2551, %v2554
          %v2558 = vsel %vm1013, %v2552, %v2555
          %v2559 = vsel %vm1013, %v2553, %v2556
          %v2560 = vsel %vm1013, %v2554, %v2551
          %v2561 = vsel %vm1013, %v2555, %v2552
          %v2562 = vsel %vm1013, %v2556, %v2553
          %v2563 = vrot.slane %v2545, 1
          %v2564 = vrot.slane %v2547, 1
          %v2565 = vrot.slane %v2549, 1
          %v2566 = vrot.slane %v2546, 1
          %v2567 = vrot.slane %v2548, 1
          %v2568 = vrot.slane %v2550, 1
          %v2569 = vsel %vm1026, %v2563, %v2566
          %v2570 = vsel %vm1026, %v2564, %v2567
          %v2571 = vsel %vm1026, %v2565, %v2568
          %v2572 = vsel %vm1026, %v2566, %v2563
          %v2573 = vsel %vm1026, %v2567, %v2564
          %v2574 = vsel %vm1026, %v2568, %v2565
          %v2575 = vadd.f32 %v2545, %v2560
          %v2576 = vadd.f32 %v2546, %v2557
          %v2577 = vadd.f32 %v2547, %v2561
          %v2578 = vadd.f32 %v2548, %v2558
          %v2579 = vadd.f32 %v2549, %v2562
          %v2580 = vadd.f32 %v2550, %v2559
          %v2581 = vadd.f32 %v2575, %v2569
          %v2582 = vadd.f32 %v2576, %v2572
          %v2583 = vadd.f32 %v2577, %v2570
          %v2584 = vadd.f32 %v2578, %v2573
          %v2585 = vadd.f32 %v2579, %v2571
          %v2586 = vadd.f32 %v2580, %v2574
          %v2587 = vsub.f32 %v2569, %v2560
          %v2588 = vsub.f32 %v2572, %v2557
          %v2589 = vsub.f32 %v2570, %v2561
          %v2590 = vsub.f32 %v2573, %v2558
          %v2591 = vsub.f32 %v2571, %v2562
          %v2592 = vsub.f32 %v2574, %v2559
          %v2593 = vsub.f32 %v2560, %v2569
          %v2594 = vsub.f32 %v2557, %v2572
          %v2595 = vsub.f32 %v2561, %v2570
          %v2596 = vsub.f32 %v2558, %v2573
          %v2597 = vsub.f32 %v2562, %v2571
          %v2598 = vsub.f32 %v2559, %v2574
          %v2599 = vsel %vm1059, %v2593, 0.0
          %v2600 = vsel %vm1060, %v2594, 0.0
          %v2601 = vsel %vm1059, %v2595, 0.0
          %v2602 = vsel %vm1060, %v2596, 0.0
          %v2603 = vsel %vm1059, %v2597, 0.0
          %v2604 = vsel %vm1060, %v2598, 0.0
          %v2605 = vsel %vm1069, %v2587, %v2599
          %v2606 = vsel %vm1070, %v2588, %v2600
          %v2607 = vsel %vm1069, %v2589, %v2601
          %v2608 = vsel %vm1070, %v2590, %v2602
          %v2609 = vsel %vm1069, %v2591, %v2603
          %v2610 = vsel %vm1070, %v2592, %v2604
          %v2611 = vadd.f32 %v2581, %v2605
          %v2612 = vadd.f32 %v2582, %v2606
          %v2613 = vadd.f32 %v2583, %v2607
          %v2614 = vadd.f32 %v2584, %v2608
          %v2615 = vadd.f32 %v2585, %v2609
          %v2616 = vadd.f32 %v2586, %v2610
          %v2617 = vmul.f32 %v2611, 0.11111111
          %v2618 = vmul.f32 %v2612, 0.11111111
          %v2619 = vmul.f32 %v2613, 0.11111111
          %v2620 = vmul.f32 %v2614, 0.11111111
          %v2621 = vmul.f32 %v2615, 0.11111111
          %v2622 = vmul.f32 %v2616, 0.11111111
          %v2623 = vmul.f32 %v2329, %v2329
          %v2624 = vmul.f32 %v2330, %v2330
          %v2625 = vmul.f32 %v2331, %v2331
          %v2626 = vmul.f32 %v2332, %v2332
          %v2627 = vmul.f32 %v2333, %v2333
          %v2628 = vmul.f32 %v2334, %v2334
          %v2629 = vsub.f32 %v2473, %v2623
          %v2630 = vsub.f32 %v2474, %v2624
          %v2631 = vsub.f32 %v2475, %v2625
          %v2632 = vsub.f32 %v2476, %v2626
          %v2633 = vsub.f32 %v2477, %v2627
          %v2634 = vsub.f32 %v2478, %v2628
          %v2635 = vmul.f32 %v2329, %v913
          %v2636 = vmul.f32 %v2330, %v914
          %v2637 = vmul.f32 %v2331, %v915
          %v2638 = vmul.f32 %v2332, %v916
          %v2639 = vmul.f32 %v2333, %v917
          %v2640 = vmul.f32 %v2334, %v918
          %v2641 = vadd.f32 %v2635, 0.0001
          %v2642 = vadd.f32 %v2636, 0.0001
          %v2643 = vadd.f32 %v2637, 0.0001
          %v2644 = vadd.f32 %v2638, 0.0001
          %v2645 = vadd.f32 %v2639, 0.0001
          %v2646 = vadd.f32 %v2640, 0.0001
          %v2647 = vmul.f32 %v2617, 2.0
          %v2648 = vmul.f32 %v2618, 2.0
          %v2649 = vmul.f32 %v2619, 2.0
          %v2650 = vmul.f32 %v2620, 2.0
          %v2651 = vmul.f32 %v2621, 2.0
          %v2652 = vmul.f32 %v2622, 2.0
          %v2653 = vsub.f32 %v2647, %v2635
          %v2654 = vsub.f32 %v2648, %v2636
          %v2655 = vsub.f32 %v2649, %v2637
          %v2656 = vsub.f32 %v2650, %v2638
          %v2657 = vsub.f32 %v2651, %v2639
          %v2658 = vsub.f32 %v2652, %v2640
          %v2659 = vadd.f32 %v2653, 0.0009
          %v2660 = vadd.f32 %v2654, 0.0009
          %v2661 = vadd.f32 %v2655, 0.0009
          %v2662 = vadd.f32 %v2656, 0.0009
          %v2663 = vadd.f32 %v2657, 0.0009
          %v2664 = vadd.f32 %v2658, 0.0009
          %v2665 = vmul.f32 %v2641, %v2659
          %v2666 = vmul.f32 %v2642, %v2660
          %v2667 = vmul.f32 %v2643, %v2661
          %v2668 = vmul.f32 %v2644, %v2662
          %v2669 = vmul.f32 %v2645, %v2663
          %v2670 = vmul.f32 %v2646, %v2664
          %v2671 = vadd.f32 %v2623, %v919
          %v2672 = vadd.f32 %v2624, %v920
          %v2673 = vadd.f32 %v2625, %v921
          %v2674 = vadd.f32 %v2626, %v922
          %v2675 = vadd.f32 %v2627, %v923
          %v2676 = vadd.f32 %v2628, %v924
          %v2677 = vadd.f32 %v2629, %v925
          %v2678 = vadd.f32 %v2630, %v926
          %v2679 = vadd.f32 %v2631, %v927
          %v2680 = vadd.f32 %v2632, %v928
          %v2681 = vadd.f32 %v2633, %v929
          %v2682 = vadd.f32 %v2634, %v930
          %v2683 = vmul.f32 %v2671, %v2677
          %v2684 = vmul.f32 %v2672, %v2678
          %v2685 = vmul.f32 %v2673, %v2679
          %v2686 = vmul.f32 %v2674, %v2680
          %v2687 = vmul.f32 %v2675, %v2681
          %v2688 = vmul.f32 %v2676, %v2682
          %v2689 = vrcp.pop %v2683
          %v2690 = vrcp.pop %v2684
          %v2691 = vrcp.pop %v2685
          %v2692 = vrcp.pop %v2686
          %v2693 = vrcp.pop %v2687
          %v2694 = vrcp.pop %v2688
          %v2695 = vmul.f32 %v2683, %v2689
          %v2696 = vmul.f32 %v2684, %v2690
          %v2697 = vmul.f32 %v2685, %v2691
          %v2698 = vmul.f32 %v2686, %v2692
          %v2699 = vmul.f32 %v2687, %v2693
          %v2700 = vmul.f32 %v2688, %v2694
          %v2701 = vsub.f32 2.0, %v2695
          %v2702 = vsub.f32 2.0, %v2696
          %v2703 = vsub.f32 2.0, %v2697
          %v2704 = vsub.f32 2.0, %v2698
          %v2705 = vsub.f32 2.0, %v2699
          %v2706 = vsub.f32 2.0, %v2700
          %v2707 = vmul.f32 %v2689, %v2701
          %v2708 = vmul.f32 %v2690, %v2702
          %v2709 = vmul.f32 %v2691, %v2703
          %v2710 = vmul.f32 %v2692, %v2704
          %v2711 = vmul.f32 %v2693, %v2705
          %v2712 = vmul.f32 %v2694, %v2706
          %v2713 = vmul.f32 %v2683, %v2707
          %v2714 = vmul.f32 %v2684, %v2708
          %v2715 = vmul.f32 %v2685, %v2709
          %v2716 = vmul.f32 %v2686, %v2710
          %v2717 = vmul.f32 %v2687, %v2711
          %v2718 = vmul.f32 %v2688, %v2712
          %v2719 = vsub.f32 2.0, %v2713
          %v2720 = vsub.f32 2.0, %v2714
          %v2721 = vsub.f32 2.0, %v2715
          %v2722 = vsub.f32 2.0, %v2716
          %v2723 = vsub.f32 2.0, %v2717
          %v2724 = vsub.f32 2.0, %v2718
          %v2725 = vmul.f32 %v2707, %v2719
          %v2726 = vmul.f32 %v2708, %v2720
          %v2727 = vmul.f32 %v2709, %v2721
          %v2728 = vmul.f32 %v2710, %v2722
          %v2729 = vmul.f32 %v2711, %v2723
          %v2730 = vmul.f32 %v2712, %v2724
          %v2731 = vmul.f32 %v2665, %v2725
          %v2732 = vmul.f32 %v2666, %v2726
          %v2733 = vmul.f32 %v2667, %v2727
          %v2734 = vmul.f32 %v2668, %v2728
          %v2735 = vmul.f32 %v2669, %v2729
          %v2736 = vmul.f32 %v2670, %v2730
          %v2737 = vsub.f32 1.0, %v2731
          %v2738 = vsub.f32 1.0, %v2732
          %v2739 = vsub.f32 1.0, %v2733
          %v2740 = vsub.f32 1.0, %v2734
          %v2741 = vsub.f32 1.0, %v2735
          %v2742 = vsub.f32 1.0, %v2736
          %v2743 = vmul.f32 %v2737, 0.5
          %v2744 = vmul.f32 %v2738, 0.5
          %v2745 = vmul.f32 %v2739, 0.5
          %v2746 = vmul.f32 %v2740, 0.5
          %v2747 = vmul.f32 %v2741, 0.5
          %v2748 = vmul.f32 %v2742, 0.5
          %v2749 = vmax.f32 %v2743, 0.0
          %v2750 = vmax.f32 %v2744, 0.0
          %v2751 = vmax.f32 %v2745, 0.0
          %v2752 = vmax.f32 %v2746, 0.0
          %v2753 = vmax.f32 %v2747, 0.0
          %v2754 = vmax.f32 %v2748, 0.0
          %v2755 = vmin.f32 %v2749, 1.0
          %v2756 = vmin.f32 %v2750, 1.0
          %v2757 = vmin.f32 %v2751, 1.0
          %v2758 = vmin.f32 %v2752, 1.0
          %v2759 = vmin.f32 %v2753, 1.0
          %v2760 = vmin.f32 %v2754, 1.0
          %v2761 = vmul.f32 %v2755, 0.85
          %v2762 = vmul.f32 %v2756, 0.85
          %v2763 = vmul.f32 %v2757, 0.85
          %v2764 = vmul.f32 %v2758, 0.85
          %v2765 = vmul.f32 %v2759, 0.85
          %v2766 = vmul.f32 %v2760, 0.85
          %v2767 = vsub.f32 %v2191, %v559
          %v2768 = vsub.f32 %v2192, %v560
          %v2769 = vsub.f32 %v2193, %v561
          %v2770 = vsub.f32 %v2194, %v562
          %v2771 = vsub.f32 %v2195, %v563
          %v2772 = vsub.f32 %v2196, %v564
          %v2773 = vand.u32 2147483647, %v2767
          %v2774 = vand.u32 2147483647, %v2768
          %v2775 = vand.u32 2147483647, %v2769
          %v2776 = vand.u32 2147483647, %v2770
          %v2777 = vand.u32 2147483647, %v2771
          %v2778 = vand.u32 2147483647, %v2772
          %v2779 = vmul.f32 %v2773, 0.15
          %v2780 = vmul.f32 %v2774, 0.15
          %v2781 = vmul.f32 %v2775, 0.15
          %v2782 = vmul.f32 %v2776, 0.15
          %v2783 = vmul.f32 %v2777, 0.15
          %v2784 = vmul.f32 %v2778, 0.15
          %v2785 = vadd.f32 %v2761, %v2779
          %v2786 = vadd.f32 %v2762, %v2780
          %v2787 = vadd.f32 %v2763, %v2781
          %v2788 = vadd.f32 %v2764, %v2782
          %v2789 = vadd.f32 %v2765, %v2783
          %v2790 = vadd.f32 %v2766, %v2784
          %v2791 = vadd.f32 %v2785, %v2787
          %v2792 = vadd.f32 %v2791, %v2789
          %v2793 = vadd.f32 %v2786, %v2788
          %v2794 = vadd.f32 %v2793, %v2790
          %v2795 = vmul.f32 %v2792, %v1549
          %v2796 = vmul.f32 %v2794, %v1549
          %vm2797 = vcmp.gt.f32.partialorder %v2185, 0.0
          %vm2798 = vcmp.gt.f32.partialorder %v2186, 0.0
          %v2799 = vsel %vm2797, %v2795, 1000.0
          %v2800 = vsel %vm2798, %v2796, 1000.0
          %v2801 = vld [vmem:[#allocation5] sm:$0xff]
          %v2802 = vld [vmem:[#allocation5 + $0x8] sm:$0xff]
          %v2803 = vld [vmem:[#allocation6] sm:$0xff]
          %v2804 = vld [vmem:[#allocation6 + $0x8] sm:$0xff]
          %v2805 = vmul.f32 %v2189, 1e-05
          %v2806 = vmul.f32 %v2190, 1e-05
          %v2807 = vadd.f32 %v2803, %v2805
          %v2808 = vadd.f32 %v2804, %v2806
          %vm2809 = vcmp.le.f32.partialorder %v2807, %v2801
          %vm2810 = vcmp.le.f32.partialorder %v2808, %v2802
          %vm2811 = vcmp.le.f32.partialorder %v2807, %v2799
          %vm2812 = vcmp.le.f32.partialorder %v2808, %v2800
          %vm2813 = vmand %vm2809, %vm2811
          %vm2814 = vmand %vm2810, %vm2812
          %vm2815 = vmxor %vm2813, 1
          %vm2816 = vmxor %vm2814, 1
          %vm2817 = vcmp.lt.f32.partialorder %v2799, %v2801
          %vm2818 = vcmp.lt.f32.partialorder %v2800, %v2802
          %vm2819 = vmand %vm2815, %vm2817
          %vm2820 = vmand %vm2816, %vm2818
          %v2821 = vsel %vm2815, 1, 0
          %v2822 = vsel %vm2816, 1, 0
          %v2823 = vcvt.s32.f32 %v2821
          %v2824 = vcvt.s32.f32 %v2822
          %v2825 = vsel %vm2819, 1, 0
          %v2826 = vsel %vm2820, 1, 0
          %v2827 = vcvt.s32.f32 %v2825
          %v2828 = vcvt.s32.f32 %v2826
          %v2829 = vsub.f32 %v2185, %v2187
          %v2830 = vsub.f32 %v2186, %v2188
          %v2831 = vand.u32 2147483647, %v2829
          %v2832 = vand.u32 2147483647, %v2830
          %v2833 = vadd.f32 %v2831, 1.0
          %v2834 = vadd.f32 %v2832, 1.0
          %v2835 = vlog2.pop %v2833
          %v2836 = vmul.f32 %v2835, 0.6931472
          %v2837 = vlog2.pop %v2834
          %v2838 = vmul.f32 %v2837, 0.6931472
          %v2839 = vmul.f32 %v2836, %v2827
          %v2840 = vmul.f32 %v2838, %v2828
          %v2841 = vmul.f32 %v2801, %v2823
          %v2842 = vmul.f32 %v2802, %v2824
          %v2843 = vadd.f32 %v2841, %v2839
          %v2844 = vadd.f32 %v2842, %v2840
          %2845 = vst [vmem:[%s547] sm:$0xff] %v2843
          %2846 = vst [vmem:[%s547 + $0x8] sm:$0xff] %v2844
        $region92: #{tpu_custom_call.1} parent=47 // pred_fallthru
          _
        %s2847 = sand.u32 %s239, 1
        %s2848 = scalar_lea.sflag [#allocation9], %s2847
        %s2849 = sand.u32 %s239, 1
        %s2850 = smul.addr %s2849, 16
        %s2851 = scalar_lea.vmem [#allocation19], %s2850
        // Predicated region
        $region93: #{tpu_custom_call.1} parent=47 // pred_check
          %p2852 = pneg %p249
        $region94: #{tpu_custom_call.1} parent=47 // pred_check_branch
          %2854 = sbr.rel (%p2852) target = $region96
        $region95: #{tpu_custom_call.1} parent=47 // pred_region
          %s2856 = ssub.s32 256, 256
          %2857 = vsyncadd %s2848, %s2856
          %s2858 = smul.addr %s37, 2
          %s2859 = smul.addr %s2858, 128
          %s2860 = scalar_lea.hbm %s7, %s2859
          %s2861 = sshll.u32 %s2851, 4
          %s2862 = int_to_ptr.vmem [resolvable:$true] %s2861
          %2867 = dma.vmem_to_hbm [thread:$0]  %s2862, 256, %s2860, %s2848, 128, 128, 8
        $region96: #{tpu_custom_call.1} parent=47 // pred_fallthru
          _
      $region48: #{tpu_custom_call.1} parent=5 // pred_fallthru
        _
      %p2868 = scmp.le.s32.totalorder 2, %s28
      // Predicated region
      $region97: #{tpu_custom_call.1} parent=5 // pred_check
        %p2869 = pneg %p2868
      $region98: #{tpu_custom_call.1} parent=5 // pred_check_branch
        %2871 = sbr.rel (%p2869) target = $region100
      $region99: #{tpu_custom_call.1} parent=5 // pred_region
        %s2872 = ssub.s32 %s28, 2
        // Predicated region
        $region101: #{tpu_custom_call.1} parent=99 // pred_check
          %p2873 = pneg %p255
        $region102: #{tpu_custom_call.1} parent=99 // pred_check_branch
          %2875 = sbr.rel (%p2873) target = $region104
        $region103: #{tpu_custom_call.1} parent=99 // pred_region
          %s2876 = sand.u32 %s240, 1
          %s2877 = scalar_lea.sflag [#allocation9], %s2876
          %s2878 = sand.u32 %s240, 1
          %s2879 = smul.addr %s2878, 16
          %s2880 = scalar_lea.vmem [#allocation19], %s2879
          %2881 = dma.done %s2877, 256
        $region104: #{tpu_custom_call.1} parent=99 // pred_fallthru
          _
      $region100: #{tpu_custom_call.1} parent=5 // pred_fallthru
        _
    $region6: #{tpu_custom_call.1} parent=1 // loop_footer
      %s32 = sadd.s32 1, %s28
    $region7: #{tpu_custom_call.1} parent=1 // loop_footer_branch
      %27 = sbr.rel target = $region3
    $region8: #{tpu_custom_call.1} parent=1 // loop_exit
      _
    %2882 = vsyncpa [#allocation8], 1
    %s2883 = scalar_lea.sflag [#allocation8], 1
    %2884 = vsyncpa %s2883, 1
    %2885 = vsyncpa [#allocation11], 1
    %s2886 = scalar_lea.sflag [#allocation11], 1
    %2887 = vsyncpa %s2886, 1
    %2888 = vsyncpa [#allocation14], 1
    %s2889 = scalar_lea.sflag [#allocation14], 1
    %2890 = vsyncpa %s2889, 1
    %2891 = vsyncpa [#allocation17], 1
    %s2892 = scalar_lea.sflag [#allocation17], 1
    %2893 = vsyncpa %s2892, 1
    %2894 = vsyncpa [#allocation9], 1
    %s2895 = scalar_lea.sflag [#allocation9], 1
    %2896 = vsyncpa %s2895, 1

</llo_original>
